<compile_context>
chip_gen: v7x
topology: tpu7x:2x2x1
jax: 0.10.0
libtpu: 0.0.40
codegen_flags: <defaults>
</compile_context>

<pallas_src>
import jax
import jax.numpy as jnp
from jax.experimental import pallas as pl
from jax.experimental.pallas import tpu as pltpu


# ----------------------------- Pallas kernels ------------------------------

def _conv1_kernel(p_ref, w_ref, b_ref, o_ref):
    # p: (1, 676, 9) bf16   w: (9, 32) bf16   b: (1, 32) f32   o: (1, 676, 32) bf16
    acc = jnp.dot(p_ref[0], w_ref[...], preferred_element_type=jnp.float32)
    o_ref[0] = jnp.maximum(acc + b_ref[...], 0.0).astype(o_ref.dtype)


def _conv2_kernel(x_ref, w_ref, b_ref, o_ref):
    # x: (1, 26, 26, 32) bf16  w: (9, 32, 64) bf16  b: (1, 64) f32
    # o: (1, Hb, 24, 64) bf16   (Hb output rows per grid step)
    _, Hb, Wo, Co = o_ref.shape
    Ci = x_ref.shape[-1]
    h0 = pl.program_id(1) * Hb
    acc = jnp.zeros((Hb * Wo, Co), jnp.float32)
    for ki in range(3):
        rows = x_ref[0, pl.ds(h0 + ki, Hb), :, :]            # (Hb, 26, Ci)
        for kj in range(3):
            patch = rows[:, kj:kj + Wo, :].reshape(Hb * Wo, Ci)
            acc = acc + jnp.dot(patch, w_ref[ki * 3 + kj],
                                preferred_element_type=jnp.float32)
    y = jnp.maximum(acc + b_ref[...], 0.0)                   # fp32 epilogue
    o_ref[0] = y.reshape(Hb, Wo, Co).astype(o_ref.dtype)


def _pool_kernel(x_ref, o_ref):
    # x: (1, 12, 2, 12, 128) bf16  ->  o: (1, 12, 12, 64) bf16  (lane-dense)
    C = o_ref.shape[-1]
    x = x_ref[0]                                             # (12, 2, 12, 128)
    a = jnp.maximum(x[:, 0], x[:, 1])                        # max over H-pairs
    o_ref[0] = jnp.maximum(a[:, :, :C], a[:, :, C:])         # max over W-pairs


def _head_kernel(x_ref, w1_ref, b1_ref, w2_ref, b2_ref, o_ref, acc_ref):
    # Fused fc1 (+bias+ReLU) -> fc2 (+bias) -> log_softmax, fc1-K tiled.
    k = pl.program_id(0)

    @pl.when(k == 0)
    def _():
        acc_ref[...] = jnp.zeros_like(acc_ref)

    acc_ref[...] += jnp.dot(x_ref[...], w1_ref[...],
                            preferred_element_type=jnp.float32)

    @pl.when(k == pl.num_programs(0) - 1)
    def _():
        h = jnp.maximum(acc_ref[...] + b1_ref[...], 0.0)     # (N, 100) f32
        z = jnp.dot(h, w2_ref[...], preferred_element_type=jnp.float32)
        z = z + b2_ref[...]                                  # (N, 10) f32
        m = jnp.max(z, axis=-1, keepdims=True)
        s = z - m
        lse = jnp.log(jnp.sum(jnp.exp(s), axis=-1, keepdims=True))
        o_ref[...] = s - lse                                 # log_softmax(dim=1)


# ----------------------------- kernel wrappers ------------------------------

def conv1_matmul(patches, w, b):
    Nb, M, K = patches.shape
    _, Co = w.shape
    return pl.pallas_call(
        _conv1_kernel,
        out_shape=jax.ShapeDtypeStruct((Nb, M, Co), jnp.bfloat16),
        grid=(Nb,),
        in_specs=[
            pl.BlockSpec((1, M, K), lambda n: (n, 0, 0)),
            pl.BlockSpec((K, Co), lambda n: (0, 0)),
            pl.BlockSpec((1, Co), lambda n: (0, 0)),
        ],
        out_specs=pl.BlockSpec((1, M, Co), lambda n: (n, 0, 0)),
        compiler_params=pltpu.CompilerParams(dimension_semantics=("parallel",)),
    )(patches, w, b)


def conv2_3x3(x, w, b, *, row_block=8):
    Nb, H, W, Ci = x.shape
    K9, _, Co = w.shape
    Ho, Wo = H - 2, W - 2
    nt = Ho // row_block
    return pl.pallas_call(
        _conv2_kernel,
        out_shape=jax.ShapeDtypeStruct((Nb, Ho, Wo, Co), jnp.bfloat16),
        grid=(Nb, nt),
        in_specs=[
            pl.BlockSpec((1, H, W, Ci), lambda n, t: (n, 0, 0, 0)),
            pl.BlockSpec((K9, Ci, Co), lambda n, t: (0, 0, 0)),
            pl.BlockSpec((1, Co), lambda n, t: (0, 0)),
        ],
        out_specs=pl.BlockSpec((1, row_block, Wo, Co), lambda n, t: (n, t, 0, 0)),
        compiler_params=pltpu.CompilerParams(
            dimension_semantics=("parallel", "parallel")),
    )(x, w, b)


def maxpool2x2(x5):
    # x5: (N, Ho/2, 2, Wo/2, 2*C) -- free row-major view of the NHWC conv2 output
    Nb, Hp, two, Wp, L = x5.shape
    C = L // 2
    return pl.pallas_call(
        _pool_kernel,
        out_shape=jax.ShapeDtypeStruct((Nb, Hp, Wp, C), x5.dtype),
        grid=(Nb,),
        in_specs=[pl.BlockSpec((1, Hp, two, Wp, L), lambda n: (n, 0, 0, 0, 0))],
        out_specs=pl.BlockSpec((1, Hp, Wp, C), lambda n: (n, 0, 0, 0)),
        compiler_params=pltpu.CompilerParams(dimension_semantics=("parallel",)),
    )(x5)


def fc_head(xf, w1, b1, w2, b2, *, tk=768):
    Nb, K = xf.shape
    _, H1 = w1.shape
    _, C = w2.shape
    assert K % tk == 0
    nk = K // tk
    return pl.pallas_call(
        _head_kernel,
        out_shape=jax.ShapeDtypeStruct((Nb, C), jnp.float32),
        grid=(nk,),
        in_specs=[
            pl.BlockSpec((Nb, tk), lambda k: (0, k)),
            pl.BlockSpec((tk, H1), lambda k: (k, 0)),
            pl.BlockSpec((1, H1), lambda k: (0, 0)),
            pl.BlockSpec((H1, C), lambda k: (0, 0)),
            pl.BlockSpec((1, C), lambda k: (0, 0)),
        ],
        out_specs=pl.BlockSpec((Nb, C), lambda k: (0, 0)),
        scratch_shapes=[pltpu.VMEM((Nb, H1), jnp.float32)],
        compiler_params=pltpu.CompilerParams(dimension_semantics=("arbitrary",)),
    )(xf, w1, b1, w2, b2)


# --------------------------- params & forward -------------------------------

def init_params(key):
    ks = jax.random.split(key, 8)
    scale = 0.05
    return {  # PyTorch-shaped parameters
        "conv1_w": scale * jax.random.normal(ks[0], (32, 1, 3, 3), jnp.float32),
        "conv1_b": scale * jax.random.normal(ks[1], (32,), jnp.float32),
        "conv2_w": scale * jax.random.normal(ks[2], (64, 32, 3, 3), jnp.float32),
        "conv2_b": scale * jax.random.normal(ks[3], (64,), jnp.float32),
        "fc1_w": scale * jax.random.normal(ks[4], (100, 9216), jnp.float32),
        "fc1_b": scale * jax.random.normal(ks[5], (100,), jnp.float32),
        "fc2_w": scale * jax.random.normal(ks[6], (10, 100), jnp.float32),
        "fc2_b": scale * jax.random.normal(ks[7], (10,), jnp.float32),
    }


def prepare_params(p):
    """One-time permutation/cast of PyTorch-shaped weights into kernel layouts."""
    co1 = p["conv1_w"].shape[0]
    co2, ci2, kh, kw = p["conv2_w"].shape
    # fc1 weight: PyTorch flattens NCHW (c,h,w); our activations flatten NHWC (h,w,c).
    fc1_w = (p["fc1_w"].reshape(-1, co2, 12, 12)
             .transpose(2, 3, 1, 0).reshape(co2 * 12 * 12, -1))
    return {
        "w1": p["conv1_w"].reshape(co1, kh * kw).T.astype(jnp.bfloat16),          # (9, 32)
        "b1": p["conv1_b"].reshape(1, co1).astype(jnp.float32),
        "w2": p["conv2_w"].transpose(2, 3, 1, 0)
                           .reshape(kh * kw, ci2, co2).astype(jnp.bfloat16),      # (9, 32, 64)
        "b2": p["conv2_b"].reshape(1, co2).astype(jnp.float32),
        "fc1_w": fc1_w.astype(jnp.bfloat16),                                      # (9216, 100)
        "fc1_b": p["fc1_b"].reshape(1, -1).astype(jnp.float32),
        "fc2_w": p["fc2_w"].T.astype(jnp.float32),                                # (100, 10)
        "fc2_b": p["fc2_b"].reshape(1, -1).astype(jnp.float32),
    }


@jax.jit
def digit_cnn_forward(x, params):
    """x: (N, 1, 28, 28) float32, NCHW like the PyTorch module."""
    Nb, _, H, W = x.shape
    Ho1, Wo1 = H - 2, W - 2
    img = x.reshape(Nb, H, W).astype(jnp.bfloat16)        # C==1: NCHW==NHWC (free)

    # conv1 im2col (tiny: N*676*9 bf16 ~ 24 KB at batch 2); columns ordered ki*3+kj.
    # TODO(synk): conv1 patch extraction still runs in XLA; it is <1% of the FLOPs.
    cols = [img[:, i:i + Ho1, j:j + Wo1] for i in range(3) for j in range(3)]
    patches = jnp.stack(cols, axis=-1).reshape(Nb, Ho1 * Wo1, 9)

    h1 = conv1_matmul(patches, params["w1"], params["b1"])        # (N, 676, 32) bf16
    h1 = h1.reshape(Nb, Ho1, Wo1, params["w1"].shape[1])          # (N, 26, 26, 32)

    h2 = conv2_3x3(h1, params["w2"], params["b2"])                # (N, 24, 24, 64) bf16

    # TODO(synk): nn.Dropout2d lowered as identity (eval-mode semantics).

    _, Ho2, Wo2, C2 = h2.shape
    pooled = maxpool2x2(h2.reshape(Nb, Ho2 // 2, 2, Wo2 // 2, 2 * C2))  # (N,12,12,64)
    xf = pooled.reshape(Nb, -1)                                   # (N, 9216) bf16

    return fc_head(xf, params["fc1_w"], params["fc1_b"],
                   params["fc2_w"], params["fc2_b"])              # (N, 10) f32


def reference_forward(x, raw):
    """Pure-JAX fp32 reference matching the PyTorch module exactly."""
    y = jax.lax.conv_general_dilated(x, raw["conv1_w"], (1, 1), "VALID",
                                     dimension_numbers=("NCHW", "OIHW", "NCHW"))
    y = jax.nn.relu(y + raw["conv1_b"][None, :, None, None])
    y = jax.lax.conv_general_dilated(y, raw["conv2_w"], (1, 1), "VALID",
                                     dimension_numbers=("NCHW", "OIHW", "NCHW"))
    y = jax.nn.relu(y + raw["conv2_b"][None, :, None, None])
    N, C, H, W = y.shape
    y = y.reshape(N, C, H // 2, 2, W // 2, 2).max(axis=(3, 5))
    y = y.reshape(N, -1)                                          # NCHW flatten
    y = jax.nn.relu(y @ raw["fc1_w"].T + raw["fc1_b"])
    y = y @ raw["fc2_w"].T + raw["fc2_b"]
    return jax.nn.log_softmax(y, axis=-1)


if __name__ == "__main__":
    key = jax.random.PRNGKey(0)
    pkey, xkey = jax.random.split(key)
    raw = init_params(pkey)
    params = prepare_params(raw)
    # MNIST-shaped input (fc1 in-features 9216 = 64*12*12 implies 28x28), batch 2.
    x = jax.random.normal(xkey, (2, 1, 28, 28), jnp.float32)

    out = jax.block_until_ready(digit_cnn_forward(x, params))

    assert out.shape == (2, 10), out.shape
    assert bool(jnp.all(jnp.isfinite(out)))
    row_sums = jnp.exp(out).sum(axis=1)                      # log_softmax sanity
    assert bool(jnp.allclose(row_sums, 1.0, atol=1e-3))
    ref = reference_forward(x, raw)                          # fp32 reference
    max_err = float(jnp.max(jnp.abs(out - ref)))
    assert max_err < 0.1, f"max |diff| vs reference = {max_err}"
    print("KERNEL_OK")
</pallas_src>

<mosaic_0001>
module attributes {stable_mosaic.version = 11 : i64} {
  func.func @_conv1_kernel(%arg0: i32, %arg1: memref<1x676x9xbf16, #tpu.memory_space<vmem>>, %arg2: memref<9x32xbf16, #tpu.memory_space<vmem>>, %arg3: memref<1x32xf32, #tpu.memory_space<vmem>>, %arg4: memref<1x676x32xbf16, #tpu.memory_space<vmem>>) attributes {dimension_semantics = [#tpu.dimension_semantics<parallel>], iteration_bounds = array<i64: 2>, scalar_prefetch = 0 : i64, scratch_operands = 0 : i64, tpu.core_type = #tpu.core_type<tc>, window_params = [{transform_indices = @transform_0, window_bounds = array<i64: 1, 676, 9>}, {pipeline_mode = #tpu.pipeline_mode<synchronous>, transform_indices = @transform_1, window_bounds = array<i64: 9, 32>}, {pipeline_mode = #tpu.pipeline_mode<synchronous>, transform_indices = @transform_2, window_bounds = array<i64: 1, 32>}, {transform_indices = @transform_3, window_bounds = array<i64: 1, 676, 32>}]} {
    %c0 = arith.constant 0 : index
    %c0_0 = arith.constant 0 : index
    %c0_1 = arith.constant 0 : index
    %0 = vector.load %arg1[%c0, %c0_0, %c0_1] : memref<1x676x9xbf16, #tpu.memory_space<vmem>>, vector<1x676x9xbf16>
    %1 = vector.shape_cast %0 : vector<1x676x9xbf16> to vector<676x9xbf16>
    %c0_2 = arith.constant 0 : index
    %c0_3 = arith.constant 0 : index
    %2 = vector.load %arg2[%c0_2, %c0_3] : memref<9x32xbf16, #tpu.memory_space<vmem>>, vector<9x32xbf16>
    %cst = arith.constant dense<0.000000e+00> : vector<676x32xf32>
    %3 = tpu.matmul %1, %2, %cst {dimension_numbers = #tpu.dot_dimension_numbers<[1], [0], [0], [1], [0, 0, 1, 1], [], []>} : vector<676x9xbf16>, vector<9x32xbf16>, vector<676x32xf32> -> vector<676x32xf32>
    %c0_4 = arith.constant 0 : index
    %c0_5 = arith.constant 0 : index
    %4 = vector.load %arg3[%c0_4, %c0_5] : memref<1x32xf32, #tpu.memory_space<vmem>>, vector<1x32xf32>
    %5 = vector.broadcast %4 : vector<1x32xf32> to vector<676x32xf32>
    %6 = arith.addf %3, %5 : vector<676x32xf32>
    %cst_6 = arith.constant 0.000000e+00 : f32
    %7 = vector.broadcast %cst_6 : f32 to vector<676x32xf32>
    %8 = arith.maximumf %6, %7 : vector<676x32xf32>
    %9 = arith.truncf %8 : vector<676x32xf32> to vector<676x32xbf16>
    %c0_7 = arith.constant 0 : index
    %c0_8 = arith.constant 0 : index
    %c0_9 = arith.constant 0 : index
    %10 = vector.load %arg4[%c0_7, %c0_8, %c0_9] : memref<1x676x32xbf16, #tpu.memory_space<vmem>>, vector<1x676x32xbf16>
    %11 = vector.shape_cast %10 : vector<1x676x32xbf16> to vector<676x32xbf16>
    %12 = vector.shape_cast %9 : vector<676x32xbf16> to vector<1x676x32xbf16>
    tpu.vector_store %arg4[%c0_7, %c0_8, %c0_9], %12 {strides = array<i32>} : memref<1x676x32xbf16, #tpu.memory_space<vmem>>, vector<1x676x32xbf16>,
    return
  }
  func.func @transform_0(%arg0: i32) -> (i32, i32, i32) {
    %c0_i32 = arith.constant 0 : i32
    %c0_i32_0 = arith.constant 0 : i32
    %c0_i32_1 = arith.constant 0 : i32
    return %arg0, %c0_i32, %c0_i32_0 : i32, i32, i32
  }
  func.func @transform_1(%arg0: i32) -> (i32, i32) {
    %c0_i32 = arith.constant 0 : i32
    %c0_i32_0 = arith.constant 0 : i32
    %c0_i32_1 = arith.constant 0 : i32
    return %c0_i32, %c0_i32_0 : i32, i32
  }
  func.func @transform_2(%arg0: i32) -> (i32, i32) {
    %c0_i32 = arith.constant 0 : i32
    %c0_i32_0 = arith.constant 0 : i32
    %c0_i32_1 = arith.constant 0 : i32
    return %c0_i32, %c0_i32_0 : i32, i32
  }
  func.func @transform_3(%arg0: i32) -> (i32, i32, i32) {
    %c0_i32 = arith.constant 0 : i32
    %c0_i32_0 = arith.constant 0 : i32
    %c0_i32_1 = arith.constant 0 : i32
    return %arg0, %c0_i32, %c0_i32_0 : i32, i32, i32
  }
}

module attributes {stable_mosaic.version = 11 : i64} {
  func.func @_conv2_kernel(%arg0: i32, %arg1: i32, %arg2: memref<1x26x26x32xbf16, #tpu.memory_space<vmem>>, %arg3: memref<9x32x64xbf16, #tpu.memory_space<vmem>>, %arg4: memref<1x64xf32, #tpu.memory_space<vmem>>, %arg5: memref<1x8x24x64xbf16, #tpu.memory_space<vmem>>) attributes {dimension_semantics = [#tpu.dimension_semantics<parallel>, #tpu.dimension_semantics<parallel>], iteration_bounds = array<i64: 2, 3>, scalar_prefetch = 0 : i64, scratch_operands = 0 : i64, tpu.core_type = #tpu.core_type<tc>, window_params = [{transform_indices = @transform_0, window_bounds = array<i64: 1, 26, 26, 32>}, {pipeline_mode = #tpu.pipeline_mode<synchronous>, transform_indices = @transform_1, window_bounds = array<i64: 9, 32, 64>}, {pipeline_mode = #tpu.pipeline_mode<synchronous>, transform_indices = @transform_2, window_bounds = array<i64: 1, 64>}, {transform_indices = @transform_3, window_bounds = array<i64: 1, 8, 24, 64>}]} {
    %c8_i32 = arith.constant 8 : i32
    %0 = arith.muli %arg1, %c8_i32 : i32
    %cst = arith.constant 0.000000e+00 : f32
    %1 = vector.broadcast %cst : f32 to vector<192x64xf32>
    %c0_i32 = arith.constant 0 : i32
    %2 = arith.addi %0, %c0_i32 : i32
    %c0 = arith.constant 0 : index
    %3 = arith.index_cast %2 : i32 to index
    %c0_0 = arith.constant 0 : index
    %c0_1 = arith.constant 0 : index
    %4 = vector.load %arg2[%c0, %3, %c0_0, %c0_1] : memref<1x26x26x32xbf16, #tpu.memory_space<vmem>>, vector<1x8x26x32xbf16>
    %5 = vector.shape_cast %4 : vector<1x8x26x32xbf16> to vector<8x26x32xbf16>
    %6 = vector.extract_strided_slice %5 {offsets = [0, 0, 0], sizes = [8, 24, 32], strides = [1, 1, 1]} : vector<8x26x32xbf16> to vector<8x24x32xbf16>
    %7 = vector.shape_cast %6 : vector<8x24x32xbf16> to vector<192x32xbf16>
    %c0_2 = arith.constant 0 : index
    %c0_3 = arith.constant 0 : index
    %c0_4 = arith.constant 0 : index
    %8 = vector.load %arg3[%c0_2, %c0_3, %c0_4] : memref<9x32x64xbf16, #tpu.memory_space<vmem>>, vector<1x32x64xbf16>
    %9 = vector.shape_cast %8 : vector<1x32x64xbf16> to vector<32x64xbf16>
    %cst_5 = arith.constant dense<0.000000e+00> : vector<192x64xf32>
    %10 = tpu.matmul %7, %9, %cst_5 {dimension_numbers = #tpu.dot_dimension_numbers<[1], [0], [0], [1], [0, 0, 1, 1], [], []>} : vector<192x32xbf16>, vector<32x64xbf16>, vector<192x64xf32> -> vector<192x64xf32>
    %11 = arith.addf %1, %10 : vector<192x64xf32>
    %12 = vector.extract_strided_slice %5 {offsets = [0, 1, 0], sizes = [8, 24, 32], strides = [1, 1, 1]} : vector<8x26x32xbf16> to vector<8x24x32xbf16>
    %13 = vector.shape_cast %12 : vector<8x24x32xbf16> to vector<192x32xbf16>
    %c1 = arith.constant 1 : index
    %c0_6 = arith.constant 0 : index
    %c0_7 = arith.constant 0 : index
    %14 = vector.load %arg3[%c1, %c0_6, %c0_7] : memref<9x32x64xbf16, #tpu.memory_space<vmem>>, vector<1x32x64xbf16>
    %15 = vector.shape_cast %14 : vector<1x32x64xbf16> to vector<32x64xbf16>
    %cst_8 = arith.constant dense<0.000000e+00> : vector<192x64xf32>
    %16 = tpu.matmul %13, %15, %cst_8 {dimension_numbers = #tpu.dot_dimension_numbers<[1], [0], [0], [1], [0, 0, 1, 1], [], []>} : vector<192x32xbf16>, vector<32x64xbf16>, vector<192x64xf32> -> vector<192x64xf32>
    %17 = arith.addf %11, %16 : vector<192x64xf32>
    %18 = vector.extract_strided_slice %5 {offsets = [0, 2, 0], sizes = [8, 24, 32], strides = [1, 1, 1]} : vector<8x26x32xbf16> to vector<8x24x32xbf16>
    %19 = vector.shape_cast %18 : vector<8x24x32xbf16> to vector<192x32xbf16>
    %c2 = arith.constant 2 : index
    %c0_9 = arith.constant 0 : index
    %c0_10 = arith.constant 0 : index
    %20 = vector.load %arg3[%c2, %c0_9, %c0_10] : memref<9x32x64xbf16, #tpu.memory_space<vmem>>, vector<1x32x64xbf16>
    %21 = vector.shape_cast %20 : vector<1x32x64xbf16> to vector<32x64xbf16>
    %cst_11 = arith.constant dense<0.000000e+00> : vector<192x64xf32>
    %22 = tpu.matmul %19, %21, %cst_11 {dimension_numbers = #tpu.dot_dimension_numbers<[1], [0], [0], [1], [0, 0, 1, 1], [], []>} : vector<192x32xbf16>, vector<32x64xbf16>, vector<192x64xf32> -> vector<192x64xf32>
    %23 = arith.addf %17, %22 : vector<192x64xf32>
    %c1_i32 = arith.constant 1 : i32
    %24 = arith.addi %0, %c1_i32 : i32
    %c0_12 = arith.constant 0 : index
    %25 = arith.index_cast %24 : i32 to index
    %c0_13 = arith.constant 0 : index
    %c0_14 = arith.constant 0 : index
    %26 = vector.load %arg2[%c0_12, %25, %c0_13, %c0_14] : memref<1x26x26x32xbf16, #tpu.memory_space<vmem>>, vector<1x8x26x32xbf16>
    %27 = vector.shape_cast %26 : vector<1x8x26x32xbf16> to vector<8x26x32xbf16>
    %28 = vector.extract_strided_slice %27 {offsets = [0, 0, 0], sizes = [8, 24, 32], strides = [1, 1, 1]} : vector<8x26x32xbf16> to vector<8x24x32xbf16>
    %29 = vector.shape_cast %28 : vector<8x24x32xbf16> to vector<192x32xbf16>
    %c3 = arith.constant 3 : index
    %c0_15 = arith.constant 0 : index
    %c0_16 = arith.constant 0 : index
    %30 = vector.load %arg3[%c3, %c0_15, %c0_16] : memref<9x32x64xbf16, #tpu.memory_space<vmem>>, vector<1x32x64xbf16>
    %31 = vector.shape_cast %30 : vector<1x32x64xbf16> to vector<32x64xbf16>
    %cst_17 = arith.constant dense<0.000000e+00> : vector<192x64xf32>
    %32 = tpu.matmul %29, %31, %cst_17 {dimension_numbers = #tpu.dot_dimension_numbers<[1], [0], [0], [1], [0, 0, 1, 1], [], []>} : vector<192x32xbf16>, vector<32x64xbf16>, vector<192x64xf32> -> vector<192x64xf32>
    %33 = arith.addf %23, %32 : vector<192x64xf32>
    %34 = vector.extract_strided_slice %27 {offsets = [0, 1, 0], sizes = [8, 24, 32], strides = [1, 1, 1]} : vector<8x26x32xbf16> to vector<8x24x32xbf16>
    %35 = vector.shape_cast %34 : vector<8x24x32xbf16> to vector<192x32xbf16>
    %c4 = arith.constant 4 : index
    %c0_18 = arith.constant 0 : index
    %c0_19 = arith.constant 0 : index
    %36 = vector.load %arg3[%c4, %c0_18, %c0_19] : memref<9x32x64xbf16, #tpu.memory_space<vmem>>, vector<1x32x64xbf16>
    %37 = vector.shape_cast %36 : vector<1x32x64xbf16> to vector<32x64xbf16>
    %cst_20 = arith.constant dense<0.000000e+00> : vector<192x64xf32>
    %38 = tpu.matmul %35, %37, %cst_20 {dimension_numbers = #tpu.dot_dimension_numbers<[1], [0], [0], [1], [0, 0, 1, 1], [], []>} : vector<192x32xbf16>, vector<32x64xbf16>, vector<192x64xf32> -> vector<192x64xf32>
    %39 = arith.addf %33, %38 : vector<192x64xf32>
    %40 = vector.extract_strided_slice %27 {offsets = [0, 2, 0], sizes = [8, 24, 32], strides = [1, 1, 1]} : vector<8x26x32xbf16> to vector<8x24x32xbf16>
    %41 = vector.shape_cast %40 : vector<8x24x32xbf16> to vector<192x32xbf16>
    %c5 = arith.constant 5 : index
    %c0_21 = arith.constant 0 : index
    %c0_22 = arith.constant 0 : index
    %42 = vector.load %arg3[%c5, %c0_21, %c0_22] : memref<9x32x64xbf16, #tpu.memory_space<vmem>>, vector<1x32x64xbf16>
    %43 = vector.shape_cast %42 : vector<1x32x64xbf16> to vector<32x64xbf16>
    %cst_23 = arith.constant dense<0.000000e+00> : vector<192x64xf32>
    %44 = tpu.matmul %41, %43, %cst_23 {dimension_numbers = #tpu.dot_dimension_numbers<[1], [0], [0], [1], [0, 0, 1, 1], [], []>} : vector<192x32xbf16>, vector<32x64xbf16>, vector<192x64xf32> -> vector<192x64xf32>
    %45 = arith.addf %39, %44 : vector<192x64xf32>
    %c2_i32 = arith.constant 2 : i32
    %46 = arith.addi %0, %c2_i32 : i32
    %c0_24 = arith.constant 0 : index
    %47 = arith.index_cast %46 : i32 to index
    %c0_25 = arith.constant 0 : index
    %c0_26 = arith.constant 0 : index
    %48 = vector.load %arg2[%c0_24, %47, %c0_25, %c0_26] : memref<1x26x26x32xbf16, #tpu.memory_space<vmem>>, vector<1x8x26x32xbf16>
    %49 = vector.shape_cast %48 : vector<1x8x26x32xbf16> to vector<8x26x32xbf16>
    %50 = vector.extract_strided_slice %49 {offsets = [0, 0, 0], sizes = [8, 24, 32], strides = [1, 1, 1]} : vector<8x26x32xbf16> to vector<8x24x32xbf16>
    %51 = vector.shape_cast %50 : vector<8x24x32xbf16> to vector<192x32xbf16>
    %c6 = arith.constant 6 : index
    %c0_27 = arith.constant 0 : index
    %c0_28 = arith.constant 0 : index
    %52 = vector.load %arg3[%c6, %c0_27, %c0_28] : memref<9x32x64xbf16, #tpu.memory_space<vmem>>, vector<1x32x64xbf16>
    %53 = vector.shape_cast %52 : vector<1x32x64xbf16> to vector<32x64xbf16>
    %cst_29 = arith.constant dense<0.000000e+00> : vector<192x64xf32>
    %54 = tpu.matmul %51, %53, %cst_29 {dimension_numbers = #tpu.dot_dimension_numbers<[1], [0], [0], [1], [0, 0, 1, 1], [], []>} : vector<192x32xbf16>, vector<32x64xbf16>, vector<192x64xf32> -> vector<192x64xf32>
    %55 = arith.addf %45, %54 : vector<192x64xf32>
    %56 = vector.extract_strided_slice %49 {offsets = [0, 1, 0], sizes = [8, 24, 32], strides = [1, 1, 1]} : vector<8x26x32xbf16> to vector<8x24x32xbf16>
    %57 = vector.shape_cast %56 : vector<8x24x32xbf16> to vector<192x32xbf16>
    %c7 = arith.constant 7 : index
    %c0_30 = arith.constant 0 : index
    %c0_31 = arith.constant 0 : index
    %58 = vector.load %arg3[%c7, %c0_30, %c0_31] : memref<9x32x64xbf16, #tpu.memory_space<vmem>>, vector<1x32x64xbf16>
    %59 = vector.shape_cast %58 : vector<1x32x64xbf16> to vector<32x64xbf16>
    %cst_32 = arith.constant dense<0.000000e+00> : vector<192x64xf32>
    %60 = tpu.matmul %57, %59, %cst_32 {dimension_numbers = #tpu.dot_dimension_numbers<[1], [0], [0], [1], [0, 0, 1, 1], [], []>} : vector<192x32xbf16>, vector<32x64xbf16>, vector<192x64xf32> -> vector<192x64xf32>
    %61 = arith.addf %55, %60 : vector<192x64xf32>
    %62 = vector.extract_strided_slice %49 {offsets = [0, 2, 0], sizes = [8, 24, 32], strides = [1, 1, 1]} : vector<8x26x32xbf16> to vector<8x24x32xbf16>
    %63 = vector.shape_cast %62 : vector<8x24x32xbf16> to vector<192x32xbf16>
    %c8 = arith.constant 8 : index
    %c0_33 = arith.constant 0 : index
    %c0_34 = arith.constant 0 : index
    %64 = vector.load %arg3[%c8, %c0_33, %c0_34] : memref<9x32x64xbf16, #tpu.memory_space<vmem>>, vector<1x32x64xbf16>
    %65 = vector.shape_cast %64 : vector<1x32x64xbf16> to vector<32x64xbf16>
    %cst_35 = arith.constant dense<0.000000e+00> : vector<192x64xf32>
    %66 = tpu.matmul %63, %65, %cst_35 {dimension_numbers = #tpu.dot_dimension_numbers<[1], [0], [0], [1], [0, 0, 1, 1], [], []>} : vector<192x32xbf16>, vector<32x64xbf16>, vector<192x64xf32> -> vector<192x64xf32>
    %67 = arith.addf %61, %66 : vector<192x64xf32>
    %c0_36 = arith.constant 0 : index
    %c0_37 = arith.constant 0 : index
    %68 = vector.load %arg4[%c0_36, %c0_37] : memref<1x64xf32, #tpu.memory_space<vmem>>, vector<1x64xf32>
    %69 = vector.broadcast %68 : vector<1x64xf32> to vector<192x64xf32>
    %70 = arith.addf %67, %69 : vector<192x64xf32>
    %cst_38 = arith.constant 0.000000e+00 : f32
    %71 = vector.broadcast %cst_38 : f32 to vector<192x64xf32>
    %72 = arith.maximumf %70, %71 : vector<192x64xf32>
    %73 = vector.shape_cast %72 : vector<192x64xf32> to vector<8x24x64xf32>
    %74 = arith.truncf %73 : vector<8x24x64xf32> to vector<8x24x64xbf16>
    %c0_39 = arith.constant 0 : index
    %c0_40 = arith.constant 0 : index
    %c0_41 = arith.constant 0 : index
    %c0_42 = arith.constant 0 : index
    %75 = vector.load %arg5[%c0_39, %c0_40, %c0_41, %c0_42] : memref<1x8x24x64xbf16, #tpu.memory_space<vmem>>, vector<1x8x24x64xbf16>
    %76 = vector.shape_cast %75 : vector<1x8x24x64xbf16> to vector<8x24x64xbf16>
    %77 = vector.shape_cast %74 : vector<8x24x64xbf16> to vector<1x8x24x64xbf16>
    tpu.vector_store %arg5[%c0_39, %c0_40, %c0_41, %c0_42], %77 {strides = array<i32>} : memref<1x8x24x64xbf16, #tpu.memory_space<vmem>>, vector<1x8x24x64xbf16>,
    return
  }
  func.func @transform_0(%arg0: i32, %arg1: i32) -> (i32, i32, i32, i32) {
    %c0_i32 = arith.constant 0 : i32
    %c0_i32_0 = arith.constant 0 : i32
    %c0_i32_1 = arith.constant 0 : i32
    %c0_i32_2 = arith.constant 0 : i32
    return %arg0, %c0_i32, %c0_i32_0, %c0_i32_1 : i32, i32, i32, i32
  }
  func.func @transform_1(%arg0: i32, %arg1: i32) -> (i32, i32, i32) {
    %c0_i32 = arith.constant 0 : i32
    %c0_i32_0 = arith.constant 0 : i32
    %c0_i32_1 = arith.constant 0 : i32
    %c0_i32_2 = arith.constant 0 : i32
    return %c0_i32, %c0_i32_0, %c0_i32_1 : i32, i32, i32
  }
  func.func @transform_2(%arg0: i32, %arg1: i32) -> (i32, i32) {
    %c0_i32 = arith.constant 0 : i32
    %c0_i32_0 = arith.constant 0 : i32
    %c0_i32_1 = arith.constant 0 : i32
    return %c0_i32, %c0_i32_0 : i32, i32
  }
  func.func @transform_3(%arg0: i32, %arg1: i32) -> (i32, i32, i32, i32) {
    %c0_i32 = arith.constant 0 : i32
    %c0_i32_0 = arith.constant 0 : i32
    %c0_i32_1 = arith.constant 0 : i32
    return %arg0, %arg1, %c0_i32, %c0_i32_0 : i32, i32, i32, i32
  }
}

module attributes {stable_mosaic.version = 11 : i64} {
  func.func @_pool_kernel(%arg0: i32, %arg1: memref<1x12x2x12x128xbf16, #tpu.memory_space<vmem>>, %arg2: memref<1x12x12x64xbf16, #tpu.memory_space<vmem>>) attributes {dimension_semantics = [#tpu.dimension_semantics<parallel>], iteration_bounds = array<i64: 2>, scalar_prefetch = 0 : i64, scratch_operands = 0 : i64, tpu.core_type = #tpu.core_type<tc>, window_params = [{transform_indices = @transform_0, window_bounds = array<i64: 1, 12, 2, 12, 128>}, {transform_indices = @transform_1, window_bounds = array<i64: 1, 12, 12, 64>}]} {
    %c0 = arith.constant 0 : index
    %c0_0 = arith.constant 0 : index
    %c0_1 = arith.constant 0 : index
    %c0_2 = arith.constant 0 : index
    %c0_3 = arith.constant 0 : index
    %0 = vector.load %arg1[%c0, %c0_0, %c0_1, %c0_2, %c0_3] : memref<1x12x2x12x128xbf16, #tpu.memory_space<vmem>>, vector<1x12x2x12x128xbf16>
    %1 = vector.shape_cast %0 : vector<1x12x2x12x128xbf16> to vector<12x2x12x128xbf16>
    %2 = vector.extract_strided_slice %1 {offsets = [0, 0, 0, 0], sizes = [12, 1, 12, 128], strides = [1, 1, 1, 1]} : vector<12x2x12x128xbf16> to vector<12x1x12x128xbf16>
    %3 = vector.shape_cast %2 : vector<12x1x12x128xbf16> to vector<12x12x128xbf16>
    %4 = vector.extract_strided_slice %1 {offsets = [0, 1, 0, 0], sizes = [12, 1, 12, 128], strides = [1, 1, 1, 1]} : vector<12x2x12x128xbf16> to vector<12x1x12x128xbf16>
    %5 = vector.shape_cast %4 : vector<12x1x12x128xbf16> to vector<12x12x128xbf16>
    %6 = arith.maximumf %3, %5 : vector<12x12x128xbf16>
    %7 = vector.extract_strided_slice %6 {offsets = [0, 0, 0], sizes = [12, 12, 64], strides = [1, 1, 1]} : vector<12x12x128xbf16> to vector<12x12x64xbf16>
    %8 = vector.extract_strided_slice %6 {offsets = [0, 0, 64], sizes = [12, 12, 64], strides = [1, 1, 1]} : vector<12x12x128xbf16> to vector<12x12x64xbf16>
    %9 = arith.maximumf %7, %8 : vector<12x12x64xbf16>
    %c0_4 = arith.constant 0 : index
    %c0_5 = arith.constant 0 : index
    %c0_6 = arith.constant 0 : index
    %c0_7 = arith.constant 0 : index
    %10 = vector.load %arg2[%c0_4, %c0_5, %c0_6, %c0_7] : memref<1x12x12x64xbf16, #tpu.memory_space<vmem>>, vector<1x12x12x64xbf16>
    %11 = vector.shape_cast %10 : vector<1x12x12x64xbf16> to vector<12x12x64xbf16>
    %12 = vector.shape_cast %9 : vector<12x12x64xbf16> to vector<1x12x12x64xbf16>
    tpu.vector_store %arg2[%c0_4, %c0_5, %c0_6, %c0_7], %12 {strides = array<i32>} : memref<1x12x12x64xbf16, #tpu.memory_space<vmem>>, vector<1x12x12x64xbf16>,
    return
  }
  func.func @transform_0(%arg0: i32) -> (i32, i32, i32, i32, i32) {
    %c0_i32 = arith.constant 0 : i32
    %c0_i32_0 = arith.constant 0 : i32
    %c0_i32_1 = arith.constant 0 : i32
    %c0_i32_2 = arith.constant 0 : i32
    %c0_i32_3 = arith.constant 0 : i32
    return %arg0, %c0_i32, %c0_i32_0, %c0_i32_1, %c0_i32_2 : i32, i32, i32, i32, i32
  }
  func.func @transform_1(%arg0: i32) -> (i32, i32, i32, i32) {
    %c0_i32 = arith.constant 0 : i32
    %c0_i32_0 = arith.constant 0 : i32
    %c0_i32_1 = arith.constant 0 : i32
    %c0_i32_2 = arith.constant 0 : i32
    return %arg0, %c0_i32, %c0_i32_0, %c0_i32_1 : i32, i32, i32, i32
  }
}

module attributes {stable_mosaic.version = 11 : i64} {
  func.func @_head_kernel(%arg0: i32, %arg1: memref<2x768xbf16, #tpu.memory_space<vmem>>, %arg2: memref<768x100xbf16, #tpu.memory_space<vmem>>, %arg3: memref<1x100xf32, #tpu.memory_space<vmem>>, %arg4: memref<100x10xf32, #tpu.memory_space<vmem>>, %arg5: memref<1x10xf32, #tpu.memory_space<vmem>>, %arg6: memref<2x10xf32, #tpu.memory_space<vmem>>, %arg7: memref<2x100xf32, #tpu.memory_space<vmem>>) attributes {dimension_semantics = [#tpu.dimension_semantics<arbitrary>], iteration_bounds = array<i64: 12>, scalar_prefetch = 0 : i64, scratch_operands = 1 : i64, tpu.core_type = #tpu.core_type<tc>, window_params = [{transform_indices = @transform_0, window_bounds = array<i64: 2, 768>}, {transform_indices = @transform_1, window_bounds = array<i64: 768, 100>}, {pipeline_mode = #tpu.pipeline_mode<synchronous>, transform_indices = @transform_2, window_bounds = array<i64: 1, 100>}, {pipeline_mode = #tpu.pipeline_mode<synchronous>, transform_indices = @transform_3, window_bounds = array<i64: 100, 10>}, {pipeline_mode = #tpu.pipeline_mode<synchronous>, transform_indices = @transform_4, window_bounds = array<i64: 1, 10>}, {pipeline_mode = #tpu.pipeline_mode<synchronous>, transform_indices = @transform_5, window_bounds = array<i64: 2, 10>}]} {
    %c0_i32 = arith.constant 0 : i32
    %0 = arith.cmpi eq, %arg0, %c0_i32 : i32
    %1 = arith.extui %0 : i1 to i32
    %c0_i32_0 = arith.constant 0 : i32
    %2 = arith.cmpi ne, %1, %c0_i32_0 : i32
    scf.if %2 {
      %cst_9 = arith.constant 0.000000e+00 : f32
      %12 = vector.broadcast %cst_9 : f32 to vector<2x100xf32>
      %c0_10 = arith.constant 0 : index
      %c0_11 = arith.constant 0 : index
      %13 = vector.load %arg7[%c0_10, %c0_11] : memref<2x100xf32, #tpu.memory_space<vmem>>, vector<2x100xf32>
      tpu.vector_store %arg7[%c0_10, %c0_11], %12 {strides = array<i32>} : memref<2x100xf32, #tpu.memory_space<vmem>>, vector<2x100xf32>,
    } else {
    }
    %c0 = arith.constant 0 : index
    %c0_1 = arith.constant 0 : index
    %3 = vector.load %arg7[%c0, %c0_1] : memref<2x100xf32, #tpu.memory_space<vmem>>, vector<2x100xf32>
    %c0_2 = arith.constant 0 : index
    %c0_3 = arith.constant 0 : index
    %4 = vector.load %arg1[%c0_2, %c0_3] : memref<2x768xbf16, #tpu.memory_space<vmem>>, vector<2x768xbf16>
    %c0_4 = arith.constant 0 : index
    %c0_5 = arith.constant 0 : index
    %5 = vector.load %arg2[%c0_4, %c0_5] : memref<768x100xbf16, #tpu.memory_space<vmem>>, vector<768x100xbf16>
    %cst = arith.constant dense<0.000000e+00> : vector<2x100xf32>
    %6 = tpu.matmul %4, %5, %cst {dimension_numbers = #tpu.dot_dimension_numbers<[1], [0], [0], [1], [0, 0, 1, 1], [], []>} : vector<2x768xbf16>, vector<768x100xbf16>, vector<2x100xf32> -> vector<2x100xf32>
    %7 = arith.addf %3, %6 : vector<2x100xf32>
    %c0_6 = arith.constant 0 : index
    %c0_7 = arith.constant 0 : index
    %8 = vector.load %arg7[%c0_6, %c0_7] : memref<2x100xf32, #tpu.memory_space<vmem>>, vector<2x100xf32>
    tpu.vector_store %arg7[%c0_6, %c0_7], %7 {strides = array<i32>} : memref<2x100xf32, #tpu.memory_space<vmem>>, vector<2x100xf32>,
    %c11_i32 = arith.constant 11 : i32
    %9 = arith.cmpi eq, %arg0, %c11_i32 : i32
    %10 = arith.extui %9 : i1 to i32
    %c0_i32_8 = arith.constant 0 : i32
    %11 = arith.cmpi ne, %10, %c0_i32_8 : i32
    scf.if %11 {
      %c0_9 = arith.constant 0 : index
      %c0_10 = arith.constant 0 : index
      %12 = vector.load %arg7[%c0_9, %c0_10] : memref<2x100xf32, #tpu.memory_space<vmem>>, vector<2x100xf32>
      %c0_11 = arith.constant 0 : index
      %c0_12 = arith.constant 0 : index
      %13 = vector.load %arg3[%c0_11, %c0_12] : memref<1x100xf32, #tpu.memory_space<vmem>>, vector<1x100xf32>
      %14 = vector.broadcast %13 : vector<1x100xf32> to vector<2x100xf32>
      %15 = arith.addf %12, %14 : vector<2x100xf32>
      %cst_13 = arith.constant 0.000000e+00 : f32
      %16 = vector.broadcast %cst_13 : f32 to vector<2x100xf32>
      %17 = arith.maximumf %15, %16 : vector<2x100xf32>
      %c0_14 = arith.constant 0 : index
      %c0_15 = arith.constant 0 : index
      %18 = vector.load %arg4[%c0_14, %c0_15] : memref<100x10xf32, #tpu.memory_space<vmem>>, vector<100x10xf32>
      %cst_16 = arith.constant dense<0.000000e+00> : vector<2x10xf32>
      %19 = tpu.matmul %17, %18, %cst_16 {dimension_numbers = #tpu.dot_dimension_numbers<[1], [0], [0], [1], [0, 0, 1, 1], [], []>} : vector<2x100xf32>, vector<100x10xf32>, vector<2x10xf32> -> vector<2x10xf32>
      %c0_17 = arith.constant 0 : index
      %c0_18 = arith.constant 0 : index
      %20 = vector.load %arg5[%c0_17, %c0_18] : memref<1x10xf32, #tpu.memory_space<vmem>>, vector<1x10xf32>
      %21 = vector.broadcast %20 : vector<1x10xf32> to vector<2x10xf32>
      %22 = arith.addf %19, %21 : vector<2x10xf32>
      %cst_19 = arith.constant dense<0xFF800000> : vector<2xf32>
      %23 = vector.multi_reduction <maximumf>, %22, %cst_19 [1] : vector<2x10xf32> to vector<2xf32>
      %24 = vector.shape_cast %23 : vector<2xf32> to vector<2x1xf32>
      %25 = vector.broadcast %24 : vector<2x1xf32> to vector<2x10xf32>
      %26 = arith.subf %22, %25 : vector<2x10xf32>
      %27 = math.exp %26 : vector<2x10xf32>
      %cst_20 = arith.constant dense<0.000000e+00> : vector<2xf32>
      %28 = vector.multi_reduction <add>, %27, %cst_20 [1] : vector<2x10xf32> to vector<2xf32>
      %29 = vector.shape_cast %28 : vector<2xf32> to vector<2x1xf32>
      %30 = math.log %29 : vector<2x1xf32>
      %31 = vector.broadcast %30 : vector<2x1xf32> to vector<2x10xf32>
      %32 = arith.subf %26, %31 : vector<2x10xf32>
      %c0_21 = arith.constant 0 : index
      %c0_22 = arith.constant 0 : index
      %33 = vector.load %arg6[%c0_21, %c0_22] : memref<2x10xf32, #tpu.memory_space<vmem>>, vector<2x10xf32>
      tpu.vector_store %arg6[%c0_21, %c0_22], %32 {strides = array<i32>} : memref<2x10xf32, #tpu.memory_space<vmem>>, vector<2x10xf32>,
    } else {
    }
    return
  }
  func.func @transform_0(%arg0: i32) -> (i32, i32) {
    %c0_i32 = arith.constant 0 : i32
    %c0_i32_0 = arith.constant 0 : i32
    return %c0_i32, %arg0 : i32, i32
  }
  func.func @transform_1(%arg0: i32) -> (i32, i32) {
    %c0_i32 = arith.constant 0 : i32
    %c0_i32_0 = arith.constant 0 : i32
    return %arg0, %c0_i32 : i32, i32
  }
  func.func @transform_2(%arg0: i32) -> (i32, i32) {
    %c0_i32 = arith.constant 0 : i32
    %c0_i32_0 = arith.constant 0 : i32
    %c0_i32_1 = arith.constant 0 : i32
    return %c0_i32, %c0_i32_0 : i32, i32
  }
  func.func @transform_3(%arg0: i32) -> (i32, i32) {
    %c0_i32 = arith.constant 0 : i32
    %c0_i32_0 = arith.constant 0 : i32
    %c0_i32_1 = arith.constant 0 : i32
    return %c0_i32, %c0_i32_0 : i32, i32
  }
  func.func @transform_4(%arg0: i32) -> (i32, i32) {
    %c0_i32 = arith.constant 0 : i32
    %c0_i32_0 = arith.constant 0 : i32
    %c0_i32_1 = arith.constant 0 : i32
    return %c0_i32, %c0_i32_0 : i32, i32
  }
  func.func @transform_5(%arg0: i32) -> (i32, i32) {
    %c0_i32 = arith.constant 0 : i32
    %c0_i32_0 = arith.constant 0 : i32
    %c0_i32_1 = arith.constant 0 : i32
    return %c0_i32, %c0_i32_0 : i32, i32
  }
}

</mosaic_0001>

<llo_original>
// kernel: digit_cnn_forward.4
$region0: #{digit_cnn_forward.4}
  #allocation0 [shape = 'u32[]', space=smem, size = 0x4, offset = 0x4, fixed_abs, tag = 'smem constant byte address 0x4 - core index']
  #allocation1 [shape = 'u32[144,128]{1,0:T(1,128)}', space=vmem, size = 0x12000, scoped, tag = 'internal scratch']
  %s0 = inlined_call_operand.vmem [shape: bf16[2,676,9], index: 0, kind: input, shape index: {}]
  %s1 = inlined_call_operand.hbm [shape: bf16[9,32], index: 1, kind: input, shape index: {}]
  %s2 = inlined_call_operand.hbm [shape: f32[1,32], index: 2, kind: input, shape index: {}]
  %s3 = inlined_call_operand.vmem [shape: bf16[2,676,32], index: 3, kind: output, shape index: {}]
  %s4 = sld [smem:[#allocation0]]
  $region53: #{digit_cnn_forward.4} parent=0
    _
  %s6 = ssub.s32 1, %s4
  %s7 = scalar_select 0, %s6, %s4
  $region1: #{digit_cnn_forward.4} parent=0
    #allocation2 [shape = 'u8[4096]{0}', space=vmem, size = 0x1000, scoped, tag = 'input window, operand 1, single buffered']
    #allocation3 [shape = 's32[2]{0}', space=sflag, size = 0x8, scoped, tag = 'scoped memory for digit_cnn_forward.4']
    #allocation4 [shape = 'u8[512]{0}', space=vmem, size = 0x400, scoped, tag = 'input window, operand 2, single buffered']
    #allocation5 [shape = 's32[1]{0}', space=sflag, size = 0x4, scoped, tag = 'scoped memory for digit_cnn_forward.4']
    %8 = vsyncpa [#allocation3], 0
    %9 = vsyncpa [#allocation5], 0
    loop: start=0, step=1, limit=4
    $region2: #{digit_cnn_forward.4} parent=1 // loop_pre_header
      _
    $region3: #{digit_cnn_forward.4} parent=1 // loop_header
      %s11 = sphi 0, %s15
      %p12 = scmp.ge.s32.totalorder %s11, 4
      %s21 = sphi 0, %s23
      %s24 = sphi 0, %s21
      %s25 = sphi 0, %s24
      %s41 = sphi 0, %s25
      %s45 = sphi 0, %s45
      %s47 = sphi 0, %s45
      %s48 = sphi 0, %s47
      %s62 = sphi 0, %s48
      %s66 = sphi 0, %s66
      %s68 = sphi 0, %s66
      %s69 = sphi 0, %s68
      %s83 = sphi 0, %s69
      %s89 = sphi 0, %s91
      %s92 = sphi 0, %s89
      %s93 = sphi 0, %s92
      %s109 = sphi 0, %s93
    $region4: #{digit_cnn_forward.4} parent=1 // loop_header_branch
      %14 = sbr.rel (%p12) target = $region8
    $region5: #{digit_cnn_forward.4} parent=1 // loop_body
      %s16 = ssub.s32 %s11, 1
      %s17 = ssub.s32 %s11, 2
      %s18 = sadd.s32 %s11, 1
      %s19 = ssub.s32 %s11, %s18
      %p20 = scmp.eq.s32.totalorder %s19, 0
      %s22 = sadd.s32 %s21, 1
      %s23 = scalar_select %p20, %s21, %s22
      %p26 = pneg %p20
      %p27 = scmp.eq.s32.totalorder %s11, 1
      %p28 = por %p26, %p27
      %p29 = scmp.ne.s32.totalorder %s21, %s24
      %p30 = scmp.eq.s32.totalorder %s11, 0
      %p31 = por %p29, %p30
      %p32 = scmp.ne.s32.totalorder %s21, %s24
      %p33 = scmp.eq.s32.totalorder %s16, 1
      %p34 = por %p32, %p33
      %p35 = scmp.ne.s32.totalorder %s24, %s25
      %p36 = scmp.eq.s32.totalorder %s16, 0
      %p37 = por %p35, %p36
      %p38 = scmp.ne.s32.totalorder %s24, %s25
      %p39 = scmp.eq.s32.totalorder %s17, 1
      %p40 = por %p38, %p39
      %p42 = scmp.ne.s32.totalorder %s25, %s41
      %p43 = scmp.eq.s32.totalorder %s17, 0
      %p44 = por %p42, %p43
      %s46 = sadd.s32 %s45, 1
      %p49 = scmp.eq.s32.totalorder %s11, 1
      %p50 = scmp.ne.s32.totalorder %s45, %s47
      %p51 = scmp.eq.s32.totalorder %s11, 0
      %p52 = por %p50, %p51
      %p53 = scmp.ne.s32.totalorder %s45, %s47
      %p54 = scmp.eq.s32.totalorder %s16, 1
      %p55 = por %p53, %p54
      %p56 = scmp.ne.s32.totalorder %s47, %s48
      %p57 = scmp.eq.s32.totalorder %s16, 0
      %p58 = por %p56, %p57
      %p59 = scmp.ne.s32.totalorder %s47, %s48
      %p60 = scmp.eq.s32.totalorder %s17, 1
      %p61 = por %p59, %p60
      %p63 = scmp.ne.s32.totalorder %s48, %s62
      %p64 = scmp.eq.s32.totalorder %s17, 0
      %p65 = por %p63, %p64
      %s67 = sadd.s32 %s66, 1
      %p70 = scmp.eq.s32.totalorder %s11, 1
      %p71 = scmp.ne.s32.totalorder %s66, %s68
      %p72 = scmp.eq.s32.totalorder %s11, 0
      %p73 = por %p71, %p72
      %p74 = scmp.ne.s32.totalorder %s66, %s68
      %p75 = scmp.eq.s32.totalorder %s16, 1
      %p76 = por %p74, %p75
      %p77 = scmp.ne.s32.totalorder %s68, %s69
      %p78 = scmp.eq.s32.totalorder %s16, 0
      %p79 = por %p77, %p78
      %p80 = scmp.ne.s32.totalorder %s68, %s69
      %p81 = scmp.eq.s32.totalorder %s17, 1
      %p82 = por %p80, %p81
      %p84 = scmp.ne.s32.totalorder %s69, %s83
      %p85 = scmp.eq.s32.totalorder %s17, 0
      %p86 = por %p84, %p85
      %s87 = ssub.s32 %s11, %s18
      %p88 = scmp.eq.s32.totalorder %s87, 0
      %s90 = sadd.s32 %s89, 1
      %s91 = scalar_select %p88, %s89, %s90
      %p94 = pneg %p88
      %p95 = scmp.eq.s32.totalorder %s11, 1
      %p96 = por %p94, %p95
      %p97 = scmp.ne.s32.totalorder %s89, %s92
      %p98 = scmp.eq.s32.totalorder %s11, 0
      %p99 = por %p97, %p98
      %p100 = scmp.ne.s32.totalorder %s89, %s92
      %p101 = scmp.eq.s32.totalorder %s16, 1
      %p102 = por %p100, %p101
      %p103 = scmp.ne.s32.totalorder %s92, %s93
      %p104 = scmp.eq.s32.totalorder %s16, 0
      %p105 = por %p103, %p104
      %p106 = scmp.ne.s32.totalorder %s92, %s93
      %p107 = scmp.eq.s32.totalorder %s17, 1
      %p108 = por %p106, %p107
      %p110 = scmp.ne.s32.totalorder %s93, %s109
      %p111 = scmp.eq.s32.totalorder %s17, 0
      %p112 = por %p110, %p111
      %p113 = scmp.le.s32.totalorder 1, %s11
      %p114 = scmp.lt.s32.totalorder %s11, 3
      %p115 = pnand %p113, %p114
      %p116 = pneg %p115
      // Predicated region
      $region9: #{digit_cnn_forward.4} parent=5 // pred_check
        _
      $region10: #{digit_cnn_forward.4} parent=5 // pred_check_branch
        %118 = sbr.rel (%p115) target = $region12
      $region11: #{digit_cnn_forward.4} parent=5 // pred_region
        %s119 = ssub.s32 %s11, 1
        // Predicated region
        $region13: #{digit_cnn_forward.4} parent=11 // pred_check
          %p120 = pneg %p58
        $region14: #{digit_cnn_forward.4} parent=11 // pred_check_branch
          %122 = sbr.rel (%p120) target = $region16
        $region15: #{digit_cnn_forward.4} parent=11 // pred_region
          %s124 = ssub.s32 128, 128
          %125 = vsyncadd [#allocation3], %s124
          %s126 = sshll.u32 [#allocation2], 4
          %s127 = int_to_ptr.vmem [resolvable:$true] %s126
          %132 = dma.hbm_to_vmem [thread:$0]  %s1, 128, %s127, [#allocation3], 64, 64, 4
        $region16: #{digit_cnn_forward.4} parent=11 // pred_fallthru
          _
        // Predicated region
        $region17: #{digit_cnn_forward.4} parent=11 // pred_check
          %p133 = pneg %p79
        $region18: #{digit_cnn_forward.4} parent=11 // pred_check_branch
          %135 = sbr.rel (%p133) target = $region20
        $region19: #{digit_cnn_forward.4} parent=11 // pred_region
          %s137 = ssub.s32 16, 16
          %138 = vsyncadd [#allocation5], %s137
          %s140 = sshll.u32 [#allocation4], 4
          %s141 = int_to_ptr.vmem [resolvable:$true] %s140
          %143 = dma.hbm_to_vmem [thread:$0]  %s2, 16, %s141, [#allocation5]
        $region20: #{digit_cnn_forward.4} parent=11 // pred_fallthru
          _
      $region12: #{digit_cnn_forward.4} parent=5 // pred_fallthru
        _
      %p144 = scmp.lt.s32.totalorder %s11, 2
      // Predicated region
      $region21: #{digit_cnn_forward.4} parent=5 // pred_check
        %p145 = pneg %p144
      $region22: #{digit_cnn_forward.4} parent=5 // pred_check_branch
        %147 = sbr.rel (%p145) target = $region24
      $region23: #{digit_cnn_forward.4} parent=5 // pred_region
        // Predicated region
        $region25: #{digit_cnn_forward.4} parent=23 // pred_check
          %p148 = pneg %p31
        $region26: #{digit_cnn_forward.4} parent=23 // pred_check_branch
          %150 = sbr.rel (%p148) target = $region28
        $region27: #{digit_cnn_forward.4} parent=23 // pred_region
          %p151 = scmp.lt.s32.totalorder %s11, 1
          %s152 = scalar_select %p151, %s11, 1
          %s153 = smul.addr %s152, 85
          %s154 = smul.addr %s153, 4
          %s155 = scalar_lea.vmem %s0, %s154
        $region28: #{digit_cnn_forward.4} parent=23 // pred_fallthru
          _
      $region24: #{digit_cnn_forward.4} parent=5 // pred_fallthru
        _
      %p156 = scmp.le.s32.totalorder 1, %s11
      %p157 = scmp.lt.s32.totalorder %s11, 3
      %p158 = pnand %p156, %p157
      %p159 = pneg %p158
      // Predicated region
      $region29: #{digit_cnn_forward.4} parent=5 // pred_check
        _
      $region30: #{digit_cnn_forward.4} parent=5 // pred_check_branch
        %161 = sbr.rel (%p158) target = $region32
      $region31: #{digit_cnn_forward.4} parent=5 // pred_region
        %s162 = ssub.s32 %s11, 1
        // Predicated region
        $region33: #{digit_cnn_forward.4} parent=31 // pred_check
          %p163 = pneg %p58
        $region34: #{digit_cnn_forward.4} parent=31 // pred_check_branch
          %165 = sbr.rel (%p163) target = $region36
        $region35: #{digit_cnn_forward.4} parent=31 // pred_region
          %166 = dma.done [#allocation3], 128
        $region36: #{digit_cnn_forward.4} parent=31 // pred_fallthru
          _
        // Predicated region
        $region37: #{digit_cnn_forward.4} parent=31 // pred_check
          %p167 = pneg %p79
        $region38: #{digit_cnn_forward.4} parent=31 // pred_check_branch
          %169 = sbr.rel (%p167) target = $region40
        $region39: #{digit_cnn_forward.4} parent=31 // pred_region
          %170 = dma.done [#allocation5], 16
        $region40: #{digit_cnn_forward.4} parent=31 // pred_fallthru
          _
        %p171 = scmp.lt.s32.totalorder %s16, 1
        %s172 = scalar_select %p171, %s16, 1
        %s173 = smul.addr %s172, 85
        %s174 = smul.addr %s173, 4
        %s175 = scalar_lea.vmem %s0, %s174
        %p176 = pneg %p37
        %p177 = pneg %p34
        %p178 = pneg %p58
        %p179 = pneg %p55
        %p180 = pneg %p79
        %p181 = pneg %p76
        %p182 = pneg %p105
        %p183 = pneg %p102
        %p184 = scmp.lt.s32.totalorder %s16, 1
        %s185 = scalar_select %p184, %s16, 1
        %s186 = smul.addr %s185, 85
        %s187 = smul.addr %s186, 4
        %s188 = scalar_lea.vmem %s3, %s187
        %p189 = scmp.lt.s32.totalorder %s16, 1
        %s190 = scalar_select %p189, %s16, 1
        %s191 = smul.addr %s190, 85
        %s192 = smul.addr %s191, 4
        %s193 = scalar_lea.vmem %s0, %s192
        %p194 = scmp.lt.s32.totalorder %s16, 1
        %s195 = scalar_select %p194, %s16, 1
        %s196 = smul.addr %s195, 85
        %s197 = smul.addr %s196, 4
        %s198 = scalar_lea.vmem %s3, %s197
        %v200 = vld [vmem:[%s193] sm:$0xf]
        %v201 = vld [vmem:[%s193 + $0x4] sm:$0xf]
        %v202 = vld [vmem:[%s193 + $0x8] sm:$0xf]
        %v203 = vld [vmem:[%s193 + $0xc] sm:$0xf]
        %v204 = vld [vmem:[%s193 + $0x10] sm:$0xf]
        %v205 = vld [vmem:[%s193 + $0x14] sm:$0xf]
        %v206 = vld [vmem:[%s193 + $0x18] sm:$0xf]
        %v207 = vld [vmem:[%s193 + $0x1c] sm:$0xf]
        %v208 = vld [vmem:[%s193 + $0x20] sm:$0xf]
        %v209 = vld [vmem:[%s193 + $0x24] sm:$0xf]
        %v210 = vld [vmem:[%s193 + $0x28] sm:$0xf]
        %v211 = vld [vmem:[%s193 + $0x2c] sm:$0xf]
        %v212 = vld [vmem:[%s193 + $0x30] sm:$0xf]
        %v213 = vld [vmem:[%s193 + $0x34] sm:$0xf]
        %v214 = vld [vmem:[%s193 + $0x38] sm:$0xf]
        %v215 = vld [vmem:[%s193 + $0x3c] sm:$0xf]
        %v216 = vld [vmem:[%s193 + $0x40] sm:$0xf]
        %v217 = vld [vmem:[%s193 + $0x44] sm:$0xf]
        %v218 = vld [vmem:[%s193 + $0x48] sm:$0xf]
        %v219 = vld [vmem:[%s193 + $0x4c] sm:$0xf]
        %v220 = vld [vmem:[%s193 + $0x50] sm:$0xf]
        %v221 = vld [vmem:[%s193 + $0x54] sm:$0xf]
        %v222 = vld [vmem:[%s193 + $0x58] sm:$0xf]
        %v223 = vld [vmem:[%s193 + $0x5c] sm:$0xf]
        %v224 = vld [vmem:[%s193 + $0x60] sm:$0xf]
        %v225 = vld [vmem:[%s193 + $0x64] sm:$0xf]
        %v226 = vld [vmem:[%s193 + $0x68] sm:$0xf]
        %v227 = vld [vmem:[%s193 + $0x6c] sm:$0xf]
        %v228 = vld [vmem:[%s193 + $0x70] sm:$0xf]
        %v229 = vld [vmem:[%s193 + $0x74] sm:$0xf]
        %v230 = vld [vmem:[%s193 + $0x78] sm:$0xf]
        %v231 = vld [vmem:[%s193 + $0x7c] sm:$0xf]
        %v232 = vld [vmem:[%s193 + $0x80] sm:$0xf]
        %v233 = vld [vmem:[%s193 + $0x84] sm:$0xf]
        %v234 = vld [vmem:[%s193 + $0x88] sm:$0xf]
        %v235 = vld [vmem:[%s193 + $0x8c] sm:$0xf]
        %v236 = vld [vmem:[%s193 + $0x90] sm:$0xf]
        %v237 = vld [vmem:[%s193 + $0x94] sm:$0xf]
        %v238 = vld [vmem:[%s193 + $0x98] sm:$0xf]
        %v239 = vld [vmem:[%s193 + $0x9c] sm:$0xf]
        %v240 = vld [vmem:[%s193 + $0xa0] sm:$0xf]
        %v241 = vld [vmem:[%s193 + $0xa4] sm:$0xf]
        %v242 = vld [vmem:[%s193 + $0xa8] sm:$0xf]
        %v243 = vld [vmem:[%s193 + $0xac] sm:$0xf]
        %v244 = vld [vmem:[%s193 + $0xb0] sm:$0xf]
        %v245 = vld [vmem:[%s193 + $0xb4] sm:$0xf]
        %v246 = vld [vmem:[%s193 + $0xb8] sm:$0xf]
        %v247 = vld [vmem:[%s193 + $0xbc] sm:$0xf]
        %v248 = vld [vmem:[%s193 + $0xc0] sm:$0xf]
        %v249 = vld [vmem:[%s193 + $0xc4] sm:$0xf]
        %v250 = vld [vmem:[%s193 + $0xc8] sm:$0xf]
        %v251 = vld [vmem:[%s193 + $0xcc] sm:$0xf]
        %v252 = vld [vmem:[%s193 + $0xd0] sm:$0xf]
        %v253 = vld [vmem:[%s193 + $0xd4] sm:$0xf]
        %v254 = vld [vmem:[%s193 + $0xd8] sm:$0xf]
        %v255 = vld [vmem:[%s193 + $0xdc] sm:$0xf]
        %v256 = vld [vmem:[%s193 + $0xe0] sm:$0xf]
        %v257 = vld [vmem:[%s193 + $0xe4] sm:$0xf]
        %v258 = vld [vmem:[%s193 + $0xe8] sm:$0xf]
        %v259 = vld [vmem:[%s193 + $0xec] sm:$0xf]
        %v260 = vld [vmem:[%s193 + $0xf0] sm:$0xf]
        %v261 = vld [vmem:[%s193 + $0xf4] sm:$0xf]
        %v262 = vld [vmem:[%s193 + $0xf8] sm:$0xf]
        %v263 = vld [vmem:[%s193 + $0xfc] sm:$0xf]
        %v264 = vld [vmem:[%s193 + $0x100] sm:$0xf]
        %v265 = vld [vmem:[%s193 + $0x104] sm:$0xf]
        %v266 = vld [vmem:[%s193 + $0x108] sm:$0xf]
        %v267 = vld [vmem:[%s193 + $0x10c] sm:$0xf]
        %v268 = vld [vmem:[%s193 + $0x110] sm:$0xf]
        %v269 = vld [vmem:[%s193 + $0x114] sm:$0xf]
        %v270 = vld [vmem:[%s193 + $0x118] sm:$0xf]
        %v271 = vld [vmem:[%s193 + $0x11c] sm:$0xf]
        %v272 = vld [vmem:[%s193 + $0x120] sm:$0xf]
        %v273 = vld [vmem:[%s193 + $0x124] sm:$0xf]
        %v274 = vld [vmem:[%s193 + $0x128] sm:$0xf]
        %v275 = vld [vmem:[%s193 + $0x12c] sm:$0xf]
        %v276 = vld [vmem:[%s193 + $0x130] sm:$0xf]
        %v277 = vld [vmem:[%s193 + $0x134] sm:$0xf]
        %v278 = vld [vmem:[%s193 + $0x138] sm:$0xf]
        %v279 = vld [vmem:[%s193 + $0x13c] sm:$0xf]
        %v280 = vld [vmem:[%s193 + $0x140] sm:$0xf]
        %v281 = vld [vmem:[%s193 + $0x144] sm:$0xf]
        %v282 = vld [vmem:[%s193 + $0x148] sm:$0xf]
        %v283 = vld [vmem:[%s193 + $0x14c] sm:$0xf]
        %v284 = vld [vmem:[%s193 + $0x150] sm:$0x3]
        %v285 = vld [vmem:[#allocation2] sm:$0xf]
        %v286 = vld [vmem:[#allocation2 + $0x4] sm:$0x1]
        %v287 = vld [vmem:[#allocation4] sm:$0x1]
        %v289 = vlaneseq
        %v290 = vshrl.u32 %v289, 7
        %v291 = vsub.s32 0, %v290
        %v292 = vrot.slane %v287, %v291
        %v379 = vunpack.c.l.b16 %v200
        %v380 = vunpack.c.l.b16 %v201
        %v381 = vunpack.c.l.b16 %v202
        %v382 = vunpack.c.l.b16 %v203
        %v383 = vunpack.c.l.b16 %v204
        %v384 = vunpack.c.l.b16 %v205
        %v385 = vunpack.c.l.b16 %v206
        %v386 = vunpack.c.l.b16 %v207
        %v387 = vunpack.c.l.b16 %v208
        %v388 = vunpack.c.l.b16 %v209
        %v389 = vunpack.c.l.b16 %v210
        %v390 = vunpack.c.l.b16 %v211
        %v391 = vunpack.c.l.b16 %v212
        %v392 = vunpack.c.l.b16 %v213
        %v393 = vunpack.c.l.b16 %v214
        %v394 = vunpack.c.l.b16 %v215
        %v395 = vunpack.c.l.b16 %v216
        %v396 = vunpack.c.l.b16 %v217
        %v397 = vunpack.c.l.b16 %v218
        %v398 = vunpack.c.l.b16 %v219
        %v399 = vunpack.c.l.b16 %v220
        %v400 = vunpack.c.l.b16 %v221
        %v401 = vunpack.c.l.b16 %v222
        %v402 = vunpack.c.l.b16 %v223
        %v403 = vunpack.c.l.b16 %v224
        %v404 = vunpack.c.l.b16 %v225
        %v405 = vunpack.c.l.b16 %v226
        %v406 = vunpack.c.l.b16 %v227
        %v407 = vunpack.c.l.b16 %v228
        %v408 = vunpack.c.l.b16 %v229
        %v409 = vunpack.c.l.b16 %v230
        %v410 = vunpack.c.l.b16 %v231
        %v411 = vunpack.c.l.b16 %v232
        %v412 = vunpack.c.l.b16 %v233
        %v413 = vunpack.c.l.b16 %v234
        %v414 = vunpack.c.l.b16 %v235
        %v415 = vunpack.c.l.b16 %v236
        %v416 = vunpack.c.l.b16 %v237
        %v417 = vunpack.c.l.b16 %v238
        %v418 = vunpack.c.l.b16 %v239
        %v419 = vunpack.c.l.b16 %v240
        %v420 = vunpack.c.l.b16 %v241
        %v421 = vunpack.c.l.b16 %v242
        %v422 = vunpack.c.l.b16 %v243
        %v423 = vunpack.c.l.b16 %v244
        %v424 = vunpack.c.l.b16 %v245
        %v425 = vunpack.c.l.b16 %v246
        %v426 = vunpack.c.l.b16 %v247
        %v427 = vunpack.c.l.b16 %v248
        %v428 = vunpack.c.l.b16 %v249
        %v429 = vunpack.c.l.b16 %v250
        %v430 = vunpack.c.l.b16 %v251
        %v431 = vunpack.c.l.b16 %v252
        %v432 = vunpack.c.l.b16 %v253
        %v433 = vunpack.c.l.b16 %v254
        %v434 = vunpack.c.l.b16 %v255
        %v435 = vunpack.c.l.b16 %v256
        %v436 = vunpack.c.l.b16 %v257
        %v437 = vunpack.c.l.b16 %v258
        %v438 = vunpack.c.l.b16 %v259
        %v439 = vunpack.c.l.b16 %v260
        %v440 = vunpack.c.l.b16 %v261
        %v441 = vunpack.c.l.b16 %v262
        %v442 = vunpack.c.l.b16 %v263
        %v443 = vunpack.c.l.b16 %v264
        %v444 = vunpack.c.l.b16 %v265
        %v445 = vunpack.c.l.b16 %v266
        %v446 = vunpack.c.l.b16 %v267
        %v447 = vunpack.c.l.b16 %v268
        %v448 = vunpack.c.l.b16 %v269
        %v449 = vunpack.c.l.b16 %v270
        %v450 = vunpack.c.l.b16 %v271
        %v451 = vunpack.c.l.b16 %v272
        %v452 = vunpack.c.l.b16 %v273
        %v453 = vunpack.c.l.b16 %v274
        %v454 = vunpack.c.l.b16 %v275
        %v455 = vunpack.c.l.b16 %v276
        %v456 = vunpack.c.l.b16 %v277
        %v457 = vunpack.c.l.b16 %v278
        %v458 = vunpack.c.l.b16 %v279
        %v459 = vunpack.c.l.b16 %v280
        %v460 = vunpack.c.l.b16 %v281
        %v461 = vunpack.c.l.b16 %v282
        %v462 = vunpack.c.l.b16 %v283
        %v463 = vunpack.c.l.b16 %v284
        %v464 = vpack.c.b16 %v380, %v379
        %v465 = vpack.c.b16 %v382, %v381
        %v466 = vpack.c.b16 %v384, %v383
        %v467 = vpack.c.b16 %v386, %v385
        %v468 = vpack.c.b16 %v388, %v387
        %v469 = vpack.c.b16 %v390, %v389
        %v470 = vpack.c.b16 %v392, %v391
        %v471 = vpack.c.b16 %v394, %v393
        %v472 = vpack.c.b16 %v396, %v395
        %v473 = vpack.c.b16 %v398, %v397
        %v474 = vpack.c.b16 %v400, %v399
        %v475 = vpack.c.b16 %v402, %v401
        %v476 = vpack.c.b16 %v404, %v403
        %v477 = vpack.c.b16 %v406, %v405
        %v478 = vpack.c.b16 %v408, %v407
        %v479 = vpack.c.b16 %v410, %v409
        %v480 = vpack.c.b16 %v412, %v411
        %v481 = vpack.c.b16 %v414, %v413
        %v482 = vpack.c.b16 %v416, %v415
        %v483 = vpack.c.b16 %v418, %v417
        %v484 = vpack.c.b16 %v420, %v419
        %v485 = vpack.c.b16 %v422, %v421
        %v486 = vpack.c.b16 %v424, %v423
        %v487 = vpack.c.b16 %v426, %v425
        %v488 = vpack.c.b16 %v428, %v427
        %v489 = vpack.c.b16 %v430, %v429
        %v490 = vpack.c.b16 %v432, %v431
        %v491 = vpack.c.b16 %v434, %v433
        %v492 = vpack.c.b16 %v436, %v435
        %v493 = vpack.c.b16 %v438, %v437
        %v494 = vpack.c.b16 %v440, %v439
        %v495 = vpack.c.b16 %v442, %v441
        %v496 = vpack.c.b16 %v444, %v443
        %v497 = vpack.c.b16 %v446, %v445
        %v498 = vpack.c.b16 %v448, %v447
        %v499 = vpack.c.b16 %v450, %v449
        %v500 = vpack.c.b16 %v452, %v451
        %v501 = vpack.c.b16 %v454, %v453
        %v502 = vpack.c.b16 %v456, %v455
        %v503 = vpack.c.b16 %v458, %v457
        %v504 = vpack.c.b16 %v460, %v459
        %v505 = vpack.c.b16 %v462, %v461
        %v506 = vpack.c.b16 %v463, %v463
        %v509 = vunpack.c.l.b16 %v285
        %v510 = vunpack.c.l.b16 %v286
        %v511 = vpack.c.b16 %v510, %v509
        %vm512 = vcmask 72704
        %v514 = vsel %vm512, %v464, 0
        %v517 = vsel %vm512, %v465, 0
        %v520 = vsel %vm512, %v466, 0
        %v523 = vsel %vm512, %v467, 0
        %v526 = vsel %vm512, %v468, 0
        %v529 = vsel %vm512, %v469, 0
        %v532 = vsel %vm512, %v470, 0
        %v535 = vsel %vm512, %v471, 0
        %v538 = vsel %vm512, %v472, 0
        %v541 = vsel %vm512, %v473, 0
        %v544 = vsel %vm512, %v474, 0
        %v547 = vsel %vm512, %v475, 0
        %v550 = vsel %vm512, %v476, 0
        %v553 = vsel %vm512, %v477, 0
        %v556 = vsel %vm512, %v478, 0
        %v559 = vsel %vm512, %v479, 0
        %v562 = vsel %vm512, %v480, 0
        %v565 = vsel %vm512, %v481, 0
        %v568 = vsel %vm512, %v482, 0
        %v571 = vsel %vm512, %v483, 0
        %v574 = vsel %vm512, %v484, 0
        %v577 = vsel %vm512, %v485, 0
        %v580 = vsel %vm512, %v486, 0
        %v583 = vsel %vm512, %v487, 0
        %v586 = vsel %vm512, %v488, 0
        %v589 = vsel %vm512, %v489, 0
        %v592 = vsel %vm512, %v490, 0
        %v595 = vsel %vm512, %v491, 0
        %v598 = vsel %vm512, %v492, 0
        %v601 = vsel %vm512, %v493, 0
        %v604 = vsel %vm512, %v494, 0
        %v607 = vsel %vm512, %v495, 0
        %v610 = vsel %vm512, %v496, 0
        %v613 = vsel %vm512, %v497, 0
        %v616 = vsel %vm512, %v498, 0
        %v619 = vsel %vm512, %v499, 0
        %v622 = vsel %vm512, %v500, 0
        %v625 = vsel %vm512, %v501, 0
        %v628 = vsel %vm512, %v502, 0
        %v631 = vsel %vm512, %v503, 0
        %v634 = vsel %vm512, %v504, 0
        %v637 = vsel %vm512, %v505, 0
        %v640 = vsel %vm512, %v506, 0
        %vm642 = vcmask 1043456
        %vm643 = vcmask 1044480
        %v644 = vsel %vm642, 4294967295, 65535
        %v645 = vsel %vm643, %v644, 0
        %v647 = vand.u32 %v511, %v645
        %649 = vmatprep.subr.bf16.mxu0 0
        %650 = vmatpush1.bf16.msra.mxu0 %v647
        %651 = vmatprep.subr.bf16.mxu0 0
        %652 = vmatpush1.bf16.msra.mxu0 0
        %653 = vmatprep.subr.bf16.mxu0 0
        %654 = vmatpush1.bf16.msra.mxu0 0
        %655 = vmatprep.subr.bf16.mxu0 0
        %656 = vmatpush1.bf16.msra.mxu0 0
        %657 = vmatprep.subr.bf16.mxu0 0
        %658 = vmatpush1.bf16.msra.mxu0 0
        %659 = vmatprep.subr.bf16.mxu0 0
        %660 = vmatpush1.bf16.msra.mxu0 0
        %661 = vmatprep.subr.bf16.mxu0 0
        %662 = vmatpush1.bf16.msra.mxu0 0
        %663 = vmatprep.subr.bf16.mxu0 0
        %664 = vmatpush1.bf16.msra.mxu0 0
        %665 = vmatprep.subr.bf16.mxu0 0
        %666 = vmatpush1.bf16.msra.mxu0 0
        %667 = vmatprep.subr.bf16.mxu0 0
        %668 = vmatpush1.bf16.msra.mxu0 0
        %669 = vmatprep.subr.bf16.mxu0 0
        %670 = vmatpush1.bf16.msra.mxu0 0
        %671 = vmatprep.subr.bf16.mxu0 0
        %672 = vmatpush1.bf16.msra.mxu0 0
        %673 = vmatprep.subr.bf16.mxu0 0
        %674 = vmatpush1.bf16.msra.mxu0 0
        %675 = vmatprep.subr.bf16.mxu0 0
        %676 = vmatpush1.bf16.msra.mxu0 0
        %677 = vmatprep.subr.bf16.mxu0 0
        %678 = vmatpush1.bf16.msra.mxu0 0
        %679 = vmatprep.subr.bf16.mxu0 0
        %680 = vmatpush1.bf16.msra.mxu0 0
        %681 = vmatprep.mubr.bf16.mxu0 0
        %682 = vmatmul.mubr.bf16.gmra.mrb[0].mxu0 %v514
        %v683 = vpop.f32.mrb[0].mxu0
        %v684 = vadd.f32 %v292, %v683
        %v685 = vpop.f32.mrb[0].mxu0
        %v686 = vpop.f32.mrb[0].mxu0
        %v687 = vadd.f32 %v292, %v686
        %v688 = vpop.f32.mrb[0].mxu0
        %689 = vmatprep.mubr.bf16.mxu0 0
        %690 = vmatmul.mubr.bf16.gmra.mrb[0].mxu0 %v517
        %v691 = vpop.f32.mrb[0].mxu0
        %v692 = vadd.f32 %v292, %v691
        %v693 = vpop.f32.mrb[0].mxu0
        %v694 = vpop.f32.mrb[0].mxu0
        %v695 = vadd.f32 %v292, %v694
        %v696 = vpop.f32.mrb[0].mxu0
        %697 = vmatprep.mubr.bf16.mxu0 0
        %698 = vmatmul.mubr.bf16.gmra.mrb[0].mxu0 %v520
        %v699 = vpop.f32.mrb[0].mxu0
        %v700 = vadd.f32 %v292, %v699
        %v701 = vpop.f32.mrb[0].mxu0
        %v702 = vpop.f32.mrb[0].mxu0
        %v703 = vadd.f32 %v292, %v702
        %v704 = vpop.f32.mrb[0].mxu0
        %705 = vmatprep.mubr.bf16.mxu0 0
        %706 = vmatmul.mubr.bf16.gmra.mrb[0].mxu0 %v523
        %v707 = vpop.f32.mrb[0].mxu0
        %v708 = vadd.f32 %v292, %v707
        %v709 = vpop.f32.mrb[0].mxu0
        %v710 = vpop.f32.mrb[0].mxu0
        %v711 = vadd.f32 %v292, %v710
        %v712 = vpop.f32.mrb[0].mxu0
        %713 = vmatprep.mubr.bf16.mxu0 0
        %714 = vmatmul.mubr.bf16.gmra.mrb[0].mxu0 %v526
        %v715 = vpop.f32.mrb[0].mxu0
        %v716 = vadd.f32 %v292, %v715
        %v717 = vpop.f32.mrb[0].mxu0
        %v718 = vpop.f32.mrb[0].mxu0
        %v719 = vadd.f32 %v292, %v718
        %v720 = vpop.f32.mrb[0].mxu0
        %721 = vmatprep.mubr.bf16.mxu0 0
        %722 = vmatmul.mubr.bf16.gmra.mrb[0].mxu0 %v529
        %v723 = vpop.f32.mrb[0].mxu0
        %v724 = vadd.f32 %v292, %v723
        %v725 = vpop.f32.mrb[0].mxu0
        %v726 = vpop.f32.mrb[0].mxu0
        %v727 = vadd.f32 %v292, %v726
        %v728 = vpop.f32.mrb[0].mxu0
        %729 = vmatprep.mubr.bf16.mxu0 0
        %730 = vmatmul.mubr.bf16.gmra.mrb[0].mxu0 %v532
        %v731 = vpop.f32.mrb[0].mxu0
        %v732 = vadd.f32 %v292, %v731
        %v733 = vpop.f32.mrb[0].mxu0
        %v734 = vpop.f32.mrb[0].mxu0
        %v735 = vadd.f32 %v292, %v734
        %v736 = vpop.f32.mrb[0].mxu0
        %737 = vmatprep.mubr.bf16.mxu0 0
        %738 = vmatmul.mubr.bf16.gmra.mrb[0].mxu0 %v535
        %v739 = vpop.f32.mrb[0].mxu0
        %v740 = vadd.f32 %v292, %v739
        %v741 = vpop.f32.mrb[0].mxu0
        %v742 = vpop.f32.mrb[0].mxu0
        %v743 = vadd.f32 %v292, %v742
        %v744 = vpop.f32.mrb[0].mxu0
        %745 = vmatprep.mubr.bf16.mxu0 0
        %746 = vmatmul.mubr.bf16.gmra.mrb[0].mxu0 %v538
        %v747 = vpop.f32.mrb[0].mxu0
        %v748 = vadd.f32 %v292, %v747
        %v749 = vpop.f32.mrb[0].mxu0
        %v750 = vpop.f32.mrb[0].mxu0
        %v751 = vadd.f32 %v292, %v750
        %v752 = vpop.f32.mrb[0].mxu0
        %753 = vmatprep.mubr.bf16.mxu0 0
        %754 = vmatmul.mubr.bf16.gmra.mrb[0].mxu0 %v541
        %v755 = vpop.f32.mrb[0].mxu0
        %v756 = vadd.f32 %v292, %v755
        %v757 = vpop.f32.mrb[0].mxu0
        %v758 = vpop.f32.mrb[0].mxu0
        %v759 = vadd.f32 %v292, %v758
        %v760 = vpop.f32.mrb[0].mxu0
        %761 = vmatprep.mubr.bf16.mxu0 0
        %762 = vmatmul.mubr.bf16.gmra.mrb[0].mxu0 %v544
        %v763 = vpop.f32.mrb[0].mxu0
        %v764 = vadd.f32 %v292, %v763
        %v765 = vpop.f32.mrb[0].mxu0
        %v766 = vpop.f32.mrb[0].mxu0
        %v767 = vadd.f32 %v292, %v766
        %v768 = vpop.f32.mrb[0].mxu0
        %769 = vmatprep.mubr.bf16.mxu0 0
        %770 = vmatmul.mubr.bf16.gmra.mrb[0].mxu0 %v547
        %v771 = vpop.f32.mrb[0].mxu0
        %v772 = vadd.f32 %v292, %v771
        %v773 = vpop.f32.mrb[0].mxu0
        %v774 = vpop.f32.mrb[0].mxu0
        %v775 = vadd.f32 %v292, %v774
        %v776 = vpop.f32.mrb[0].mxu0
        %777 = vmatprep.mubr.bf16.mxu0 0
        %778 = vmatmul.mubr.bf16.gmra.mrb[0].mxu0 %v550
        %v779 = vpop.f32.mrb[0].mxu0
        %v780 = vadd.f32 %v292, %v779
        %v781 = vpop.f32.mrb[0].mxu0
        %v782 = vpop.f32.mrb[0].mxu0
        %v783 = vadd.f32 %v292, %v782
        %v784 = vpop.f32.mrb[0].mxu0
        %785 = vmatprep.mubr.bf16.mxu0 0
        %786 = vmatmul.mubr.bf16.gmra.mrb[0].mxu0 %v553
        %v787 = vpop.f32.mrb[0].mxu0
        %v788 = vadd.f32 %v292, %v787
        %v789 = vpop.f32.mrb[0].mxu0
        %v790 = vpop.f32.mrb[0].mxu0
        %v791 = vadd.f32 %v292, %v790
        %v792 = vpop.f32.mrb[0].mxu0
        %793 = vmatprep.mubr.bf16.mxu0 0
        %794 = vmatmul.mubr.bf16.gmra.mrb[0].mxu0 %v556
        %v795 = vpop.f32.mrb[0].mxu0
        %v796 = vadd.f32 %v292, %v795
        %v797 = vpop.f32.mrb[0].mxu0
        %v798 = vpop.f32.mrb[0].mxu0
        %v799 = vadd.f32 %v292, %v798
        %v800 = vpop.f32.mrb[0].mxu0
        %801 = vmatprep.mubr.bf16.mxu0 0
        %802 = vmatmul.mubr.bf16.gmra.mrb[0].mxu0 %v559
        %v803 = vpop.f32.mrb[0].mxu0
        %v804 = vadd.f32 %v292, %v803
        %v805 = vpop.f32.mrb[0].mxu0
        %v806 = vpop.f32.mrb[0].mxu0
        %v807 = vadd.f32 %v292, %v806
        %v808 = vpop.f32.mrb[0].mxu0
        %809 = vmatprep.mubr.bf16.mxu0 0
        %810 = vmatmul.mubr.bf16.gmra.mrb[0].mxu0 %v562
        %v811 = vpop.f32.mrb[0].mxu0
        %v812 = vadd.f32 %v292, %v811
        %v813 = vpop.f32.mrb[0].mxu0
        %v814 = vpop.f32.mrb[0].mxu0
        %v815 = vadd.f32 %v292, %v814
        %v816 = vpop.f32.mrb[0].mxu0
        %817 = vmatprep.mubr.bf16.mxu0 0
        %818 = vmatmul.mubr.bf16.gmra.mrb[0].mxu0 %v565
        %v819 = vpop.f32.mrb[0].mxu0
        %v820 = vadd.f32 %v292, %v819
        %v821 = vpop.f32.mrb[0].mxu0
        %v822 = vpop.f32.mrb[0].mxu0
        %v823 = vadd.f32 %v292, %v822
        %v824 = vpop.f32.mrb[0].mxu0
        %825 = vmatprep.mubr.bf16.mxu0 0
        %826 = vmatmul.mubr.bf16.gmra.mrb[0].mxu0 %v568
        %v827 = vpop.f32.mrb[0].mxu0
        %v828 = vadd.f32 %v292, %v827
        %v829 = vpop.f32.mrb[0].mxu0
        %v830 = vpop.f32.mrb[0].mxu0
        %v831 = vadd.f32 %v292, %v830
        %v832 = vpop.f32.mrb[0].mxu0
        %833 = vmatprep.mubr.bf16.mxu0 0
        %834 = vmatmul.mubr.bf16.gmra.mrb[0].mxu0 %v571
        %v835 = vpop.f32.mrb[0].mxu0
        %v836 = vadd.f32 %v292, %v835
        %v837 = vpop.f32.mrb[0].mxu0
        %v838 = vpop.f32.mrb[0].mxu0
        %v839 = vadd.f32 %v292, %v838
        %v840 = vpop.f32.mrb[0].mxu0
        %841 = vmatprep.mubr.bf16.mxu0 0
        %842 = vmatmul.mubr.bf16.gmra.mrb[0].mxu0 %v574
        %v843 = vpop.f32.mrb[0].mxu0
        %v844 = vadd.f32 %v292, %v843
        %v845 = vpop.f32.mrb[0].mxu0
        %v846 = vpop.f32.mrb[0].mxu0
        %v847 = vadd.f32 %v292, %v846
        %v848 = vpop.f32.mrb[0].mxu0
        %849 = vmatprep.mubr.bf16.mxu0 0
        %850 = vmatmul.mubr.bf16.gmra.mrb[0].mxu0 %v577
        %v851 = vpop.f32.mrb[0].mxu0
        %v852 = vadd.f32 %v292, %v851
        %v853 = vpop.f32.mrb[0].mxu0
        %v854 = vpop.f32.mrb[0].mxu0
        %v855 = vadd.f32 %v292, %v854
        %v856 = vpop.f32.mrb[0].mxu0
        %857 = vmatprep.mubr.bf16.mxu0 0
        %858 = vmatmul.mubr.bf16.gmra.mrb[0].mxu0 %v580
        %v859 = vpop.f32.mrb[0].mxu0
        %v860 = vadd.f32 %v292, %v859
        %v861 = vpop.f32.mrb[0].mxu0
        %v862 = vpop.f32.mrb[0].mxu0
        %v863 = vadd.f32 %v292, %v862
        %v864 = vpop.f32.mrb[0].mxu0
        %865 = vmatprep.mubr.bf16.mxu0 0
        %866 = vmatmul.mubr.bf16.gmra.mrb[0].mxu0 %v583
        %v867 = vpop.f32.mrb[0].mxu0
        %v868 = vadd.f32 %v292, %v867
        %v869 = vpop.f32.mrb[0].mxu0
        %v870 = vpop.f32.mrb[0].mxu0
        %v871 = vadd.f32 %v292, %v870
        %v872 = vpop.f32.mrb[0].mxu0
        %873 = vmatprep.mubr.bf16.mxu0 0
        %874 = vmatmul.mubr.bf16.gmra.mrb[0].mxu0 %v586
        %v875 = vpop.f32.mrb[0].mxu0
        %v876 = vadd.f32 %v292, %v875
        %v877 = vpop.f32.mrb[0].mxu0
        %v878 = vpop.f32.mrb[0].mxu0
        %v879 = vadd.f32 %v292, %v878
        %v880 = vpop.f32.mrb[0].mxu0
        %881 = vmatprep.mubr.bf16.mxu0 0
        %882 = vmatmul.mubr.bf16.gmra.mrb[0].mxu0 %v589
        %v883 = vpop.f32.mrb[0].mxu0
        %v884 = vadd.f32 %v292, %v883
        %v885 = vpop.f32.mrb[0].mxu0
        %v886 = vpop.f32.mrb[0].mxu0
        %v887 = vadd.f32 %v292, %v886
        %v888 = vpop.f32.mrb[0].mxu0
        %889 = vmatprep.mubr.bf16.mxu0 0
        %890 = vmatmul.mubr.bf16.gmra.mrb[0].mxu0 %v592
        %v891 = vpop.f32.mrb[0].mxu0
        %v892 = vadd.f32 %v292, %v891
        %v893 = vpop.f32.mrb[0].mxu0
        %v894 = vpop.f32.mrb[0].mxu0
        %v895 = vadd.f32 %v292, %v894
        %v896 = vpop.f32.mrb[0].mxu0
        %897 = vmatprep.mubr.bf16.mxu0 0
        %898 = vmatmul.mubr.bf16.gmra.mrb[0].mxu0 %v595
        %v899 = vpop.f32.mrb[0].mxu0
        %v900 = vadd.f32 %v292, %v899
        %v901 = vpop.f32.mrb[0].mxu0
        %v902 = vpop.f32.mrb[0].mxu0
        %v903 = vadd.f32 %v292, %v902
        %v904 = vpop.f32.mrb[0].mxu0
        %905 = vmatprep.mubr.bf16.mxu0 0
        %906 = vmatmul.mubr.bf16.gmra.mrb[0].mxu0 %v598
        %v907 = vpop.f32.mrb[0].mxu0
        %v908 = vadd.f32 %v292, %v907
        %v909 = vpop.f32.mrb[0].mxu0
        %v910 = vpop.f32.mrb[0].mxu0
        %v911 = vadd.f32 %v292, %v910
        %v912 = vpop.f32.mrb[0].mxu0
        %913 = vmatprep.mubr.bf16.mxu0 0
        %914 = vmatmul.mubr.bf16.gmra.mrb[0].mxu0 %v601
        %v915 = vpop.f32.mrb[0].mxu0
        %v916 = vadd.f32 %v292, %v915
        %v917 = vpop.f32.mrb[0].mxu0
        %v918 = vpop.f32.mrb[0].mxu0
        %v919 = vadd.f32 %v292, %v918
        %v920 = vpop.f32.mrb[0].mxu0
        %921 = vmatprep.mubr.bf16.mxu0 0
        %922 = vmatmul.mubr.bf16.gmra.mrb[0].mxu0 %v604
        %v923 = vpop.f32.mrb[0].mxu0
        %v924 = vadd.f32 %v292, %v923
        %v925 = vpop.f32.mrb[0].mxu0
        %v926 = vpop.f32.mrb[0].mxu0
        %v927 = vadd.f32 %v292, %v926
        %v928 = vpop.f32.mrb[0].mxu0
        %929 = vmatprep.mubr.bf16.mxu0 0
        %930 = vmatmul.mubr.bf16.gmra.mrb[0].mxu0 %v607
        %v931 = vpop.f32.mrb[0].mxu0
        %v932 = vadd.f32 %v292, %v931
        %v933 = vpop.f32.mrb[0].mxu0
        %v934 = vpop.f32.mrb[0].mxu0
        %v935 = vadd.f32 %v292, %v934
        %v936 = vpop.f32.mrb[0].mxu0
        %937 = vmatprep.mubr.bf16.mxu0 0
        %938 = vmatmul.mubr.bf16.gmra.mrb[0].mxu0 %v610
        %v939 = vpop.f32.mrb[0].mxu0
        %v940 = vadd.f32 %v292, %v939
        %v941 = vpop.f32.mrb[0].mxu0
        %v942 = vpop.f32.mrb[0].mxu0
        %v943 = vadd.f32 %v292, %v942
        %v944 = vpop.f32.mrb[0].mxu0
        %945 = vmatprep.mubr.bf16.mxu0 0
        %946 = vmatmul.mubr.bf16.gmra.mrb[0].mxu0 %v613
        %v947 = vpop.f32.mrb[0].mxu0
        %v948 = vadd.f32 %v292, %v947
        %v949 = vpop.f32.mrb[0].mxu0
        %v950 = vpop.f32.mrb[0].mxu0
        %v951 = vadd.f32 %v292, %v950
        %v952 = vpop.f32.mrb[0].mxu0
        %953 = vmatprep.mubr.bf16.mxu0 0
        %954 = vmatmul.mubr.bf16.gmra.mrb[0].mxu0 %v616
        %v955 = vpop.f32.mrb[0].mxu0
        %v956 = vadd.f32 %v292, %v955
        %v957 = vpop.f32.mrb[0].mxu0
        %v958 = vpop.f32.mrb[0].mxu0
        %v959 = vadd.f32 %v292, %v958
        %v960 = vpop.f32.mrb[0].mxu0
        %961 = vmatprep.mubr.bf16.mxu0 0
        %962 = vmatmul.mubr.bf16.gmra.mrb[0].mxu0 %v619
        %v963 = vpop.f32.mrb[0].mxu0
        %v964 = vadd.f32 %v292, %v963
        %v965 = vpop.f32.mrb[0].mxu0
        %v966 = vpop.f32.mrb[0].mxu0
        %v967 = vadd.f32 %v292, %v966
        %v968 = vpop.f32.mrb[0].mxu0
        %969 = vmatprep.mubr.bf16.mxu0 0
        %970 = vmatmul.mubr.bf16.gmra.mrb[0].mxu0 %v622
        %v971 = vpop.f32.mrb[0].mxu0
        %v972 = vadd.f32 %v292, %v971
        %v973 = vpop.f32.mrb[0].mxu0
        %v974 = vpop.f32.mrb[0].mxu0
        %v975 = vadd.f32 %v292, %v974
        %v976 = vpop.f32.mrb[0].mxu0
        %977 = vmatprep.mubr.bf16.mxu0 0
        %978 = vmatmul.mubr.bf16.gmra.mrb[0].mxu0 %v625
        %v979 = vpop.f32.mrb[0].mxu0
        %v980 = vadd.f32 %v292, %v979
        %v981 = vpop.f32.mrb[0].mxu0
        %v982 = vpop.f32.mrb[0].mxu0
        %v983 = vadd.f32 %v292, %v982
        %v984 = vpop.f32.mrb[0].mxu0
        %985 = vmatprep.mubr.bf16.mxu0 0
        %986 = vmatmul.mubr.bf16.gmra.mrb[0].mxu0 %v628
        %v987 = vpop.f32.mrb[0].mxu0
        %v988 = vadd.f32 %v292, %v987
        %v989 = vpop.f32.mrb[0].mxu0
        %v990 = vpop.f32.mrb[0].mxu0
        %v991 = vadd.f32 %v292, %v990
        %v992 = vpop.f32.mrb[0].mxu0
        %993 = vmatprep.mubr.bf16.mxu0 0
        %994 = vmatmul.mubr.bf16.gmra.mrb[0].mxu0 %v631
        %v995 = vpop.f32.mrb[0].mxu0
        %v996 = vadd.f32 %v292, %v995
        %v997 = vpop.f32.mrb[0].mxu0
        %v998 = vpop.f32.mrb[0].mxu0
        %v999 = vadd.f32 %v292, %v998
        %v1000 = vpop.f32.mrb[0].mxu0
        %1001 = vmatprep.mubr.bf16.mxu0 0
        %1002 = vmatmul.mubr.bf16.gmra.mrb[0].mxu0 %v634
        %v1003 = vpop.f32.mrb[0].mxu0
        %v1004 = vadd.f32 %v292, %v1003
        %v1005 = vpop.f32.mrb[0].mxu0
        %v1006 = vpop.f32.mrb[0].mxu0
        %v1007 = vadd.f32 %v292, %v1006
        %v1008 = vpop.f32.mrb[0].mxu0
        %1009 = vmatprep.mubr.bf16.mxu0 0
        %1010 = vmatmul.mubr.bf16.gmra.mrb[0].mxu0 %v637
        %v1011 = vpop.f32.mrb[0].mxu0
        %v1012 = vadd.f32 %v292, %v1011
        %v1013 = vpop.f32.mrb[0].mxu0
        %v1014 = vpop.f32.mrb[0].mxu0
        %v1015 = vadd.f32 %v292, %v1014
        %v1016 = vpop.f32.mrb[0].mxu0
        %1017 = vmatprep.mubr.bf16.mxu0 0
        %1018 = vmatmul.mubr.bf16.gmra.mrb[0].mxu0 %v640
        %v1019 = vpop.f32.mrb[0].mxu0
        %v1020 = vadd.f32 %v292, %v1019
        %v1021 = vpop.f32.mrb[0].mxu0
        %v1022 = vpop.f32.mrb[0].mxu0
        %v1023 = vpop.f32.mrb[0].mxu0
        %1024 = vdwg.mxu0
        %v1025 = vmax.f32 %v684, 0.0
        %v1026 = vmax.f32 %v687, 0.0
        %v1027 = vmax.f32 %v692, 0.0
        %v1028 = vmax.f32 %v695, 0.0
        %v1029 = vmax.f32 %v700, 0.0
        %v1030 = vmax.f32 %v703, 0.0
        %v1031 = vmax.f32 %v708, 0.0
        %v1032 = vmax.f32 %v711, 0.0
        %v1033 = vmax.f32 %v716, 0.0
        %v1034 = vmax.f32 %v719, 0.0
        %v1035 = vmax.f32 %v724, 0.0
        %v1036 = vmax.f32 %v727, 0.0
        %v1037 = vmax.f32 %v732, 0.0
        %v1038 = vmax.f32 %v735, 0.0
        %v1039 = vmax.f32 %v740, 0.0
        %v1040 = vmax.f32 %v743, 0.0
        %v1041 = vmax.f32 %v748, 0.0
        %v1042 = vmax.f32 %v751, 0.0
        %v1043 = vmax.f32 %v756, 0.0
        %v1044 = vmax.f32 %v759, 0.0
        %v1045 = vmax.f32 %v764, 0.0
        %v1046 = vmax.f32 %v767, 0.0
        %v1047 = vmax.f32 %v772, 0.0
        %v1048 = vmax.f32 %v775, 0.0
        %v1049 = vmax.f32 %v780, 0.0
        %v1050 = vmax.f32 %v783, 0.0
        %v1051 = vmax.f32 %v788, 0.0
        %v1052 = vmax.f32 %v791, 0.0
        %v1053 = vmax.f32 %v796, 0.0
        %v1054 = vmax.f32 %v799, 0.0
        %v1055 = vmax.f32 %v804, 0.0
        %v1056 = vmax.f32 %v807, 0.0
        %v1057 = vmax.f32 %v812, 0.0
        %v1058 = vmax.f32 %v815, 0.0
        %v1059 = vmax.f32 %v820, 0.0
        %v1060 = vmax.f32 %v823, 0.0
        %v1061 = vmax.f32 %v828, 0.0
        %v1062 = vmax.f32 %v831, 0.0
        %v1063 = vmax.f32 %v836, 0.0
        %v1064 = vmax.f32 %v839, 0.0
        %v1065 = vmax.f32 %v844, 0.0
        %v1066 = vmax.f32 %v847, 0.0
        %v1067 = vmax.f32 %v852, 0.0
        %v1068 = vmax.f32 %v855, 0.0
        %v1069 = vmax.f32 %v860, 0.0
        %v1070 = vmax.f32 %v863, 0.0
        %v1071 = vmax.f32 %v868, 0.0
        %v1072 = vmax.f32 %v871, 0.0
        %v1073 = vmax.f32 %v876, 0.0
        %v1074 = vmax.f32 %v879, 0.0
        %v1075 = vmax.f32 %v884, 0.0
        %v1076 = vmax.f32 %v887, 0.0
        %v1077 = vmax.f32 %v892, 0.0
        %v1078 = vmax.f32 %v895, 0.0
        %v1079 = vmax.f32 %v900, 0.0
        %v1080 = vmax.f32 %v903, 0.0
        %v1081 = vmax.f32 %v908, 0.0
        %v1082 = vmax.f32 %v911, 0.0
        %v1083 = vmax.f32 %v916, 0.0
        %v1084 = vmax.f32 %v919, 0.0
        %v1085 = vmax.f32 %v924, 0.0
        %v1086 = vmax.f32 %v927, 0.0
        %v1087 = vmax.f32 %v932, 0.0
        %v1088 = vmax.f32 %v935, 0.0
        %v1089 = vmax.f32 %v940, 0.0
        %v1090 = vmax.f32 %v943, 0.0
        %v1091 = vmax.f32 %v948, 0.0
        %v1092 = vmax.f32 %v951, 0.0
        %v1093 = vmax.f32 %v956, 0.0
        %v1094 = vmax.f32 %v959, 0.0
        %v1095 = vmax.f32 %v964, 0.0
        %v1096 = vmax.f32 %v967, 0.0
        %v1097 = vmax.f32 %v972, 0.0
        %v1098 = vmax.f32 %v975, 0.0
        %v1099 = vmax.f32 %v980, 0.0
        %v1100 = vmax.f32 %v983, 0.0
        %v1101 = vmax.f32 %v988, 0.0
        %v1102 = vmax.f32 %v991, 0.0
        %v1103 = vmax.f32 %v996, 0.0
        %v1104 = vmax.f32 %v999, 0.0
        %v1105 = vmax.f32 %v1004, 0.0
        %v1106 = vmax.f32 %v1007, 0.0
        %v1107 = vmax.f32 %v1012, 0.0
        %v1108 = vmax.f32 %v1015, 0.0
        %v1109 = vmax.f32 %v1020, 0.0
        %v1110 = vpack.c.bf16 %v1026, %v1025
        %v1111 = vpack.c.bf16 %v1028, %v1027
        %v1112 = vpack.c.bf16 %v1030, %v1029
        %v1113 = vpack.c.bf16 %v1032, %v1031
        %v1114 = vpack.c.bf16 %v1034, %v1033
        %v1115 = vpack.c.bf16 %v1036, %v1035
        %v1116 = vpack.c.bf16 %v1038, %v1037
        %v1117 = vpack.c.bf16 %v1040, %v1039
        %v1118 = vpack.c.bf16 %v1042, %v1041
        %v1119 = vpack.c.bf16 %v1044, %v1043
        %v1120 = vpack.c.bf16 %v1046, %v1045
        %v1121 = vpack.c.bf16 %v1048, %v1047
        %v1122 = vpack.c.bf16 %v1050, %v1049
        %v1123 = vpack.c.bf16 %v1052, %v1051
        %v1124 = vpack.c.bf16 %v1054, %v1053
        %v1125 = vpack.c.bf16 %v1056, %v1055
        %v1126 = vpack.c.bf16 %v1058, %v1057
        %v1127 = vpack.c.bf16 %v1060, %v1059
        %v1128 = vpack.c.bf16 %v1062, %v1061
        %v1129 = vpack.c.bf16 %v1064, %v1063
        %v1130 = vpack.c.bf16 %v1066, %v1065
        %v1131 = vpack.c.bf16 %v1068, %v1067
        %v1132 = vpack.c.bf16 %v1070, %v1069
        %v1133 = vpack.c.bf16 %v1072, %v1071
        %v1134 = vpack.c.bf16 %v1074, %v1073
        %v1135 = vpack.c.bf16 %v1076, %v1075
        %v1136 = vpack.c.bf16 %v1078, %v1077
        %v1137 = vpack.c.bf16 %v1080, %v1079
        %v1138 = vpack.c.bf16 %v1082, %v1081
        %v1139 = vpack.c.bf16 %v1084, %v1083
        %v1140 = vpack.c.bf16 %v1086, %v1085
        %v1141 = vpack.c.bf16 %v1088, %v1087
        %v1142 = vpack.c.bf16 %v1090, %v1089
        %v1143 = vpack.c.bf16 %v1092, %v1091
        %v1144 = vpack.c.bf16 %v1094, %v1093
        %v1145 = vpack.c.bf16 %v1096, %v1095
        %v1146 = vpack.c.bf16 %v1098, %v1097
        %v1147 = vpack.c.bf16 %v1100, %v1099
        %v1148 = vpack.c.bf16 %v1102, %v1101
        %v1149 = vpack.c.bf16 %v1104, %v1103
        %v1150 = vpack.c.bf16 %v1106, %v1105
        %v1151 = vpack.c.bf16 %v1108, %v1107
        %v1152 = vpack.c.bf16 %v1109, %v1109
        %v1196 = vunpack.c.l.b16 %v1110
        %v1197 = vunpack.c.h.b16 %v1110
        %v1198 = vunpack.c.l.b16 %v1111
        %v1199 = vunpack.c.h.b16 %v1111
        %v1200 = vunpack.c.l.b16 %v1112
        %v1201 = vunpack.c.h.b16 %v1112
        %v1202 = vunpack.c.l.b16 %v1113
        %v1203 = vunpack.c.h.b16 %v1113
        %v1204 = vunpack.c.l.b16 %v1114
        %v1205 = vunpack.c.h.b16 %v1114
        %v1206 = vunpack.c.l.b16 %v1115
        %v1207 = vunpack.c.h.b16 %v1115
        %v1208 = vunpack.c.l.b16 %v1116
        %v1209 = vunpack.c.h.b16 %v1116
        %v1210 = vunpack.c.l.b16 %v1117
        %v1211 = vunpack.c.h.b16 %v1117
        %v1212 = vunpack.c.l.b16 %v1118
        %v1213 = vunpack.c.h.b16 %v1118
        %v1214 = vunpack.c.l.b16 %v1119
        %v1215 = vunpack.c.h.b16 %v1119
        %v1216 = vunpack.c.l.b16 %v1120
        %v1217 = vunpack.c.h.b16 %v1120
        %v1218 = vunpack.c.l.b16 %v1121
        %v1219 = vunpack.c.h.b16 %v1121
        %v1220 = vunpack.c.l.b16 %v1122
        %v1221 = vunpack.c.h.b16 %v1122
        %v1222 = vunpack.c.l.b16 %v1123
        %v1223 = vunpack.c.h.b16 %v1123
        %v1224 = vunpack.c.l.b16 %v1124
        %v1225 = vunpack.c.h.b16 %v1124
        %v1226 = vunpack.c.l.b16 %v1125
        %v1227 = vunpack.c.h.b16 %v1125
        %v1228 = vunpack.c.l.b16 %v1126
        %v1229 = vunpack.c.h.b16 %v1126
        %v1230 = vunpack.c.l.b16 %v1127
        %v1231 = vunpack.c.h.b16 %v1127
        %v1232 = vunpack.c.l.b16 %v1128
        %v1233 = vunpack.c.h.b16 %v1128
        %v1234 = vunpack.c.l.b16 %v1129
        %v1235 = vunpack.c.h.b16 %v1129
        %v1236 = vunpack.c.l.b16 %v1130
        %v1237 = vunpack.c.h.b16 %v1130
        %v1238 = vunpack.c.l.b16 %v1131
        %v1239 = vunpack.c.h.b16 %v1131
        %v1240 = vunpack.c.l.b16 %v1132
        %v1241 = vunpack.c.h.b16 %v1132
        %v1242 = vunpack.c.l.b16 %v1133
        %v1243 = vunpack.c.h.b16 %v1133
        %v1244 = vunpack.c.l.b16 %v1134
        %v1245 = vunpack.c.h.b16 %v1134
        %v1246 = vunpack.c.l.b16 %v1135
        %v1247 = vunpack.c.h.b16 %v1135
        %v1248 = vunpack.c.l.b16 %v1136
        %v1249 = vunpack.c.h.b16 %v1136
        %v1250 = vunpack.c.l.b16 %v1137
        %v1251 = vunpack.c.h.b16 %v1137
        %v1252 = vunpack.c.l.b16 %v1138
        %v1253 = vunpack.c.h.b16 %v1138
        %v1254 = vunpack.c.l.b16 %v1139
        %v1255 = vunpack.c.h.b16 %v1139
        %v1256 = vunpack.c.l.b16 %v1140
        %v1257 = vunpack.c.h.b16 %v1140
        %v1258 = vunpack.c.l.b16 %v1141
        %v1259 = vunpack.c.h.b16 %v1141
        %v1260 = vunpack.c.l.b16 %v1142
        %v1261 = vunpack.c.h.b16 %v1142
        %v1262 = vunpack.c.l.b16 %v1143
        %v1263 = vunpack.c.h.b16 %v1143
        %v1264 = vunpack.c.l.b16 %v1144
        %v1265 = vunpack.c.h.b16 %v1144
        %v1266 = vunpack.c.l.b16 %v1145
        %v1267 = vunpack.c.h.b16 %v1145
        %v1268 = vunpack.c.l.b16 %v1146
        %v1269 = vunpack.c.h.b16 %v1146
        %v1270 = vunpack.c.l.b16 %v1147
        %v1271 = vunpack.c.h.b16 %v1147
        %v1272 = vunpack.c.l.b16 %v1148
        %v1273 = vunpack.c.h.b16 %v1148
        %v1274 = vunpack.c.l.b16 %v1149
        %v1275 = vunpack.c.h.b16 %v1149
        %v1276 = vunpack.c.l.b16 %v1150
        %v1277 = vunpack.c.h.b16 %v1150
        %v1278 = vunpack.c.l.b16 %v1151
        %v1279 = vunpack.c.h.b16 %v1151
        %v1280 = vunpack.c.l.b16 %v1152
        %v1281 = vpack.c.b16 %v1196, %v1196
        %v1282 = vpack.c.b16 %v1197, %v1197
        %v1283 = vpack.c.b16 %v1198, %v1198
        %v1284 = vpack.c.b16 %v1199, %v1199
        %v1285 = vpack.c.b16 %v1200, %v1200
        %v1286 = vpack.c.b16 %v1201, %v1201
        %v1287 = vpack.c.b16 %v1202, %v1202
        %v1288 = vpack.c.b16 %v1203, %v1203
        %v1289 = vpack.c.b16 %v1204, %v1204
        %v1290 = vpack.c.b16 %v1205, %v1205
        %v1291 = vpack.c.b16 %v1206, %v1206
        %v1292 = vpack.c.b16 %v1207, %v1207
        %v1293 = vpack.c.b16 %v1208, %v1208
        %v1294 = vpack.c.b16 %v1209, %v1209
        %v1295 = vpack.c.b16 %v1210, %v1210
        %v1296 = vpack.c.b16 %v1211, %v1211
        %v1297 = vpack.c.b16 %v1212, %v1212
        %v1298 = vpack.c.b16 %v1213, %v1213
        %v1299 = vpack.c.b16 %v1214, %v1214
        %v1300 = vpack.c.b16 %v1215, %v1215
        %v1301 = vpack.c.b16 %v1216, %v1216
        %v1302 = vpack.c.b16 %v1217, %v1217
        %v1303 = vpack.c.b16 %v1218, %v1218
        %v1304 = vpack.c.b16 %v1219, %v1219
        %v1305 = vpack.c.b16 %v1220, %v1220
        %v1306 = vpack.c.b16 %v1221, %v1221
        %v1307 = vpack.c.b16 %v1222, %v1222
        %v1308 = vpack.c.b16 %v1223, %v1223
        %v1309 = vpack.c.b16 %v1224, %v1224
        %v1310 = vpack.c.b16 %v1225, %v1225
        %v1311 = vpack.c.b16 %v1226, %v1226
        %v1312 = vpack.c.b16 %v1227, %v1227
        %v1313 = vpack.c.b16 %v1228, %v1228
        %v1314 = vpack.c.b16 %v1229, %v1229
        %v1315 = vpack.c.b16 %v1230, %v1230
        %v1316 = vpack.c.b16 %v1231, %v1231
        %v1317 = vpack.c.b16 %v1232, %v1232
        %v1318 = vpack.c.b16 %v1233, %v1233
        %v1319 = vpack.c.b16 %v1234, %v1234
        %v1320 = vpack.c.b16 %v1235, %v1235
        %v1321 = vpack.c.b16 %v1236, %v1236
        %v1322 = vpack.c.b16 %v1237, %v1237
        %v1323 = vpack.c.b16 %v1238, %v1238
        %v1324 = vpack.c.b16 %v1239, %v1239
        %v1325 = vpack.c.b16 %v1240, %v1240
        %v1326 = vpack.c.b16 %v1241, %v1241
        %v1327 = vpack.c.b16 %v1242, %v1242
        %v1328 = vpack.c.b16 %v1243, %v1243
        %v1329 = vpack.c.b16 %v1244, %v1244
        %v1330 = vpack.c.b16 %v1245, %v1245
        %v1331 = vpack.c.b16 %v1246, %v1246
        %v1332 = vpack.c.b16 %v1247, %v1247
        %v1333 = vpack.c.b16 %v1248, %v1248
        %v1334 = vpack.c.b16 %v1249, %v1249
        %v1335 = vpack.c.b16 %v1250, %v1250
        %v1336 = vpack.c.b16 %v1251, %v1251
        %v1337 = vpack.c.b16 %v1252, %v1252
        %v1338 = vpack.c.b16 %v1253, %v1253
        %v1339 = vpack.c.b16 %v1254, %v1254
        %v1340 = vpack.c.b16 %v1255, %v1255
        %v1341 = vpack.c.b16 %v1256, %v1256
        %v1342 = vpack.c.b16 %v1257, %v1257
        %v1343 = vpack.c.b16 %v1258, %v1258
        %v1344 = vpack.c.b16 %v1259, %v1259
        %v1345 = vpack.c.b16 %v1260, %v1260
        %v1346 = vpack.c.b16 %v1261, %v1261
        %v1347 = vpack.c.b16 %v1262, %v1262
        %v1348 = vpack.c.b16 %v1263, %v1263
        %v1349 = vpack.c.b16 %v1264, %v1264
        %v1350 = vpack.c.b16 %v1265, %v1265
        %v1351 = vpack.c.b16 %v1266, %v1266
        %v1352 = vpack.c.b16 %v1267, %v1267
        %v1353 = vpack.c.b16 %v1268, %v1268
        %v1354 = vpack.c.b16 %v1269, %v1269
        %v1355 = vpack.c.b16 %v1270, %v1270
        %v1356 = vpack.c.b16 %v1271, %v1271
        %v1357 = vpack.c.b16 %v1272, %v1272
        %v1358 = vpack.c.b16 %v1273, %v1273
        %v1359 = vpack.c.b16 %v1274, %v1274
        %v1360 = vpack.c.b16 %v1275, %v1275
        %v1361 = vpack.c.b16 %v1276, %v1276
        %v1362 = vpack.c.b16 %v1277, %v1277
        %v1363 = vpack.c.b16 %v1278, %v1278
        %v1364 = vpack.c.b16 %v1279, %v1279
        %v1365 = vpack.c.b16 %v1280, %v1280
        %vm1451 = vcmask 257024
        %1452 = vst.msk [vmem:[%s198] sm:$0xf] %vm1451, %v1281
        %1453 = vst.msk [vmem:[%s198 + $0x4] sm:$0xf] %vm1451, %v1282
        %1454 = vst.msk [vmem:[%s198 + $0x8] sm:$0xf] %vm1451, %v1283
        %1455 = vst.msk [vmem:[%s198 + $0xc] sm:$0xf] %vm1451, %v1284
        %1456 = vst.msk [vmem:[%s198 + $0x10] sm:$0xf] %vm1451, %v1285
        %1457 = vst.msk [vmem:[%s198 + $0x14] sm:$0xf] %vm1451, %v1286
        %1458 = vst.msk [vmem:[%s198 + $0x18] sm:$0xf] %vm1451, %v1287
        %1459 = vst.msk [vmem:[%s198 + $0x1c] sm:$0xf] %vm1451, %v1288
        %1460 = vst.msk [vmem:[%s198 + $0x20] sm:$0xf] %vm1451, %v1289
        %1461 = vst.msk [vmem:[%s198 + $0x24] sm:$0xf] %vm1451, %v1290
        %1462 = vst.msk [vmem:[%s198 + $0x28] sm:$0xf] %vm1451, %v1291
        %1463 = vst.msk [vmem:[%s198 + $0x2c] sm:$0xf] %vm1451, %v1292
        %1464 = vst.msk [vmem:[%s198 + $0x30] sm:$0xf] %vm1451, %v1293
        %1465 = vst.msk [vmem:[%s198 + $0x34] sm:$0xf] %vm1451, %v1294
        %1466 = vst.msk [vmem:[%s198 + $0x38] sm:$0xf] %vm1451, %v1295
        %1467 = vst.msk [vmem:[%s198 + $0x3c] sm:$0xf] %vm1451, %v1296
        %1468 = vst.msk [vmem:[%s198 + $0x40] sm:$0xf] %vm1451, %v1297
        %1469 = vst.msk [vmem:[%s198 + $0x44] sm:$0xf] %vm1451, %v1298
        %1470 = vst.msk [vmem:[%s198 + $0x48] sm:$0xf] %vm1451, %v1299
        %1471 = vst.msk [vmem:[%s198 + $0x4c] sm:$0xf] %vm1451, %v1300
        %1472 = vst.msk [vmem:[%s198 + $0x50] sm:$0xf] %vm1451, %v1301
        %1473 = vst.msk [vmem:[%s198 + $0x54] sm:$0xf] %vm1451, %v1302
        %1474 = vst.msk [vmem:[%s198 + $0x58] sm:$0xf] %vm1451, %v1303
        %1475 = vst.msk [vmem:[%s198 + $0x5c] sm:$0xf] %vm1451, %v1304
        %1476 = vst.msk [vmem:[%s198 + $0x60] sm:$0xf] %vm1451, %v1305
        %1477 = vst.msk [vmem:[%s198 + $0x64] sm:$0xf] %vm1451, %v1306
        %1478 = vst.msk [vmem:[%s198 + $0x68] sm:$0xf] %vm1451, %v1307
        %1479 = vst.msk [vmem:[%s198 + $0x6c] sm:$0xf] %vm1451, %v1308
        %1480 = vst.msk [vmem:[%s198 + $0x70] sm:$0xf] %vm1451, %v1309
        %1481 = vst.msk [vmem:[%s198 + $0x74] sm:$0xf] %vm1451, %v1310
        %1482 = vst.msk [vmem:[%s198 + $0x78] sm:$0xf] %vm1451, %v1311
        %1483 = vst.msk [vmem:[%s198 + $0x7c] sm:$0xf] %vm1451, %v1312
        %1484 = vst.msk [vmem:[%s198 + $0x80] sm:$0xf] %vm1451, %v1313
        %1485 = vst.msk [vmem:[%s198 + $0x84] sm:$0xf] %vm1451, %v1314
        %1486 = vst.msk [vmem:[%s198 + $0x88] sm:$0xf] %vm1451, %v1315
        %1487 = vst.msk [vmem:[%s198 + $0x8c] sm:$0xf] %vm1451, %v1316
        %1488 = vst.msk [vmem:[%s198 + $0x90] sm:$0xf] %vm1451, %v1317
        %1489 = vst.msk [vmem:[%s198 + $0x94] sm:$0xf] %vm1451, %v1318
        %1490 = vst.msk [vmem:[%s198 + $0x98] sm:$0xf] %vm1451, %v1319
        %1491 = vst.msk [vmem:[%s198 + $0x9c] sm:$0xf] %vm1451, %v1320
        %1492 = vst.msk [vmem:[%s198 + $0xa0] sm:$0xf] %vm1451, %v1321
        %1493 = vst.msk [vmem:[%s198 + $0xa4] sm:$0xf] %vm1451, %v1322
        %1494 = vst.msk [vmem:[%s198 + $0xa8] sm:$0xf] %vm1451, %v1323
        %1495 = vst.msk [vmem:[%s198 + $0xac] sm:$0xf] %vm1451, %v1324
        %1496 = vst.msk [vmem:[%s198 + $0xb0] sm:$0xf] %vm1451, %v1325
        %1497 = vst.msk [vmem:[%s198 + $0xb4] sm:$0xf] %vm1451, %v1326
        %1498 = vst.msk [vmem:[%s198 + $0xb8] sm:$0xf] %vm1451, %v1327
        %1499 = vst.msk [vmem:[%s198 + $0xbc] sm:$0xf] %vm1451, %v1328
        %1500 = vst.msk [vmem:[%s198 + $0xc0] sm:$0xf] %vm1451, %v1329
        %1501 = vst.msk [vmem:[%s198 + $0xc4] sm:$0xf] %vm1451, %v1330
        %1502 = vst.msk [vmem:[%s198 + $0xc8] sm:$0xf] %vm1451, %v1331
        %1503 = vst.msk [vmem:[%s198 + $0xcc] sm:$0xf] %vm1451, %v1332
        %1504 = vst.msk [vmem:[%s198 + $0xd0] sm:$0xf] %vm1451, %v1333
        %1505 = vst.msk [vmem:[%s198 + $0xd4] sm:$0xf] %vm1451, %v1334
        %1506 = vst.msk [vmem:[%s198 + $0xd8] sm:$0xf] %vm1451, %v1335
        %1507 = vst.msk [vmem:[%s198 + $0xdc] sm:$0xf] %vm1451, %v1336
        %1508 = vst.msk [vmem:[%s198 + $0xe0] sm:$0xf] %vm1451, %v1337
        %1509 = vst.msk [vmem:[%s198 + $0xe4] sm:$0xf] %vm1451, %v1338
        %1510 = vst.msk [vmem:[%s198 + $0xe8] sm:$0xf] %vm1451, %v1339
        %1511 = vst.msk [vmem:[%s198 + $0xec] sm:$0xf] %vm1451, %v1340
        %1512 = vst.msk [vmem:[%s198 + $0xf0] sm:$0xf] %vm1451, %v1341
        %1513 = vst.msk [vmem:[%s198 + $0xf4] sm:$0xf] %vm1451, %v1342
        %1514 = vst.msk [vmem:[%s198 + $0xf8] sm:$0xf] %vm1451, %v1343
        %1515 = vst.msk [vmem:[%s198 + $0xfc] sm:$0xf] %vm1451, %v1344
        %1516 = vst.msk [vmem:[%s198 + $0x100] sm:$0xf] %vm1451, %v1345
        %1517 = vst.msk [vmem:[%s198 + $0x104] sm:$0xf] %vm1451, %v1346
        %1518 = vst.msk [vmem:[%s198 + $0x108] sm:$0xf] %vm1451, %v1347
        %1519 = vst.msk [vmem:[%s198 + $0x10c] sm:$0xf] %vm1451, %v1348
        %1520 = vst.msk [vmem:[%s198 + $0x110] sm:$0xf] %vm1451, %v1349
        %1521 = vst.msk [vmem:[%s198 + $0x114] sm:$0xf] %vm1451, %v1350
        %1522 = vst.msk [vmem:[%s198 + $0x118] sm:$0xf] %vm1451, %v1351
        %1523 = vst.msk [vmem:[%s198 + $0x11c] sm:$0xf] %vm1451, %v1352
        %1524 = vst.msk [vmem:[%s198 + $0x120] sm:$0xf] %vm1451, %v1353
        %1525 = vst.msk [vmem:[%s198 + $0x124] sm:$0xf] %vm1451, %v1354
        %1526 = vst.msk [vmem:[%s198 + $0x128] sm:$0xf] %vm1451, %v1355
        %1527 = vst.msk [vmem:[%s198 + $0x12c] sm:$0xf] %vm1451, %v1356
        %1528 = vst.msk [vmem:[%s198 + $0x130] sm:$0xf] %vm1451, %v1357
        %1529 = vst.msk [vmem:[%s198 + $0x134] sm:$0xf] %vm1451, %v1358
        %1530 = vst.msk [vmem:[%s198 + $0x138] sm:$0xf] %vm1451, %v1359
        %1531 = vst.msk [vmem:[%s198 + $0x13c] sm:$0xf] %vm1451, %v1360
        %1532 = vst.msk [vmem:[%s198 + $0x140] sm:$0xf] %vm1451, %v1361
        %1533 = vst.msk [vmem:[%s198 + $0x144] sm:$0xf] %vm1451, %v1362
        %1534 = vst.msk [vmem:[%s198 + $0x148] sm:$0xf] %vm1451, %v1363
        %1535 = vst.msk [vmem:[%s198 + $0x14c] sm:$0xf] %vm1451, %v1364
        %vm1536 = vcmask 254976
        %1537 = vst.msk [vmem:[%s198 + $0x150] sm:$0x3] %vm1536, %v1365
        %p1538 = scmp.lt.s32.totalorder %s16, 1
        %s1539 = scalar_select %p1538, %s16, 1
        %s1540 = smul.addr %s1539, 85
        %s1541 = smul.addr %s1540, 4
        %s1542 = scalar_lea.vmem %s3, %s1541
        // Predicated region
        $region41: #{digit_cnn_forward.4} parent=31 // pred_check
          %p1543 = pneg %p102
        $region42: #{digit_cnn_forward.4} parent=31 // pred_check_branch
          %1545 = sbr.rel (%p1543) target = $region44
        $region43: #{digit_cnn_forward.4} parent=31 // pred_region
          _
        $region44: #{digit_cnn_forward.4} parent=31 // pred_fallthru
          _
      $region32: #{digit_cnn_forward.4} parent=5 // pred_fallthru
        _
      %p1546 = scmp.le.s32.totalorder 2, %s11
      // Predicated region
      $region45: #{digit_cnn_forward.4} parent=5 // pred_check
        %p1547 = pneg %p1546
      $region46: #{digit_cnn_forward.4} parent=5 // pred_check_branch
        %1549 = sbr.rel (%p1547) target = $region48
      $region47: #{digit_cnn_forward.4} parent=5 // pred_region
        %s1550 = ssub.s32 %s11, 2
        // Predicated region
        $region49: #{digit_cnn_forward.4} parent=47 // pred_check
          %p1551 = pneg %p108
        $region50: #{digit_cnn_forward.4} parent=47 // pred_check_branch
          %1553 = sbr.rel (%p1551) target = $region52
        $region51: #{digit_cnn_forward.4} parent=47 // pred_region
          %p1554 = scmp.lt.s32.totalorder %s17, 1
          %s1555 = scalar_select %p1554, %s17, 1
          %s1556 = smul.addr %s1555, 85
          %s1557 = smul.addr %s1556, 4
          %s1558 = scalar_lea.vmem %s3, %s1557
        $region52: #{digit_cnn_forward.4} parent=47 // pred_fallthru
          _
      $region48: #{digit_cnn_forward.4} parent=5 // pred_fallthru
        _
    $region6: #{digit_cnn_forward.4} parent=1 // loop_footer
      %s15 = sadd.s32 1, %s11
    $region7: #{digit_cnn_forward.4} parent=1 // loop_footer_branch
      %10 = sbr.rel target = $region3
    $region8: #{digit_cnn_forward.4} parent=1 // loop_exit
      _
    %1559 = vsyncpa [#allocation3], 1
    %s1560 = scalar_lea.sflag [#allocation3], 1
    %1561 = vsyncpa %s1560, 1
    %1562 = vsyncpa [#allocation5], 1

// kernel: digit_cnn_forward.6
$region0: #{digit_cnn_forward.6}
  #allocation0 [shape = 'u32[]', space=smem, size = 0x4, offset = 0x4, fixed_abs, tag = 'smem constant byte address 0x4 - core index']
  #allocation1 [shape = 'u32[144,128]{1,0:T(1,128)}', space=vmem, size = 0x12000, scoped, tag = 'internal scratch']
  %s0 = inlined_call_operand.vmem [shape: bf16[2,12,2,12,128], index: 0, kind: input, shape index: {}]
  %s1 = inlined_call_operand.vmem [shape: bf16[2,12,12,64], index: 1, kind: output, shape index: {}]
  %s2 = sld [smem:[#allocation0]]
  $region37: #{digit_cnn_forward.6} parent=0
    _
  %s4 = ssub.s32 1, %s2
  %s5 = scalar_select 0, %s4, %s2
  loop: start=0, step=1, limit=4
  $region2: #{digit_cnn_forward.6} parent=0 // loop_pre_header
    _
  $region3: #{digit_cnn_forward.6} parent=0 // loop_header
    %s7 = sphi 0, %s11
    %p8 = scmp.ge.s32.totalorder %s7, 4
    %s17 = sphi 0, %s19
    %s20 = sphi 0, %s17
    %s21 = sphi 0, %s20
    %s37 = sphi 0, %s21
    %s43 = sphi 0, %s45
    %s46 = sphi 0, %s43
    %s47 = sphi 0, %s46
    %s63 = sphi 0, %s47
  $region4: #{digit_cnn_forward.6} parent=0 // loop_header_branch
    %10 = sbr.rel (%p8) target = $region8
  $region5: #{digit_cnn_forward.6} parent=0 // loop_body
    %s12 = ssub.s32 %s7, 1
    %s13 = ssub.s32 %s7, 2
    %s14 = sadd.s32 %s7, 1
    %s15 = ssub.s32 %s7, %s14
    %p16 = scmp.eq.s32.totalorder %s15, 0
    %s18 = sadd.s32 %s17, 1
    %s19 = scalar_select %p16, %s17, %s18
    %p22 = pneg %p16
    %p23 = scmp.eq.s32.totalorder %s7, 1
    %p24 = por %p22, %p23
    %p25 = scmp.ne.s32.totalorder %s17, %s20
    %p26 = scmp.eq.s32.totalorder %s7, 0
    %p27 = por %p25, %p26
    %p28 = scmp.ne.s32.totalorder %s17, %s20
    %p29 = scmp.eq.s32.totalorder %s12, 1
    %p30 = por %p28, %p29
    %p31 = scmp.ne.s32.totalorder %s20, %s21
    %p32 = scmp.eq.s32.totalorder %s12, 0
    %p33 = por %p31, %p32
    %p34 = scmp.ne.s32.totalorder %s20, %s21
    %p35 = scmp.eq.s32.totalorder %s13, 1
    %p36 = por %p34, %p35
    %p38 = scmp.ne.s32.totalorder %s21, %s37
    %p39 = scmp.eq.s32.totalorder %s13, 0
    %p40 = por %p38, %p39
    %s41 = ssub.s32 %s7, %s14
    %p42 = scmp.eq.s32.totalorder %s41, 0
    %s44 = sadd.s32 %s43, 1
    %s45 = scalar_select %p42, %s43, %s44
    %p48 = pneg %p42
    %p49 = scmp.eq.s32.totalorder %s7, 1
    %p50 = por %p48, %p49
    %p51 = scmp.ne.s32.totalorder %s43, %s46
    %p52 = scmp.eq.s32.totalorder %s7, 0
    %p53 = por %p51, %p52
    %p54 = scmp.ne.s32.totalorder %s43, %s46
    %p55 = scmp.eq.s32.totalorder %s12, 1
    %p56 = por %p54, %p55
    %p57 = scmp.ne.s32.totalorder %s46, %s47
    %p58 = scmp.eq.s32.totalorder %s12, 0
    %p59 = por %p57, %p58
    %p60 = scmp.ne.s32.totalorder %s46, %s47
    %p61 = scmp.eq.s32.totalorder %s13, 1
    %p62 = por %p60, %p61
    %p64 = scmp.ne.s32.totalorder %s47, %s63
    %p65 = scmp.eq.s32.totalorder %s13, 0
    %p66 = por %p64, %p65
    %p67 = scmp.le.s32.totalorder 1, %s7
    %p68 = scmp.lt.s32.totalorder %s7, 3
    %p69 = pnand %p67, %p68
    %p70 = pneg %p69
    // Predicated region
    $region9: #{digit_cnn_forward.6} parent=5 // pred_check
      _
    $region10: #{digit_cnn_forward.6} parent=5 // pred_check_branch
      %72 = sbr.rel (%p69) target = $region12
    $region11: #{digit_cnn_forward.6} parent=5 // pred_region
      %s73 = ssub.s32 %s7, 1
    $region12: #{digit_cnn_forward.6} parent=5 // pred_fallthru
      _
    %p74 = scmp.lt.s32.totalorder %s7, 2
    // Predicated region
    $region13: #{digit_cnn_forward.6} parent=5 // pred_check
      %p75 = pneg %p74
    $region14: #{digit_cnn_forward.6} parent=5 // pred_check_branch
      %77 = sbr.rel (%p75) target = $region16
    $region15: #{digit_cnn_forward.6} parent=5 // pred_region
      // Predicated region
      $region17: #{digit_cnn_forward.6} parent=15 // pred_check
        %p78 = pneg %p27
      $region18: #{digit_cnn_forward.6} parent=15 // pred_check_branch
        %80 = sbr.rel (%p78) target = $region20
      $region19: #{digit_cnn_forward.6} parent=15 // pred_region
        %p81 = scmp.lt.s32.totalorder %s7, 1
        %s82 = scalar_select %p81, %s7, 1
        %s83 = smul.addr %s82, 48
        %s84 = smul.addr %s83, 4
        %s85 = scalar_lea.vmem %s0, %s84
      $region20: #{digit_cnn_forward.6} parent=15 // pred_fallthru
        _
    $region16: #{digit_cnn_forward.6} parent=5 // pred_fallthru
      _
    %p86 = scmp.le.s32.totalorder 1, %s7
    %p87 = scmp.lt.s32.totalorder %s7, 3
    %p88 = pnand %p86, %p87
    %p89 = pneg %p88
    // Predicated region
    $region21: #{digit_cnn_forward.6} parent=5 // pred_check
      _
    $region22: #{digit_cnn_forward.6} parent=5 // pred_check_branch
      %91 = sbr.rel (%p88) target = $region24
    $region23: #{digit_cnn_forward.6} parent=5 // pred_region
      %s92 = ssub.s32 %s7, 1
      %p93 = scmp.lt.s32.totalorder %s12, 1
      %s94 = scalar_select %p93, %s12, 1
      %s95 = smul.addr %s94, 48
      %s96 = smul.addr %s95, 4
      %s97 = scalar_lea.vmem %s0, %s96
      %p98 = pneg %p33
      %p99 = pneg %p30
      %p100 = pneg %p59
      %p101 = pneg %p56
      %p102 = scmp.lt.s32.totalorder %s12, 1
      %s103 = scalar_select %p102, %s12, 1
      %s104 = smul.addr %s103, 24
      %s105 = smul.addr %s104, 4
      %s106 = scalar_lea.vmem %s1, %s105
      %p107 = scmp.lt.s32.totalorder %s12, 1
      %s108 = scalar_select %p107, %s12, 1
      %s109 = smul.addr %s108, 48
      %s110 = smul.addr %s109, 4
      %s111 = scalar_lea.vmem %s0, %s110
      %p112 = scmp.lt.s32.totalorder %s12, 1
      %s113 = scalar_select %p112, %s12, 1
      %s114 = smul.addr %s113, 24
      %s115 = smul.addr %s114, 4
      %s116 = scalar_lea.vmem %s1, %s115
      %v117 = vld [vmem:[%s111] sm:$0xf]
      %v118 = vld [vmem:[%s111 + $0x4] sm:$0x3]
      %v119 = vld [vmem:[%s111 + $0x8] sm:$0xf]
      %v120 = vld [vmem:[%s111 + $0xc] sm:$0x3]
      %v121 = vld [vmem:[%s111 + $0x10] sm:$0xf]
      %v122 = vld [vmem:[%s111 + $0x14] sm:$0x3]
      %v123 = vld [vmem:[%s111 + $0x18] sm:$0xf]
      %v124 = vld [vmem:[%s111 + $0x1c] sm:$0x3]
      %v125 = vld [vmem:[%s111 + $0x20] sm:$0xf]
      %v126 = vld [vmem:[%s111 + $0x24] sm:$0x3]
      %v127 = vld [vmem:[%s111 + $0x28] sm:$0xf]
      %v128 = vld [vmem:[%s111 + $0x2c] sm:$0x3]
      %v129 = vld [vmem:[%s111 + $0x30] sm:$0xf]
      %v130 = vld [vmem:[%s111 + $0x34] sm:$0x3]
      %v131 = vld [vmem:[%s111 + $0x38] sm:$0xf]
      %v132 = vld [vmem:[%s111 + $0x3c] sm:$0x3]
      %v133 = vld [vmem:[%s111 + $0x40] sm:$0xf]
      %v134 = vld [vmem:[%s111 + $0x44] sm:$0x3]
      %v135 = vld [vmem:[%s111 + $0x48] sm:$0xf]
      %v136 = vld [vmem:[%s111 + $0x4c] sm:$0x3]
      %v137 = vld [vmem:[%s111 + $0x50] sm:$0xf]
      %v138 = vld [vmem:[%s111 + $0x54] sm:$0x3]
      %v139 = vld [vmem:[%s111 + $0x58] sm:$0xf]
      %v140 = vld [vmem:[%s111 + $0x5c] sm:$0x3]
      %v141 = vld [vmem:[%s111 + $0x60] sm:$0xf]
      %v142 = vld [vmem:[%s111 + $0x64] sm:$0x3]
      %v143 = vld [vmem:[%s111 + $0x68] sm:$0xf]
      %v144 = vld [vmem:[%s111 + $0x6c] sm:$0x3]
      %v145 = vld [vmem:[%s111 + $0x70] sm:$0xf]
      %v146 = vld [vmem:[%s111 + $0x74] sm:$0x3]
      %v147 = vld [vmem:[%s111 + $0x78] sm:$0xf]
      %v148 = vld [vmem:[%s111 + $0x7c] sm:$0x3]
      %v149 = vld [vmem:[%s111 + $0x80] sm:$0xf]
      %v150 = vld [vmem:[%s111 + $0x84] sm:$0x3]
      %v151 = vld [vmem:[%s111 + $0x88] sm:$0xf]
      %v152 = vld [vmem:[%s111 + $0x8c] sm:$0x3]
      %v153 = vld [vmem:[%s111 + $0x90] sm:$0xf]
      %v154 = vld [vmem:[%s111 + $0x94] sm:$0x3]
      %v155 = vld [vmem:[%s111 + $0x98] sm:$0xf]
      %v156 = vld [vmem:[%s111 + $0x9c] sm:$0x3]
      %v157 = vld [vmem:[%s111 + $0xa0] sm:$0xf]
      %v158 = vld [vmem:[%s111 + $0xa4] sm:$0x3]
      %v159 = vld [vmem:[%s111 + $0xa8] sm:$0xf]
      %v160 = vld [vmem:[%s111 + $0xac] sm:$0x3]
      %v161 = vld [vmem:[%s111 + $0xb0] sm:$0xf]
      %v162 = vld [vmem:[%s111 + $0xb4] sm:$0x3]
      %v163 = vld [vmem:[%s111 + $0xb8] sm:$0xf]
      %v164 = vld [vmem:[%s111 + $0xbc] sm:$0x3]
      %v165 = vmax.bf16 %v117, %v119
      %v166 = vmax.bf16 %v118, %v120
      %v167 = vmax.bf16 %v121, %v123
      %v168 = vmax.bf16 %v122, %v124
      %v169 = vmax.bf16 %v125, %v127
      %v170 = vmax.bf16 %v126, %v128
      %v171 = vmax.bf16 %v129, %v131
      %v172 = vmax.bf16 %v130, %v132
      %v173 = vmax.bf16 %v133, %v135
      %v174 = vmax.bf16 %v134, %v136
      %v175 = vmax.bf16 %v137, %v139
      %v176 = vmax.bf16 %v138, %v140
      %v177 = vmax.bf16 %v141, %v143
      %v178 = vmax.bf16 %v142, %v144
      %v179 = vmax.bf16 %v145, %v147
      %v180 = vmax.bf16 %v146, %v148
      %v181 = vmax.bf16 %v149, %v151
      %v182 = vmax.bf16 %v150, %v152
      %v183 = vmax.bf16 %v153, %v155
      %v184 = vmax.bf16 %v154, %v156
      %v185 = vmax.bf16 %v157, %v159
      %v186 = vmax.bf16 %v158, %v160
      %v187 = vmax.bf16 %v161, %v163
      %v188 = vmax.bf16 %v162, %v164
      %213 = vrot.lane.b32.xlu0 %v165, 64
      %v214 = vpop.permute.xlu0 %213
      %215 = vrot.lane.b32.xlu0 %v166, 64
      %v216 = vpop.permute.xlu0 %215
      %217 = vrot.lane.b32.xlu0 %v167, 64
      %v218 = vpop.permute.xlu0 %217
      %219 = vrot.lane.b32.xlu0 %v168, 64
      %v220 = vpop.permute.xlu0 %219
      %221 = vrot.lane.b32.xlu0 %v169, 64
      %v222 = vpop.permute.xlu0 %221
      %223 = vrot.lane.b32.xlu0 %v170, 64
      %v224 = vpop.permute.xlu0 %223
      %225 = vrot.lane.b32.xlu0 %v171, 64
      %v226 = vpop.permute.xlu0 %225
      %227 = vrot.lane.b32.xlu0 %v172, 64
      %v228 = vpop.permute.xlu0 %227
      %229 = vrot.lane.b32.xlu0 %v173, 64
      %v230 = vpop.permute.xlu0 %229
      %231 = vrot.lane.b32.xlu0 %v174, 64
      %v232 = vpop.permute.xlu0 %231
      %233 = vrot.lane.b32.xlu0 %v175, 64
      %v234 = vpop.permute.xlu0 %233
      %235 = vrot.lane.b32.xlu0 %v176, 64
      %v236 = vpop.permute.xlu0 %235
      %237 = vrot.lane.b32.xlu0 %v177, 64
      %v238 = vpop.permute.xlu0 %237
      %239 = vrot.lane.b32.xlu0 %v178, 64
      %v240 = vpop.permute.xlu0 %239
      %241 = vrot.lane.b32.xlu0 %v179, 64
      %v242 = vpop.permute.xlu0 %241
      %243 = vrot.lane.b32.xlu0 %v180, 64
      %v244 = vpop.permute.xlu0 %243
      %245 = vrot.lane.b32.xlu0 %v181, 64
      %v246 = vpop.permute.xlu0 %245
      %247 = vrot.lane.b32.xlu0 %v182, 64
      %v248 = vpop.permute.xlu0 %247
      %249 = vrot.lane.b32.xlu0 %v183, 64
      %v250 = vpop.permute.xlu0 %249
      %251 = vrot.lane.b32.xlu0 %v184, 64
      %v252 = vpop.permute.xlu0 %251
      %253 = vrot.lane.b32.xlu0 %v185, 64
      %v254 = vpop.permute.xlu0 %253
      %255 = vrot.lane.b32.xlu0 %v186, 64
      %v256 = vpop.permute.xlu0 %255
      %257 = vrot.lane.b32.xlu0 %v187, 64
      %v258 = vpop.permute.xlu0 %257
      %259 = vrot.lane.b32.xlu0 %v188, 64
      %v260 = vpop.permute.xlu0 %259
      %v285 = vmax.bf16 %v165, %v214
      %v286 = vmax.bf16 %v166, %v216
      %v287 = vmax.bf16 %v167, %v218
      %v288 = vmax.bf16 %v168, %v220
      %v289 = vmax.bf16 %v169, %v222
      %v290 = vmax.bf16 %v170, %v224
      %v291 = vmax.bf16 %v171, %v226
      %v292 = vmax.bf16 %v172, %v228
      %v293 = vmax.bf16 %v173, %v230
      %v294 = vmax.bf16 %v174, %v232
      %v295 = vmax.bf16 %v175, %v234
      %v296 = vmax.bf16 %v176, %v236
      %v297 = vmax.bf16 %v177, %v238
      %v298 = vmax.bf16 %v178, %v240
      %v299 = vmax.bf16 %v179, %v242
      %v300 = vmax.bf16 %v180, %v244
      %v301 = vmax.bf16 %v181, %v246
      %v302 = vmax.bf16 %v182, %v248
      %v303 = vmax.bf16 %v183, %v250
      %v304 = vmax.bf16 %v184, %v252
      %v305 = vmax.bf16 %v185, %v254
      %v306 = vmax.bf16 %v186, %v256
      %v307 = vmax.bf16 %v187, %v258
      %v308 = vmax.bf16 %v188, %v260
      %vm309 = vcmask 519168
      %310 = vst.msk [vmem:[%s116] sm:$0xf] %vm309, %v285
      %vm311 = vcmask 517120
      %312 = vst.msk [vmem:[%s116 + $0x4] sm:$0x3] %vm311, %v286
      %313 = vst.msk [vmem:[%s116 + $0x8] sm:$0xf] %vm309, %v287
      %314 = vst.msk [vmem:[%s116 + $0xc] sm:$0x3] %vm311, %v288
      %315 = vst.msk [vmem:[%s116 + $0x10] sm:$0xf] %vm309, %v289
      %316 = vst.msk [vmem:[%s116 + $0x14] sm:$0x3] %vm311, %v290
      %317 = vst.msk [vmem:[%s116 + $0x18] sm:$0xf] %vm309, %v291
      %318 = vst.msk [vmem:[%s116 + $0x1c] sm:$0x3] %vm311, %v292
      %319 = vst.msk [vmem:[%s116 + $0x20] sm:$0xf] %vm309, %v293
      %320 = vst.msk [vmem:[%s116 + $0x24] sm:$0x3] %vm311, %v294
      %321 = vst.msk [vmem:[%s116 + $0x28] sm:$0xf] %vm309, %v295
      %322 = vst.msk [vmem:[%s116 + $0x2c] sm:$0x3] %vm311, %v296
      %323 = vst.msk [vmem:[%s116 + $0x30] sm:$0xf] %vm309, %v297
      %324 = vst.msk [vmem:[%s116 + $0x34] sm:$0x3] %vm311, %v298
      %325 = vst.msk [vmem:[%s116 + $0x38] sm:$0xf] %vm309, %v299
      %326 = vst.msk [vmem:[%s116 + $0x3c] sm:$0x3] %vm311, %v300
      %327 = vst.msk [vmem:[%s116 + $0x40] sm:$0xf] %vm309, %v301
      %328 = vst.msk [vmem:[%s116 + $0x44] sm:$0x3] %vm311, %v302
      %329 = vst.msk [vmem:[%s116 + $0x48] sm:$0xf] %vm309, %v303
      %330 = vst.msk [vmem:[%s116 + $0x4c] sm:$0x3] %vm311, %v304
      %331 = vst.msk [vmem:[%s116 + $0x50] sm:$0xf] %vm309, %v305
      %332 = vst.msk [vmem:[%s116 + $0x54] sm:$0x3] %vm311, %v306
      %333 = vst.msk [vmem:[%s116 + $0x58] sm:$0xf] %vm309, %v307
      %334 = vst.msk [vmem:[%s116 + $0x5c] sm:$0x3] %vm311, %v308
      %p335 = scmp.lt.s32.totalorder %s12, 1
      %s336 = scalar_select %p335, %s12, 1
      %s337 = smul.addr %s336, 24
      %s338 = smul.addr %s337, 4
      %s339 = scalar_lea.vmem %s1, %s338
      // Predicated region
      $region25: #{digit_cnn_forward.6} parent=23 // pred_check
        %p340 = pneg %p56
      $region26: #{digit_cnn_forward.6} parent=23 // pred_check_branch
        %342 = sbr.rel (%p340) target = $region28
      $region27: #{digit_cnn_forward.6} parent=23 // pred_region
        _
      $region28: #{digit_cnn_forward.6} parent=23 // pred_fallthru
        _
    $region24: #{digit_cnn_forward.6} parent=5 // pred_fallthru
      _
    %p343 = scmp.le.s32.totalorder 2, %s7
    // Predicated region
    $region29: #{digit_cnn_forward.6} parent=5 // pred_check
      %p344 = pneg %p343
    $region30: #{digit_cnn_forward.6} parent=5 // pred_check_branch
      %346 = sbr.rel (%p344) target = $region32
    $region31: #{digit_cnn_forward.6} parent=5 // pred_region
      %s347 = ssub.s32 %s7, 2
      // Predicated region
      $region33: #{digit_cnn_forward.6} parent=31 // pred_check
        %p348 = pneg %p62
      $region34: #{digit_cnn_forward.6} parent=31 // pred_check_branch
        %350 = sbr.rel (%p348) target = $region36
      $region35: #{digit_cnn_forward.6} parent=31 // pred_region
        %p351 = scmp.lt.s32.totalorder %s13, 1
        %s352 = scalar_select %p351, %s13, 1
        %s353 = smul.addr %s352, 24
        %s354 = smul.addr %s353, 4
        %s355 = scalar_lea.vmem %s1, %s354
      $region36: #{digit_cnn_forward.6} parent=31 // pred_fallthru
        _
    $region32: #{digit_cnn_forward.6} parent=5 // pred_fallthru
      _
  $region6: #{digit_cnn_forward.6} parent=0 // loop_footer
    %s11 = sadd.s32 1, %s7
  $region7: #{digit_cnn_forward.6} parent=0 // loop_footer_branch
    %6 = sbr.rel target = $region3
  $region8: #{digit_cnn_forward.6} parent=0 // loop_exit
    _

// kernel: digit_cnn_forward.5
$region0: #{digit_cnn_forward.5}
  #allocation0 [shape = 'u32[]', space=smem, size = 0x4, offset = 0x4, fixed_abs, tag = 'smem constant byte address 0x4 - core index']
  #allocation1 [shape = 'u32[144,128]{1,0:T(1,128)}', space=vmem, size = 0x12000, scoped, tag = 'internal scratch']
  %s0 = inlined_call_operand.vmem [shape: bf16[2,26,26,32], index: 0, kind: input, shape index: {}]
  %s1 = inlined_call_operand.vmem [shape: bf16[9,32,64], index: 1, kind: input, shape index: {}]
  %s2 = inlined_call_operand.vmem [shape: f32[1,64], index: 2, kind: input, shape index: {}]
  %s3 = inlined_call_operand.vmem [shape: bf16[2,24,24,64], index: 3, kind: output, shape index: {}]
  %s4 = sld [smem:[#allocation0]]
  $region45: #{digit_cnn_forward.5} parent=0
    _
  %s6 = ssub.s32 1, %s4
  %s7 = scalar_select 0, %s6, %s4
  loop: start=0, step=1, limit=8
  $region2: #{digit_cnn_forward.5} parent=0 // loop_pre_header
    _
  $region3: #{digit_cnn_forward.5} parent=0 // loop_header
    %s9 = sphi 0, %s13
    %p10 = scmp.ge.s32.totalorder %s9, 8
    %s16 = sphi 0, %s28
    %s17 = sphi 0, %s24
    %s18 = sphi 0, %s16
    %s19 = sphi 0, %s17
    %s20 = sphi 0, %s18
    %s21 = sphi 0, %s19
    %s31 = sphi 0, %s33
    %s34 = sphi 0, %s31
    %s35 = sphi 0, %s34
    %s51 = sphi 0, %s35
    %s55 = sphi 0, %s55
    %s57 = sphi 0, %s55
    %s58 = sphi 0, %s57
    %s72 = sphi 0, %s58
    %s76 = sphi 0, %s76
    %s78 = sphi 0, %s76
    %s79 = sphi 0, %s78
    %s93 = sphi 0, %s79
    %s101 = sphi 0, %s103
    %s104 = sphi 0, %s101
    %s105 = sphi 0, %s104
    %s121 = sphi 0, %s105
  $region4: #{digit_cnn_forward.5} parent=0 // loop_header_branch
    %12 = sbr.rel (%p10) target = $region8
  $region5: #{digit_cnn_forward.5} parent=0 // loop_body
    %s14 = ssub.s32 %s9, 1
    %s15 = ssub.s32 %s9, 2
    %s22 = sadd.s32 1, %s17
    %p23 = scmp.ge.s32.totalorder %s22, 3
    %s24 = scalar_select %p23, 0, %s22
    %s25 = sadd.s32 1, %s16
    %s26 = scalar_select %p23, %s25, %s16
    %p27 = scmp.ge.s32.totalorder %s26, 2
    %s28 = scalar_select %p27, 0, %s26
    %s29 = ssub.s32 %s16, %s28
    %p30 = scmp.eq.s32.totalorder %s29, 0
    %s32 = sadd.s32 %s31, 1
    %s33 = scalar_select %p30, %s31, %s32
    %p36 = pneg %p30
    %p37 = scmp.eq.s32.totalorder %s9, 5
    %p38 = por %p36, %p37
    %p39 = scmp.ne.s32.totalorder %s31, %s34
    %p40 = scmp.eq.s32.totalorder %s9, 0
    %p41 = por %p39, %p40
    %p42 = scmp.ne.s32.totalorder %s31, %s34
    %p43 = scmp.eq.s32.totalorder %s14, 5
    %p44 = por %p42, %p43
    %p45 = scmp.ne.s32.totalorder %s34, %s35
    %p46 = scmp.eq.s32.totalorder %s14, 0
    %p47 = por %p45, %p46
    %p48 = scmp.ne.s32.totalorder %s34, %s35
    %p49 = scmp.eq.s32.totalorder %s15, 5
    %p50 = por %p48, %p49
    %p52 = scmp.ne.s32.totalorder %s35, %s51
    %p53 = scmp.eq.s32.totalorder %s15, 0
    %p54 = por %p52, %p53
    %s56 = sadd.s32 %s55, 1
    %p59 = scmp.eq.s32.totalorder %s9, 5
    %p60 = scmp.ne.s32.totalorder %s55, %s57
    %p61 = scmp.eq.s32.totalorder %s9, 0
    %p62 = por %p60, %p61
    %p63 = scmp.ne.s32.totalorder %s55, %s57
    %p64 = scmp.eq.s32.totalorder %s14, 5
    %p65 = por %p63, %p64
    %p66 = scmp.ne.s32.totalorder %s57, %s58
    %p67 = scmp.eq.s32.totalorder %s14, 0
    %p68 = por %p66, %p67
    %p69 = scmp.ne.s32.totalorder %s57, %s58
    %p70 = scmp.eq.s32.totalorder %s15, 5
    %p71 = por %p69, %p70
    %p73 = scmp.ne.s32.totalorder %s58, %s72
    %p74 = scmp.eq.s32.totalorder %s15, 0
    %p75 = por %p73, %p74
    %s77 = sadd.s32 %s76, 1
    %p80 = scmp.eq.s32.totalorder %s9, 5
    %p81 = scmp.ne.s32.totalorder %s76, %s78
    %p82 = scmp.eq.s32.totalorder %s9, 0
    %p83 = por %p81, %p82
    %p84 = scmp.ne.s32.totalorder %s76, %s78
    %p85 = scmp.eq.s32.totalorder %s14, 5
    %p86 = por %p84, %p85
    %p87 = scmp.ne.s32.totalorder %s78, %s79
    %p88 = scmp.eq.s32.totalorder %s14, 0
    %p89 = por %p87, %p88
    %p90 = scmp.ne.s32.totalorder %s78, %s79
    %p91 = scmp.eq.s32.totalorder %s15, 5
    %p92 = por %p90, %p91
    %p94 = scmp.ne.s32.totalorder %s79, %s93
    %p95 = scmp.eq.s32.totalorder %s15, 0
    %p96 = por %p94, %p95
    %s97 = ssub.s32 %s16, %s28
    %s98 = ssub.s32 %s17, %s24
    %s99 = sor.u32 %s97, %s98
    %p100 = scmp.eq.s32.totalorder %s99, 0
    %s102 = sadd.s32 %s101, 1
    %s103 = scalar_select %p100, %s101, %s102
    %p106 = pneg %p100
    %p107 = scmp.eq.s32.totalorder %s9, 5
    %p108 = por %p106, %p107
    %p109 = scmp.ne.s32.totalorder %s101, %s104
    %p110 = scmp.eq.s32.totalorder %s9, 0
    %p111 = por %p109, %p110
    %p112 = scmp.ne.s32.totalorder %s101, %s104
    %p113 = scmp.eq.s32.totalorder %s14, 5
    %p114 = por %p112, %p113
    %p115 = scmp.ne.s32.totalorder %s104, %s105
    %p116 = scmp.eq.s32.totalorder %s14, 0
    %p117 = por %p115, %p116
    %p118 = scmp.ne.s32.totalorder %s104, %s105
    %p119 = scmp.eq.s32.totalorder %s15, 5
    %p120 = por %p118, %p119
    %p122 = scmp.ne.s32.totalorder %s105, %s121
    %p123 = scmp.eq.s32.totalorder %s15, 0
    %p124 = por %p122, %p123
    %p125 = scmp.le.s32.totalorder 1, %s9
    %p126 = scmp.lt.s32.totalorder %s9, 7
    %p127 = pnand %p125, %p126
    %p128 = pneg %p127
    // Predicated region
    $region9: #{digit_cnn_forward.5} parent=5 // pred_check
      _
    $region10: #{digit_cnn_forward.5} parent=5 // pred_check_branch
      %130 = sbr.rel (%p127) target = $region12
    $region11: #{digit_cnn_forward.5} parent=5 // pred_region
      %s131 = ssub.s32 %s9, 1
      // Predicated region
      $region13: #{digit_cnn_forward.5} parent=11 // pred_check
        %p132 = pneg %p68
      $region14: #{digit_cnn_forward.5} parent=11 // pred_check_branch
        %134 = sbr.rel (%p132) target = $region16
      $region15: #{digit_cnn_forward.5} parent=11 // pred_region
        _
      $region16: #{digit_cnn_forward.5} parent=11 // pred_fallthru
        _
      // Predicated region
      $region17: #{digit_cnn_forward.5} parent=11 // pred_check
        %p135 = pneg %p89
      $region18: #{digit_cnn_forward.5} parent=11 // pred_check_branch
        %137 = sbr.rel (%p135) target = $region20
      $region19: #{digit_cnn_forward.5} parent=11 // pred_region
        _
      $region20: #{digit_cnn_forward.5} parent=11 // pred_fallthru
        _
    $region12: #{digit_cnn_forward.5} parent=5 // pred_fallthru
      _
    %p138 = scmp.lt.s32.totalorder %s9, 6
    // Predicated region
    $region21: #{digit_cnn_forward.5} parent=5 // pred_check
      %p139 = pneg %p138
    $region22: #{digit_cnn_forward.5} parent=5 // pred_check_branch
      %141 = sbr.rel (%p139) target = $region24
    $region23: #{digit_cnn_forward.5} parent=5 // pred_region
      // Predicated region
      $region25: #{digit_cnn_forward.5} parent=23 // pred_check
        %p142 = pneg %p41
      $region26: #{digit_cnn_forward.5} parent=23 // pred_check_branch
        %144 = sbr.rel (%p142) target = $region28
      $region27: #{digit_cnn_forward.5} parent=23 // pred_region
        %p145 = scmp.lt.s32.totalorder %s16, 1
        %s146 = scalar_select %p145, %s16, 1
        %s147 = smul.addr %s146, 104
        %s148 = smul.addr %s147, 4
        %s149 = scalar_lea.vmem %s0, %s148
      $region28: #{digit_cnn_forward.5} parent=23 // pred_fallthru
        _
    $region24: #{digit_cnn_forward.5} parent=5 // pred_fallthru
      _
    %p150 = scmp.le.s32.totalorder 1, %s9
    %p151 = scmp.lt.s32.totalorder %s9, 7
    %p152 = pnand %p150, %p151
    %p153 = pneg %p152
    // Predicated region
    $region29: #{digit_cnn_forward.5} parent=5 // pred_check
      _
    $region30: #{digit_cnn_forward.5} parent=5 // pred_check_branch
      %155 = sbr.rel (%p152) target = $region32
    $region31: #{digit_cnn_forward.5} parent=5 // pred_region
      %s156 = ssub.s32 %s9, 1
      %p157 = scmp.lt.s32.totalorder %s18, 1
      %s158 = scalar_select %p157, %s18, 1
      %s159 = smul.addr %s158, 104
      %s160 = smul.addr %s159, 4
      %s161 = scalar_lea.vmem %s0, %s160
      %p162 = pneg %p47
      %p163 = pneg %p44
      %p164 = pneg %p68
      %p165 = pneg %p65
      %p166 = pneg %p89
      %p167 = pneg %p86
      %p168 = pneg %p117
      %p169 = pneg %p114
      %s170 = smul.u32 8, %s19
      %p171 = scmp.lt.s32.totalorder %s18, 1
      %s172 = scalar_select %p171, %s18, 1
      %p173 = scmp.lt.s32.totalorder %s170, 23
      %s174 = scalar_select %p173, %s170, 23
      %s175 = smul.addr %s174, 3
      %s176 = smul.addr %s172, 72
      %s177 = sadd.s32 %s175, %s176
      %s178 = smul.addr %s177, 4
      %s179 = scalar_lea.vmem %s3, %s178
      %p180 = scmp.lt.s32.totalorder %s18, 1
      %s181 = scalar_select %p180, %s18, 1
      %s182 = smul.addr %s181, 104
      %s183 = smul.addr %s182, 4
      %s184 = scalar_lea.vmem %s0, %s183
      %s185 = smul.u32 8, %s19
      %p186 = scmp.lt.s32.totalorder %s18, 1
      %s187 = scalar_select %p186, %s18, 1
      %p188 = scmp.lt.s32.totalorder %s185, 23
      %s189 = scalar_select %p188, %s185, 23
      %s190 = smul.addr %s189, 3
      %s191 = smul.addr %s187, 72
      %s192 = sadd.s32 %s190, %s191
      %s193 = smul.addr %s192, 4
      %s194 = scalar_lea.vmem %s3, %s193
      %s195 = smul.u32 8, %s19
      %s197 = smul.u32 %s19, 8
      %s198 = smul.u32 %s197, 4
      %s199 = smul.addr %s198, 4
      %s200 = scalar_lea.vmem %s184, %s199
      %v201 = vld [vmem:[%s200] sm:$0xf]
      %v202 = vld [vmem:[%s200 + $0x4] sm:$0xf]
      %v203 = vld [vmem:[%s200 + $0x8] sm:$0xf]
      %v204 = vld [vmem:[%s200 + $0xc] sm:$0x1]
      %v205 = vld [vmem:[%s200 + $0x10] sm:$0xf]
      %v206 = vld [vmem:[%s200 + $0x14] sm:$0xf]
      %v207 = vld [vmem:[%s200 + $0x18] sm:$0xf]
      %v208 = vld [vmem:[%s200 + $0x1c] sm:$0x1]
      %v209 = vld [vmem:[%s200 + $0x20] sm:$0xf]
      %v210 = vld [vmem:[%s200 + $0x24] sm:$0xf]
      %v211 = vld [vmem:[%s200 + $0x28] sm:$0xf]
      %v212 = vld [vmem:[%s200 + $0x2c] sm:$0x1]
      %v213 = vld [vmem:[%s200 + $0x30] sm:$0xf]
      %v214 = vld [vmem:[%s200 + $0x34] sm:$0xf]
      %v215 = vld [vmem:[%s200 + $0x38] sm:$0xf]
      %v216 = vld [vmem:[%s200 + $0x3c] sm:$0x1]
      %v217 = vld [vmem:[%s200 + $0x40] sm:$0xf]
      %v218 = vld [vmem:[%s200 + $0x44] sm:$0xf]
      %v219 = vld [vmem:[%s200 + $0x48] sm:$0xf]
      %v220 = vld [vmem:[%s200 + $0x4c] sm:$0x1]
      %v221 = vld [vmem:[%s200 + $0x50] sm:$0xf]
      %v222 = vld [vmem:[%s200 + $0x54] sm:$0xf]
      %v223 = vld [vmem:[%s200 + $0x58] sm:$0xf]
      %v224 = vld [vmem:[%s200 + $0x5c] sm:$0x1]
      %v225 = vld [vmem:[%s200 + $0x60] sm:$0xf]
      %v226 = vld [vmem:[%s200 + $0x64] sm:$0xf]
      %v227 = vld [vmem:[%s200 + $0x68] sm:$0xf]
      %v228 = vld [vmem:[%s200 + $0x6c] sm:$0x1]
      %v229 = vld [vmem:[%s200 + $0x70] sm:$0xf]
      %v230 = vld [vmem:[%s200 + $0x74] sm:$0xf]
      %v231 = vld [vmem:[%s200 + $0x78] sm:$0xf]
      %v232 = vld [vmem:[%s200 + $0x7c] sm:$0x1]
      %v233 = vld [vmem:[%s1] sm:$0xf]
      %v234 = vld [vmem:[%s1 + $0x4] sm:$0xf]
      %v235 = vld [vmem:[%s1 + $0x8] sm:$0xf]
      %v236 = vld [vmem:[%s1 + $0xc] sm:$0xf]
      %vm237 = vsmask.f32 3328
      %vm238 = vsmask.f32 7440
      %vm239 = vmor %vm237, %vm238
      %v241 = vshrl.u32 %v201, 16
      %v243 = vrot.slane %v241, 4
      %v244 = vshll.u32 %v201, 16
      %v246 = vrot.slane %v244, 5
      %v247 = vor.u32 %v243, %v246
      %v248 = vrot.slane %v247, 4
      %v250 = vshll.u32 %v202, 16
      %v252 = vrot.slane %v250, 5
      %v253 = vsel %vm239, %v248, %v252
      %v254 = vshrl.u32 %v202, 16
      %v256 = vrot.slane %v254, 4
      %v257 = vor.u32 %v256, %v252
      %v258 = vrot.slane %v257, 4
      %v260 = vshll.u32 %v203, 16
      %v262 = vrot.slane %v260, 5
      %v263 = vsel %vm239, %v258, %v262
      %v264 = vshrl.u32 %v203, 16
      %v266 = vrot.slane %v264, 4
      %v267 = vor.u32 %v266, %v262
      %v268 = vrot.slane %v267, 4
      %v270 = vshll.u32 %v204, 16
      %v272 = vrot.slane %v270, 5
      %v273 = vsel %vm239, %v268, %v272
      %v275 = vshrl.u32 %v205, 16
      %v277 = vrot.slane %v275, 4
      %v278 = vshll.u32 %v205, 16
      %v280 = vrot.slane %v278, 5
      %v281 = vor.u32 %v277, %v280
      %v282 = vrot.slane %v281, 4
      %v284 = vshll.u32 %v206, 16
      %v286 = vrot.slane %v284, 5
      %v287 = vsel %vm239, %v282, %v286
      %v288 = vshrl.u32 %v206, 16
      %v290 = vrot.slane %v288, 4
      %v291 = vor.u32 %v290, %v286
      %v292 = vrot.slane %v291, 4
      %v294 = vshll.u32 %v207, 16
      %v296 = vrot.slane %v294, 5
      %v297 = vsel %vm239, %v292, %v296
      %v298 = vshrl.u32 %v207, 16
      %v300 = vrot.slane %v298, 4
      %v301 = vor.u32 %v300, %v296
      %v302 = vrot.slane %v301, 4
      %v304 = vshll.u32 %v208, 16
      %v306 = vrot.slane %v304, 5
      %v307 = vsel %vm239, %v302, %v306
      %v309 = vshrl.u32 %v209, 16
      %v311 = vrot.slane %v309, 4
      %v312 = vshll.u32 %v209, 16
      %v314 = vrot.slane %v312, 5
      %v315 = vor.u32 %v311, %v314
      %v316 = vrot.slane %v315, 4
      %v318 = vshll.u32 %v210, 16
      %v320 = vrot.slane %v318, 5
      %v321 = vsel %vm239, %v316, %v320
      %v322 = vshrl.u32 %v210, 16
      %v324 = vrot.slane %v322, 4
      %v325 = vor.u32 %v324, %v320
      %v326 = vrot.slane %v325, 4
      %v328 = vshll.u32 %v211, 16
      %v330 = vrot.slane %v328, 5
      %v331 = vsel %vm239, %v326, %v330
      %v332 = vshrl.u32 %v211, 16
      %v334 = vrot.slane %v332, 4
      %v335 = vor.u32 %v334, %v330
      %v336 = vrot.slane %v335, 4
      %v338 = vshll.u32 %v212, 16
      %v340 = vrot.slane %v338, 5
      %v341 = vsel %vm239, %v336, %v340
      %v343 = vshrl.u32 %v213, 16
      %v345 = vrot.slane %v343, 4
      %v346 = vshll.u32 %v213, 16
      %v348 = vrot.slane %v346, 5
      %v349 = vor.u32 %v345, %v348
      %v350 = vrot.slane %v349, 4
      %v352 = vshll.u32 %v214, 16
      %v354 = vrot.slane %v352, 5
      %v355 = vsel %vm239, %v350, %v354
      %v356 = vshrl.u32 %v214, 16
      %v358 = vrot.slane %v356, 4
      %v359 = vor.u32 %v358, %v354
      %v360 = vrot.slane %v359, 4
      %v362 = vshll.u32 %v215, 16
      %v364 = vrot.slane %v362, 5
      %v365 = vsel %vm239, %v360, %v364
      %v366 = vshrl.u32 %v215, 16
      %v368 = vrot.slane %v366, 4
      %v369 = vor.u32 %v368, %v364
      %v370 = vrot.slane %v369, 4
      %v372 = vshll.u32 %v216, 16
      %v374 = vrot.slane %v372, 5
      %v375 = vsel %vm239, %v370, %v374
      %v377 = vshrl.u32 %v217, 16
      %v379 = vrot.slane %v377, 4
      %v380 = vshll.u32 %v217, 16
      %v382 = vrot.slane %v380, 5
      %v383 = vor.u32 %v379, %v382
      %v384 = vrot.slane %v383, 4
      %v386 = vshll.u32 %v218, 16
      %v388 = vrot.slane %v386, 5
      %v389 = vsel %vm239, %v384, %v388
      %v390 = vshrl.u32 %v218, 16
      %v392 = vrot.slane %v390, 4
      %v393 = vor.u32 %v392, %v388
      %v394 = vrot.slane %v393, 4
      %v396 = vshll.u32 %v219, 16
      %v398 = vrot.slane %v396, 5
      %v399 = vsel %vm239, %v394, %v398
      %v400 = vshrl.u32 %v219, 16
      %v402 = vrot.slane %v400, 4
      %v403 = vor.u32 %v402, %v398
      %v404 = vrot.slane %v403, 4
      %v406 = vshll.u32 %v220, 16
      %v408 = vrot.slane %v406, 5
      %v409 = vsel %vm239, %v404, %v408
      %v411 = vshrl.u32 %v221, 16
      %v413 = vrot.slane %v411, 4
      %v414 = vshll.u32 %v221, 16
      %v416 = vrot.slane %v414, 5
      %v417 = vor.u32 %v413, %v416
      %v418 = vrot.slane %v417, 4
      %v420 = vshll.u32 %v222, 16
      %v422 = vrot.slane %v420, 5
      %v423 = vsel %vm239, %v418, %v422
      %v424 = vshrl.u32 %v222, 16
      %v426 = vrot.slane %v424, 4
      %v427 = vor.u32 %v426, %v422
      %v428 = vrot.slane %v427, 4
      %v430 = vshll.u32 %v223, 16
      %v432 = vrot.slane %v430, 5
      %v433 = vsel %vm239, %v428, %v432
      %v434 = vshrl.u32 %v223, 16
      %v436 = vrot.slane %v434, 4
      %v437 = vor.u32 %v436, %v432
      %v438 = vrot.slane %v437, 4
      %v440 = vshll.u32 %v224, 16
      %v442 = vrot.slane %v440, 5
      %v443 = vsel %vm239, %v438, %v442
      %v445 = vshrl.u32 %v225, 16
      %v447 = vrot.slane %v445, 4
      %v448 = vshll.u32 %v225, 16
      %v450 = vrot.slane %v448, 5
      %v451 = vor.u32 %v447, %v450
      %v452 = vrot.slane %v451, 4
      %v454 = vshll.u32 %v226, 16
      %v456 = vrot.slane %v454, 5
      %v457 = vsel %vm239, %v452, %v456
      %v458 = vshrl.u32 %v226, 16
      %v460 = vrot.slane %v458, 4
      %v461 = vor.u32 %v460, %v456
      %v462 = vrot.slane %v461, 4
      %v464 = vshll.u32 %v227, 16
      %v466 = vrot.slane %v464, 5
      %v467 = vsel %vm239, %v462, %v466
      %v468 = vshrl.u32 %v227, 16
      %v470 = vrot.slane %v468, 4
      %v471 = vor.u32 %v470, %v466
      %v472 = vrot.slane %v471, 4
      %v474 = vshll.u32 %v228, 16
      %v476 = vrot.slane %v474, 5
      %v477 = vsel %vm239, %v472, %v476
      %v479 = vshrl.u32 %v229, 16
      %v481 = vrot.slane %v479, 4
      %v482 = vshll.u32 %v229, 16
      %v484 = vrot.slane %v482, 5
      %v485 = vor.u32 %v481, %v484
      %v486 = vrot.slane %v485, 4
      %v488 = vshll.u32 %v230, 16
      %v490 = vrot.slane %v488, 5
      %v491 = vsel %vm239, %v486, %v490
      %v492 = vshrl.u32 %v230, 16
      %v494 = vrot.slane %v492, 4
      %v495 = vor.u32 %v494, %v490
      %v496 = vrot.slane %v495, 4
      %v498 = vshll.u32 %v231, 16
      %v500 = vrot.slane %v498, 5
      %v501 = vsel %vm239, %v496, %v500
      %v502 = vshrl.u32 %v231, 16
      %v504 = vrot.slane %v502, 4
      %v505 = vor.u32 %v504, %v500
      %v506 = vrot.slane %v505, 4
      %v508 = vshll.u32 %v232, 16
      %v510 = vrot.slane %v508, 5
      %v511 = vsel %vm239, %v506, %v510
      %s512 = scalar_lea.vmem %s1, 16
      %v513 = vld [vmem:[%s512] sm:$0xf]
      %v514 = vld [vmem:[%s512 + $0x4] sm:$0xf]
      %v515 = vld [vmem:[%s512 + $0x8] sm:$0xf]
      %v516 = vld [vmem:[%s512 + $0xc] sm:$0xf]
      %v517 = vunpack.c.l.b16 %v253
      %v518 = vunpack.c.l.b16 %v263
      %v519 = vunpack.c.l.b16 %v273
      %v520 = vunpack.c.l.b16 %v287
      %v521 = vunpack.c.l.b16 %v297
      %v522 = vunpack.c.l.b16 %v307
      %v523 = vunpack.c.l.b16 %v321
      %v524 = vunpack.c.l.b16 %v331
      %v525 = vunpack.c.l.b16 %v341
      %v526 = vunpack.c.l.b16 %v355
      %v527 = vunpack.c.l.b16 %v365
      %v528 = vunpack.c.l.b16 %v375
      %v529 = vunpack.c.l.b16 %v389
      %v530 = vunpack.c.l.b16 %v399
      %v531 = vunpack.c.l.b16 %v409
      %v532 = vunpack.c.l.b16 %v423
      %v533 = vunpack.c.l.b16 %v433
      %v534 = vunpack.c.l.b16 %v443
      %v535 = vunpack.c.l.b16 %v457
      %v536 = vunpack.c.l.b16 %v467
      %v537 = vunpack.c.l.b16 %v477
      %v538 = vunpack.c.l.b16 %v491
      %v539 = vunpack.c.l.b16 %v501
      %v540 = vunpack.c.l.b16 %v511
      %v541 = vpack.c.b16 %v518, %v517
      %v542 = vpack.c.b16 %v520, %v519
      %v543 = vpack.c.b16 %v522, %v521
      %v544 = vpack.c.b16 %v524, %v523
      %v545 = vpack.c.b16 %v526, %v525
      %v546 = vpack.c.b16 %v528, %v527
      %v547 = vpack.c.b16 %v530, %v529
      %v548 = vpack.c.b16 %v532, %v531
      %v549 = vpack.c.b16 %v534, %v533
      %v550 = vpack.c.b16 %v536, %v535
      %v551 = vpack.c.b16 %v538, %v537
      %v552 = vpack.c.b16 %v540, %v539
      %v557 = vunpack.c.l.b16 %v513
      %v558 = vunpack.c.l.b16 %v514
      %v559 = vunpack.c.l.b16 %v515
      %v560 = vunpack.c.l.b16 %v516
      %v561 = vpack.c.b16 %v558, %v557
      %v562 = vpack.c.b16 %v560, %v559
      %vm565 = vcmask 261120
      %v567 = vsel %vm565, %v541, 0
      %v570 = vsel %vm565, %v542, 0
      %v573 = vsel %vm565, %v543, 0
      %v576 = vsel %vm565, %v544, 0
      %v579 = vsel %vm565, %v545, 0
      %v582 = vsel %vm565, %v546, 0
      %v585 = vsel %vm565, %v547, 0
      %v588 = vsel %vm565, %v548, 0
      %v591 = vsel %vm565, %v549, 0
      %v594 = vsel %vm565, %v550, 0
      %v597 = vsel %vm565, %v551, 0
      %v600 = vsel %vm565, %v552, 0
      %602 = vmatprep.subr.bf16.mxu0 0
      %603 = vmatpush1.bf16.msra.mxu0 %v561
      %604 = vmatprep.subr.bf16.mxu0 0
      %605 = vmatpush1.bf16.msra.mxu0 %v562
      %606 = vmatprep.subr.bf16.mxu0 0
      %607 = vmatpush1.bf16.msra.mxu0 0
      %608 = vmatprep.subr.bf16.mxu0 0
      %609 = vmatpush1.bf16.msra.mxu0 0
      %610 = vmatprep.subr.bf16.mxu0 0
      %611 = vmatpush1.bf16.msra.mxu0 0
      %612 = vmatprep.subr.bf16.mxu0 0
      %613 = vmatpush1.bf16.msra.mxu0 0
      %614 = vmatprep.subr.bf16.mxu0 0
      %615 = vmatpush1.bf16.msra.mxu0 0
      %616 = vmatprep.subr.bf16.mxu0 0
      %617 = vmatpush1.bf16.msra.mxu0 0
      %618 = vmatprep.subr.bf16.mxu0 0
      %619 = vmatpush1.bf16.msra.mxu0 0
      %620 = vmatprep.subr.bf16.mxu0 0
      %621 = vmatpush1.bf16.msra.mxu0 0
      %622 = vmatprep.subr.bf16.mxu0 0
      %623 = vmatpush1.bf16.msra.mxu0 0
      %624 = vmatprep.subr.bf16.mxu0 0
      %625 = vmatpush1.bf16.msra.mxu0 0
      %626 = vmatprep.subr.bf16.mxu0 0
      %627 = vmatpush1.bf16.msra.mxu0 0
      %628 = vmatprep.subr.bf16.mxu0 0
      %629 = vmatpush1.bf16.msra.mxu0 0
      %630 = vmatprep.subr.bf16.mxu0 0
      %631 = vmatpush1.bf16.msra.mxu0 0
      %632 = vmatprep.subr.bf16.mxu0 0
      %633 = vmatpush1.bf16.msra.mxu0 0
      %634 = vmatprep.mubr.bf16.mxu0 0
      %635 = vmatmul.mubr.bf16.gmra.mrb[0].mxu0 %v567
      %v636 = vpop.f32.mrb[0].mxu0
      %v637 = vadd.f32 0.0, %v636
      %v638 = vpop.f32.mrb[0].mxu0
      %v639 = vpop.f32.mrb[0].mxu0
      %v640 = vadd.f32 0.0, %v639
      %v641 = vpop.f32.mrb[0].mxu0
      %642 = vmatprep.mubr.bf16.mxu0 0
      %643 = vmatmul.mubr.bf16.gmra.mrb[0].mxu0 %v570
      %v644 = vpop.f32.mrb[0].mxu0
      %v645 = vadd.f32 0.0, %v644
      %v646 = vpop.f32.mrb[0].mxu0
      %v647 = vpop.f32.mrb[0].mxu0
      %v648 = vadd.f32 0.0, %v647
      %v649 = vpop.f32.mrb[0].mxu0
      %650 = vmatprep.mubr.bf16.mxu0 0
      %651 = vmatmul.mubr.bf16.gmra.mrb[0].mxu0 %v573
      %v652 = vpop.f32.mrb[0].mxu0
      %v653 = vadd.f32 0.0, %v652
      %v654 = vpop.f32.mrb[0].mxu0
      %v655 = vpop.f32.mrb[0].mxu0
      %v656 = vadd.f32 0.0, %v655
      %v657 = vpop.f32.mrb[0].mxu0
      %658 = vmatprep.mubr.bf16.mxu0 0
      %659 = vmatmul.mubr.bf16.gmra.mrb[0].mxu0 %v576
      %v660 = vpop.f32.mrb[0].mxu0
      %v661 = vadd.f32 0.0, %v660
      %v662 = vpop.f32.mrb[0].mxu0
      %v663 = vpop.f32.mrb[0].mxu0
      %v664 = vadd.f32 0.0, %v663
      %v665 = vpop.f32.mrb[0].mxu0
      %666 = vmatprep.mubr.bf16.mxu0 0
      %667 = vmatmul.mubr.bf16.gmra.mrb[0].mxu0 %v579
      %v668 = vpop.f32.mrb[0].mxu0
      %v669 = vadd.f32 0.0, %v668
      %v670 = vpop.f32.mrb[0].mxu0
      %v671 = vpop.f32.mrb[0].mxu0
      %v672 = vadd.f32 0.0, %v671
      %v673 = vpop.f32.mrb[0].mxu0
      %674 = vmatprep.mubr.bf16.mxu0 0
      %675 = vmatmul.mubr.bf16.gmra.mrb[0].mxu0 %v582
      %v676 = vpop.f32.mrb[0].mxu0
      %v677 = vadd.f32 0.0, %v676
      %v678 = vpop.f32.mrb[0].mxu0
      %v679 = vpop.f32.mrb[0].mxu0
      %v680 = vadd.f32 0.0, %v679
      %v681 = vpop.f32.mrb[0].mxu0
      %682 = vmatprep.mubr.bf16.mxu0 0
      %683 = vmatmul.mubr.bf16.gmra.mrb[0].mxu0 %v585
      %v684 = vpop.f32.mrb[0].mxu0
      %v685 = vadd.f32 0.0, %v684
      %v686 = vpop.f32.mrb[0].mxu0
      %v687 = vpop.f32.mrb[0].mxu0
      %v688 = vadd.f32 0.0, %v687
      %v689 = vpop.f32.mrb[0].mxu0
      %690 = vmatprep.mubr.bf16.mxu0 0
      %691 = vmatmul.mubr.bf16.gmra.mrb[0].mxu0 %v588
      %v692 = vpop.f32.mrb[0].mxu0
      %v693 = vadd.f32 0.0, %v692
      %v694 = vpop.f32.mrb[0].mxu0
      %v695 = vpop.f32.mrb[0].mxu0
      %v696 = vadd.f32 0.0, %v695
      %v697 = vpop.f32.mrb[0].mxu0
      %698 = vmatprep.mubr.bf16.mxu0 0
      %699 = vmatmul.mubr.bf16.gmra.mrb[0].mxu0 %v591
      %v700 = vpop.f32.mrb[0].mxu0
      %v701 = vadd.f32 0.0, %v700
      %v702 = vpop.f32.mrb[0].mxu0
      %v703 = vpop.f32.mrb[0].mxu0
      %v704 = vadd.f32 0.0, %v703
      %v705 = vpop.f32.mrb[0].mxu0
      %706 = vmatprep.mubr.bf16.mxu0 0
      %707 = vmatmul.mubr.bf16.gmra.mrb[0].mxu0 %v594
      %v708 = vpop.f32.mrb[0].mxu0
      %v709 = vadd.f32 0.0, %v708
      %v710 = vpop.f32.mrb[0].mxu0
      %v711 = vpop.f32.mrb[0].mxu0
      %v712 = vadd.f32 0.0, %v711
      %v713 = vpop.f32.mrb[0].mxu0
      %714 = vmatprep.mubr.bf16.mxu0 0
      %715 = vmatmul.mubr.bf16.gmra.mrb[0].mxu0 %v597
      %v716 = vpop.f32.mrb[0].mxu0
      %v717 = vadd.f32 0.0, %v716
      %v718 = vpop.f32.mrb[0].mxu0
      %v719 = vpop.f32.mrb[0].mxu0
      %v720 = vadd.f32 0.0, %v719
      %v721 = vpop.f32.mrb[0].mxu0
      %722 = vmatprep.mubr.bf16.mxu0 0
      %723 = vmatmul.mubr.bf16.gmra.mrb[0].mxu0 %v600
      %v724 = vpop.f32.mrb[0].mxu0
      %v725 = vadd.f32 0.0, %v724
      %v726 = vpop.f32.mrb[0].mxu0
      %v727 = vpop.f32.mrb[0].mxu0
      %v728 = vadd.f32 0.0, %v727
      %v729 = vpop.f32.mrb[0].mxu0
      %730 = vdwg.mxu0
      %v755 = vunpack.c.l.b16 %v201
      %v756 = vunpack.c.l.b16 %v202
      %v757 = vunpack.c.l.b16 %v203
      %v758 = vunpack.c.l.b16 %v205
      %v759 = vunpack.c.l.b16 %v206
      %v760 = vunpack.c.l.b16 %v207
      %v761 = vunpack.c.l.b16 %v209
      %v762 = vunpack.c.l.b16 %v210
      %v763 = vunpack.c.l.b16 %v211
      %v764 = vunpack.c.l.b16 %v213
      %v765 = vunpack.c.l.b16 %v214
      %v766 = vunpack.c.l.b16 %v215
      %v767 = vunpack.c.l.b16 %v217
      %v768 = vunpack.c.l.b16 %v218
      %v769 = vunpack.c.l.b16 %v219
      %v770 = vunpack.c.l.b16 %v221
      %v771 = vunpack.c.l.b16 %v222
      %v772 = vunpack.c.l.b16 %v223
      %v773 = vunpack.c.l.b16 %v225
      %v774 = vunpack.c.l.b16 %v226
      %v775 = vunpack.c.l.b16 %v227
      %v776 = vunpack.c.l.b16 %v229
      %v777 = vunpack.c.l.b16 %v230
      %v778 = vunpack.c.l.b16 %v231
      %v779 = vpack.c.b16 %v756, %v755
      %v780 = vpack.c.b16 %v758, %v757
      %v781 = vpack.c.b16 %v760, %v759
      %v782 = vpack.c.b16 %v762, %v761
      %v783 = vpack.c.b16 %v764, %v763
      %v784 = vpack.c.b16 %v766, %v765
      %v785 = vpack.c.b16 %v768, %v767
      %v786 = vpack.c.b16 %v770, %v769
      %v787 = vpack.c.b16 %v772, %v771
      %v788 = vpack.c.b16 %v774, %v773
      %v789 = vpack.c.b16 %v776, %v775
      %v790 = vpack.c.b16 %v778, %v777
      %v795 = vunpack.c.l.b16 %v233
      %v796 = vunpack.c.l.b16 %v234
      %v797 = vunpack.c.l.b16 %v235
      %v798 = vunpack.c.l.b16 %v236
      %v799 = vpack.c.b16 %v796, %v795
      %v800 = vpack.c.b16 %v798, %v797
      %v804 = vsel %vm565, %v779, 0
      %v807 = vsel %vm565, %v780, 0
      %v810 = vsel %vm565, %v781, 0
      %v813 = vsel %vm565, %v782, 0
      %v816 = vsel %vm565, %v783, 0
      %v819 = vsel %vm565, %v784, 0
      %v822 = vsel %vm565, %v785, 0
      %v825 = vsel %vm565, %v786, 0
      %v828 = vsel %vm565, %v787, 0
      %v831 = vsel %vm565, %v788, 0
      %v834 = vsel %vm565, %v789, 0
      %v837 = vsel %vm565, %v790, 0
      %839 = vmatprep.subr.bf16.mxu0 0
      %840 = vmatpush1.bf16.msra.mxu0 %v799
      %841 = vmatprep.subr.bf16.mxu0 0
      %842 = vmatpush1.bf16.msra.mxu0 %v800
      %843 = vmatprep.subr.bf16.mxu0 0
      %844 = vmatpush1.bf16.msra.mxu0 0
      %845 = vmatprep.subr.bf16.mxu0 0
      %846 = vmatpush1.bf16.msra.mxu0 0
      %847 = vmatprep.subr.bf16.mxu0 0
      %848 = vmatpush1.bf16.msra.mxu0 0
      %849 = vmatprep.subr.bf16.mxu0 0
      %850 = vmatpush1.bf16.msra.mxu0 0
      %851 = vmatprep.subr.bf16.mxu0 0
      %852 = vmatpush1.bf16.msra.mxu0 0
      %853 = vmatprep.subr.bf16.mxu0 0
      %854 = vmatpush1.bf16.msra.mxu0 0
      %855 = vmatprep.subr.bf16.mxu0 0
      %856 = vmatpush1.bf16.msra.mxu0 0
      %857 = vmatprep.subr.bf16.mxu0 0
      %858 = vmatpush1.bf16.msra.mxu0 0
      %859 = vmatprep.subr.bf16.mxu0 0
      %860 = vmatpush1.bf16.msra.mxu0 0
      %861 = vmatprep.subr.bf16.mxu0 0
      %862 = vmatpush1.bf16.msra.mxu0 0
      %863 = vmatprep.subr.bf16.mxu0 0
      %864 = vmatpush1.bf16.msra.mxu0 0
      %865 = vmatprep.subr.bf16.mxu0 0
      %866 = vmatpush1.bf16.msra.mxu0 0
      %867 = vmatprep.subr.bf16.mxu0 0
      %868 = vmatpush1.bf16.msra.mxu0 0
      %869 = vmatprep.subr.bf16.mxu0 0
      %870 = vmatpush1.bf16.msra.mxu0 0
      %871 = vmatprep.mubr.bf16.mxu0 0
      %872 = vmatmul.mubr.bf16.gmra.mrb[0].mxu0 %v804
      %v873 = vpop.f32.mrb[0].mxu0
      %v874 = vadd.f32 %v637, %v873
      %v875 = vpop.f32.mrb[0].mxu0
      %v876 = vpop.f32.mrb[0].mxu0
      %v877 = vadd.f32 %v640, %v876
      %v878 = vpop.f32.mrb[0].mxu0
      %879 = vmatprep.mubr.bf16.mxu0 0
      %880 = vmatmul.mubr.bf16.gmra.mrb[0].mxu0 %v807
      %v881 = vpop.f32.mrb[0].mxu0
      %v882 = vadd.f32 %v645, %v881
      %v883 = vpop.f32.mrb[0].mxu0
      %v884 = vpop.f32.mrb[0].mxu0
      %v885 = vadd.f32 %v648, %v884
      %v886 = vpop.f32.mrb[0].mxu0
      %887 = vmatprep.mubr.bf16.mxu0 0
      %888 = vmatmul.mubr.bf16.gmra.mrb[0].mxu0 %v810
      %v889 = vpop.f32.mrb[0].mxu0
      %v890 = vadd.f32 %v653, %v889
      %v891 = vpop.f32.mrb[0].mxu0
      %v892 = vpop.f32.mrb[0].mxu0
      %v893 = vadd.f32 %v656, %v892
      %v894 = vpop.f32.mrb[0].mxu0
      %895 = vmatprep.mubr.bf16.mxu0 0
      %896 = vmatmul.mubr.bf16.gmra.mrb[0].mxu0 %v813
      %v897 = vpop.f32.mrb[0].mxu0
      %v898 = vadd.f32 %v661, %v897
      %v899 = vpop.f32.mrb[0].mxu0
      %v900 = vpop.f32.mrb[0].mxu0
      %v901 = vadd.f32 %v664, %v900
      %v902 = vpop.f32.mrb[0].mxu0
      %903 = vmatprep.mubr.bf16.mxu0 0
      %904 = vmatmul.mubr.bf16.gmra.mrb[0].mxu0 %v816
      %v905 = vpop.f32.mrb[0].mxu0
      %v906 = vadd.f32 %v669, %v905
      %v907 = vpop.f32.mrb[0].mxu0
      %v908 = vpop.f32.mrb[0].mxu0
      %v909 = vadd.f32 %v672, %v908
      %v910 = vpop.f32.mrb[0].mxu0
      %911 = vmatprep.mubr.bf16.mxu0 0
      %912 = vmatmul.mubr.bf16.gmra.mrb[0].mxu0 %v819
      %v913 = vpop.f32.mrb[0].mxu0
      %v914 = vadd.f32 %v677, %v913
      %v915 = vpop.f32.mrb[0].mxu0
      %v916 = vpop.f32.mrb[0].mxu0
      %v917 = vadd.f32 %v680, %v916
      %v918 = vpop.f32.mrb[0].mxu0
      %919 = vmatprep.mubr.bf16.mxu0 0
      %920 = vmatmul.mubr.bf16.gmra.mrb[0].mxu0 %v822
      %v921 = vpop.f32.mrb[0].mxu0
      %v922 = vadd.f32 %v685, %v921
      %v923 = vpop.f32.mrb[0].mxu0
      %v924 = vpop.f32.mrb[0].mxu0
      %v925 = vadd.f32 %v688, %v924
      %v926 = vpop.f32.mrb[0].mxu0
      %927 = vmatprep.mubr.bf16.mxu0 0
      %928 = vmatmul.mubr.bf16.gmra.mrb[0].mxu0 %v825
      %v929 = vpop.f32.mrb[0].mxu0
      %v930 = vadd.f32 %v693, %v929
      %v931 = vpop.f32.mrb[0].mxu0
      %v932 = vpop.f32.mrb[0].mxu0
      %v933 = vadd.f32 %v696, %v932
      %v934 = vpop.f32.mrb[0].mxu0
      %935 = vmatprep.mubr.bf16.mxu0 0
      %936 = vmatmul.mubr.bf16.gmra.mrb[0].mxu0 %v828
      %v937 = vpop.f32.mrb[0].mxu0
      %v938 = vadd.f32 %v701, %v937
      %v939 = vpop.f32.mrb[0].mxu0
      %v940 = vpop.f32.mrb[0].mxu0
      %v941 = vadd.f32 %v704, %v940
      %v942 = vpop.f32.mrb[0].mxu0
      %943 = vmatprep.mubr.bf16.mxu0 0
      %944 = vmatmul.mubr.bf16.gmra.mrb[0].mxu0 %v831
      %v945 = vpop.f32.mrb[0].mxu0
      %v946 = vadd.f32 %v709, %v945
      %v947 = vpop.f32.mrb[0].mxu0
      %v948 = vpop.f32.mrb[0].mxu0
      %v949 = vadd.f32 %v712, %v948
      %v950 = vpop.f32.mrb[0].mxu0
      %951 = vmatprep.mubr.bf16.mxu0 0
      %952 = vmatmul.mubr.bf16.gmra.mrb[0].mxu0 %v834
      %v953 = vpop.f32.mrb[0].mxu0
      %v954 = vadd.f32 %v717, %v953
      %v955 = vpop.f32.mrb[0].mxu0
      %v956 = vpop.f32.mrb[0].mxu0
      %v957 = vadd.f32 %v720, %v956
      %v958 = vpop.f32.mrb[0].mxu0
      %959 = vmatprep.mubr.bf16.mxu0 0
      %960 = vmatmul.mubr.bf16.gmra.mrb[0].mxu0 %v837
      %v961 = vpop.f32.mrb[0].mxu0
      %v962 = vadd.f32 %v725, %v961
      %v963 = vpop.f32.mrb[0].mxu0
      %v964 = vpop.f32.mrb[0].mxu0
      %v965 = vadd.f32 %v728, %v964
      %v966 = vpop.f32.mrb[0].mxu0
      %967 = vdwg.mxu0
      %vm976 = vcmask 1042432
      %vm977 = vcmask 1046532
      %vm978 = vmor %vm976, %vm977
      %v979 = vrot.slane %v201, 5
      %v980 = vrot.slane %v979, 4
      %v981 = vrot.slane %v202, 5
      %v982 = vsel %vm978, %v980, %v981
      %v983 = vrot.slane %v981, 4
      %v984 = vrot.slane %v203, 5
      %v985 = vsel %vm978, %v983, %v984
      %v986 = vrot.slane %v984, 4
      %v987 = vrot.slane %v204, 5
      %v988 = vsel %vm978, %v986, %v987
      %v989 = vrot.slane %v205, 5
      %v990 = vrot.slane %v989, 4
      %v991 = vrot.slane %v206, 5
      %v992 = vsel %vm978, %v990, %v991
      %v993 = vrot.slane %v991, 4
      %v994 = vrot.slane %v207, 5
      %v995 = vsel %vm978, %v993, %v994
      %v996 = vrot.slane %v994, 4
      %v997 = vrot.slane %v208, 5
      %v998 = vsel %vm978, %v996, %v997
      %v999 = vrot.slane %v209, 5
      %v1000 = vrot.slane %v999, 4
      %v1001 = vrot.slane %v210, 5
      %v1002 = vsel %vm978, %v1000, %v1001
      %v1003 = vrot.slane %v1001, 4
      %v1004 = vrot.slane %v211, 5
      %v1005 = vsel %vm978, %v1003, %v1004
      %v1006 = vrot.slane %v1004, 4
      %v1007 = vrot.slane %v212, 5
      %v1008 = vsel %vm978, %v1006, %v1007
      %v1009 = vrot.slane %v213, 5
      %v1010 = vrot.slane %v1009, 4
      %v1011 = vrot.slane %v214, 5
      %v1012 = vsel %vm978, %v1010, %v1011
      %v1013 = vrot.slane %v1011, 4
      %v1014 = vrot.slane %v215, 5
      %v1015 = vsel %vm978, %v1013, %v1014
      %v1016 = vrot.slane %v1014, 4
      %v1017 = vrot.slane %v216, 5
      %v1018 = vsel %vm978, %v1016, %v1017
      %v1019 = vrot.slane %v217, 5
      %v1020 = vrot.slane %v1019, 4
      %v1021 = vrot.slane %v218, 5
      %v1022 = vsel %vm978, %v1020, %v1021
      %v1023 = vrot.slane %v1021, 4
      %v1024 = vrot.slane %v219, 5
      %v1025 = vsel %vm978, %v1023, %v1024
      %v1026 = vrot.slane %v1024, 4
      %v1027 = vrot.slane %v220, 5
      %v1028 = vsel %vm978, %v1026, %v1027
      %v1029 = vrot.slane %v221, 5
      %v1030 = vrot.slane %v1029, 4
      %v1031 = vrot.slane %v222, 5
      %v1032 = vsel %vm978, %v1030, %v1031
      %v1033 = vrot.slane %v1031, 4
      %v1034 = vrot.slane %v223, 5
      %v1035 = vsel %vm978, %v1033, %v1034
      %v1036 = vrot.slane %v1034, 4
      %v1037 = vrot.slane %v224, 5
      %v1038 = vsel %vm978, %v1036, %v1037
      %v1039 = vrot.slane %v225, 5
      %v1040 = vrot.slane %v1039, 4
      %v1041 = vrot.slane %v226, 5
      %v1042 = vsel %vm978, %v1040, %v1041
      %v1043 = vrot.slane %v1041, 4
      %v1044 = vrot.slane %v227, 5
      %v1045 = vsel %vm978, %v1043, %v1044
      %v1046 = vrot.slane %v1044, 4
      %v1047 = vrot.slane %v228, 5
      %v1048 = vsel %vm978, %v1046, %v1047
      %v1049 = vrot.slane %v229, 5
      %v1050 = vrot.slane %v1049, 4
      %v1051 = vrot.slane %v230, 5
      %v1052 = vsel %vm978, %v1050, %v1051
      %v1053 = vrot.slane %v1051, 4
      %v1054 = vrot.slane %v231, 5
      %v1055 = vsel %vm978, %v1053, %v1054
      %v1056 = vrot.slane %v1054, 4
      %v1057 = vrot.slane %v232, 5
      %v1058 = vsel %vm978, %v1056, %v1057
      %s1059 = scalar_lea.vmem %s1, 32
      %v1060 = vld [vmem:[%s1059] sm:$0xf]
      %v1061 = vld [vmem:[%s1059 + $0x4] sm:$0xf]
      %v1062 = vld [vmem:[%s1059 + $0x8] sm:$0xf]
      %v1063 = vld [vmem:[%s1059 + $0xc] sm:$0xf]
      %v1064 = vunpack.c.l.b16 %v982
      %v1065 = vunpack.c.l.b16 %v985
      %v1066 = vunpack.c.l.b16 %v988
      %v1067 = vunpack.c.l.b16 %v992
      %v1068 = vunpack.c.l.b16 %v995
      %v1069 = vunpack.c.l.b16 %v998
      %v1070 = vunpack.c.l.b16 %v1002
      %v1071 = vunpack.c.l.b16 %v1005
      %v1072 = vunpack.c.l.b16 %v1008
      %v1073 = vunpack.c.l.b16 %v1012
      %v1074 = vunpack.c.l.b16 %v1015
      %v1075 = vunpack.c.l.b16 %v1018
      %v1076 = vunpack.c.l.b16 %v1022
      %v1077 = vunpack.c.l.b16 %v1025
      %v1078 = vunpack.c.l.b16 %v1028
      %v1079 = vunpack.c.l.b16 %v1032
      %v1080 = vunpack.c.l.b16 %v1035
      %v1081 = vunpack.c.l.b16 %v1038
      %v1082 = vunpack.c.l.b16 %v1042
      %v1083 = vunpack.c.l.b16 %v1045
      %v1084 = vunpack.c.l.b16 %v1048
      %v1085 = vunpack.c.l.b16 %v1052
      %v1086 = vunpack.c.l.b16 %v1055
      %v1087 = vunpack.c.l.b16 %v1058
      %v1088 = vpack.c.b16 %v1065, %v1064
      %v1089 = vpack.c.b16 %v1067, %v1066
      %v1090 = vpack.c.b16 %v1069, %v1068
      %v1091 = vpack.c.b16 %v1071, %v1070
      %v1092 = vpack.c.b16 %v1073, %v1072
      %v1093 = vpack.c.b16 %v1075, %v1074
      %v1094 = vpack.c.b16 %v1077, %v1076
      %v1095 = vpack.c.b16 %v1079, %v1078
      %v1096 = vpack.c.b16 %v1081, %v1080
      %v1097 = vpack.c.b16 %v1083, %v1082
      %v1098 = vpack.c.b16 %v1085, %v1084
      %v1099 = vpack.c.b16 %v1087, %v1086
      %v1104 = vunpack.c.l.b16 %v1060
      %v1105 = vunpack.c.l.b16 %v1061
      %v1106 = vunpack.c.l.b16 %v1062
      %v1107 = vunpack.c.l.b16 %v1063
      %v1108 = vpack.c.b16 %v1105, %v1104
      %v1109 = vpack.c.b16 %v1107, %v1106
      %v1113 = vsel %vm565, %v1088, 0
      %v1116 = vsel %vm565, %v1089, 0
      %v1119 = vsel %vm565, %v1090, 0
      %v1122 = vsel %vm565, %v1091, 0
      %v1125 = vsel %vm565, %v1092, 0
      %v1128 = vsel %vm565, %v1093, 0
      %v1131 = vsel %vm565, %v1094, 0
      %v1134 = vsel %vm565, %v1095, 0
      %v1137 = vsel %vm565, %v1096, 0
      %v1140 = vsel %vm565, %v1097, 0
      %v1143 = vsel %vm565, %v1098, 0
      %v1146 = vsel %vm565, %v1099, 0
      %1148 = vmatprep.subr.bf16.mxu0 0
      %1149 = vmatpush1.bf16.msra.mxu0 %v1108
      %1150 = vmatprep.subr.bf16.mxu0 0
      %1151 = vmatpush1.bf16.msra.mxu0 %v1109
      %1152 = vmatprep.subr.bf16.mxu0 0
      %1153 = vmatpush1.bf16.msra.mxu0 0
      %1154 = vmatprep.subr.bf16.mxu0 0
      %1155 = vmatpush1.bf16.msra.mxu0 0
      %1156 = vmatprep.subr.bf16.mxu0 0
      %1157 = vmatpush1.bf16.msra.mxu0 0
      %1158 = vmatprep.subr.bf16.mxu0 0
      %1159 = vmatpush1.bf16.msra.mxu0 0
      %1160 = vmatprep.subr.bf16.mxu0 0
      %1161 = vmatpush1.bf16.msra.mxu0 0
      %1162 = vmatprep.subr.bf16.mxu0 0
      %1163 = vmatpush1.bf16.msra.mxu0 0
      %1164 = vmatprep.subr.bf16.mxu0 0
      %1165 = vmatpush1.bf16.msra.mxu0 0
      %1166 = vmatprep.subr.bf16.mxu0 0
      %1167 = vmatpush1.bf16.msra.mxu0 0
      %1168 = vmatprep.subr.bf16.mxu0 0
      %1169 = vmatpush1.bf16.msra.mxu0 0
      %1170 = vmatprep.subr.bf16.mxu0 0
      %1171 = vmatpush1.bf16.msra.mxu0 0
      %1172 = vmatprep.subr.bf16.mxu0 0
      %1173 = vmatpush1.bf16.msra.mxu0 0
      %1174 = vmatprep.subr.bf16.mxu0 0
      %1175 = vmatpush1.bf16.msra.mxu0 0
      %1176 = vmatprep.subr.bf16.mxu0 0
      %1177 = vmatpush1.bf16.msra.mxu0 0
      %1178 = vmatprep.subr.bf16.mxu0 0
      %1179 = vmatpush1.bf16.msra.mxu0 0
      %1180 = vmatprep.mubr.bf16.mxu0 0
      %1181 = vmatmul.mubr.bf16.gmra.mrb[0].mxu0 %v1113
      %v1182 = vpop.f32.mrb[0].mxu0
      %v1183 = vadd.f32 0.0, %v1182
      %v1184 = vpop.f32.mrb[0].mxu0
      %v1185 = vpop.f32.mrb[0].mxu0
      %v1186 = vadd.f32 0.0, %v1185
      %v1187 = vpop.f32.mrb[0].mxu0
      %1188 = vmatprep.mubr.bf16.mxu0 0
      %1189 = vmatmul.mubr.bf16.gmra.mrb[0].mxu0 %v1116
      %v1190 = vpop.f32.mrb[0].mxu0
      %v1191 = vadd.f32 0.0, %v1190
      %v1192 = vpop.f32.mrb[0].mxu0
      %v1193 = vpop.f32.mrb[0].mxu0
      %v1194 = vadd.f32 0.0, %v1193
      %v1195 = vpop.f32.mrb[0].mxu0
      %1196 = vmatprep.mubr.bf16.mxu0 0
      %1197 = vmatmul.mubr.bf16.gmra.mrb[0].mxu0 %v1119
      %v1198 = vpop.f32.mrb[0].mxu0
      %v1199 = vadd.f32 0.0, %v1198
      %v1200 = vpop.f32.mrb[0].mxu0
      %v1201 = vpop.f32.mrb[0].mxu0
      %v1202 = vadd.f32 0.0, %v1201
      %v1203 = vpop.f32.mrb[0].mxu0
      %1204 = vmatprep.mubr.bf16.mxu0 0
      %1205 = vmatmul.mubr.bf16.gmra.mrb[0].mxu0 %v1122
      %v1206 = vpop.f32.mrb[0].mxu0
      %v1207 = vadd.f32 0.0, %v1206
      %v1208 = vpop.f32.mrb[0].mxu0
      %v1209 = vpop.f32.mrb[0].mxu0
      %v1210 = vadd.f32 0.0, %v1209
      %v1211 = vpop.f32.mrb[0].mxu0
      %1212 = vmatprep.mubr.bf16.mxu0 0
      %1213 = vmatmul.mubr.bf16.gmra.mrb[0].mxu0 %v1125
      %v1214 = vpop.f32.mrb[0].mxu0
      %v1215 = vadd.f32 0.0, %v1214
      %v1216 = vpop.f32.mrb[0].mxu0
      %v1217 = vpop.f32.mrb[0].mxu0
      %v1218 = vadd.f32 0.0, %v1217
      %v1219 = vpop.f32.mrb[0].mxu0
      %1220 = vmatprep.mubr.bf16.mxu0 0
      %1221 = vmatmul.mubr.bf16.gmra.mrb[0].mxu0 %v1128
      %v1222 = vpop.f32.mrb[0].mxu0
      %v1223 = vadd.f32 0.0, %v1222
      %v1224 = vpop.f32.mrb[0].mxu0
      %v1225 = vpop.f32.mrb[0].mxu0
      %v1226 = vadd.f32 0.0, %v1225
      %v1227 = vpop.f32.mrb[0].mxu0
      %1228 = vmatprep.mubr.bf16.mxu0 0
      %1229 = vmatmul.mubr.bf16.gmra.mrb[0].mxu0 %v1131
      %v1230 = vpop.f32.mrb[0].mxu0
      %v1231 = vadd.f32 0.0, %v1230
      %v1232 = vpop.f32.mrb[0].mxu0
      %v1233 = vpop.f32.mrb[0].mxu0
      %v1234 = vadd.f32 0.0, %v1233
      %v1235 = vpop.f32.mrb[0].mxu0
      %1236 = vmatprep.mubr.bf16.mxu0 0
      %1237 = vmatmul.mubr.bf16.gmra.mrb[0].mxu0 %v1134
      %v1238 = vpop.f32.mrb[0].mxu0
      %v1239 = vadd.f32 0.0, %v1238
      %v1240 = vpop.f32.mrb[0].mxu0
      %v1241 = vpop.f32.mrb[0].mxu0
      %v1242 = vadd.f32 0.0, %v1241
      %v1243 = vpop.f32.mrb[0].mxu0
      %1244 = vmatprep.mubr.bf16.mxu0 0
      %1245 = vmatmul.mubr.bf16.gmra.mrb[0].mxu0 %v1137
      %v1246 = vpop.f32.mrb[0].mxu0
      %v1247 = vadd.f32 0.0, %v1246
      %v1248 = vpop.f32.mrb[0].mxu0
      %v1249 = vpop.f32.mrb[0].mxu0
      %v1250 = vadd.f32 0.0, %v1249
      %v1251 = vpop.f32.mrb[0].mxu0
      %1252 = vmatprep.mubr.bf16.mxu0 0
      %1253 = vmatmul.mubr.bf16.gmra.mrb[0].mxu0 %v1140
      %v1254 = vpop.f32.mrb[0].mxu0
      %v1255 = vadd.f32 0.0, %v1254
      %v1256 = vpop.f32.mrb[0].mxu0
      %v1257 = vpop.f32.mrb[0].mxu0
      %v1258 = vadd.f32 0.0, %v1257
      %v1259 = vpop.f32.mrb[0].mxu0
      %1260 = vmatprep.mubr.bf16.mxu0 0
      %1261 = vmatmul.mubr.bf16.gmra.mrb[0].mxu0 %v1143
      %v1262 = vpop.f32.mrb[0].mxu0
      %v1263 = vadd.f32 0.0, %v1262
      %v1264 = vpop.f32.mrb[0].mxu0
      %v1265 = vpop.f32.mrb[0].mxu0
      %v1266 = vadd.f32 0.0, %v1265
      %v1267 = vpop.f32.mrb[0].mxu0
      %1268 = vmatprep.mubr.bf16.mxu0 0
      %1269 = vmatmul.mubr.bf16.gmra.mrb[0].mxu0 %v1146
      %v1270 = vpop.f32.mrb[0].mxu0
      %v1271 = vadd.f32 0.0, %v1270
      %v1272 = vpop.f32.mrb[0].mxu0
      %v1273 = vpop.f32.mrb[0].mxu0
      %v1274 = vadd.f32 0.0, %v1273
      %v1275 = vpop.f32.mrb[0].mxu0
      %1276 = vdwg.mxu0
      %v1277 = vadd.f32 %v874, %v1183
      %v1278 = vadd.f32 %v877, %v1186
      %v1279 = vadd.f32 %v882, %v1191
      %v1280 = vadd.f32 %v885, %v1194
      %v1281 = vadd.f32 %v890, %v1199
      %v1282 = vadd.f32 %v893, %v1202
      %v1283 = vadd.f32 %v898, %v1207
      %v1284 = vadd.f32 %v901, %v1210
      %v1285 = vadd.f32 %v906, %v1215
      %v1286 = vadd.f32 %v909, %v1218
      %v1287 = vadd.f32 %v914, %v1223
      %v1288 = vadd.f32 %v917, %v1226
      %v1289 = vadd.f32 %v922, %v1231
      %v1290 = vadd.f32 %v925, %v1234
      %v1291 = vadd.f32 %v930, %v1239
      %v1292 = vadd.f32 %v933, %v1242
      %v1293 = vadd.f32 %v938, %v1247
      %v1294 = vadd.f32 %v941, %v1250
      %v1295 = vadd.f32 %v946, %v1255
      %v1296 = vadd.f32 %v949, %v1258
      %v1297 = vadd.f32 %v954, %v1263
      %v1298 = vadd.f32 %v957, %v1266
      %v1299 = vadd.f32 %v962, %v1271
      %v1300 = vadd.f32 %v965, %v1274
      %s1301 = sadd.s32 %s197, 1
      %s1302 = smul.u32 %s1301, 4
      %s1303 = smul.addr %s1302, 4
      %s1304 = scalar_lea.vmem %s184, %s1303
      %v1305 = vld [vmem:[%s1304] sm:$0xf]
      %v1306 = vld [vmem:[%s1304 + $0x4] sm:$0xf]
      %v1307 = vld [vmem:[%s1304 + $0x8] sm:$0xf]
      %v1308 = vld [vmem:[%s1304 + $0xc] sm:$0x1]
      %v1309 = vld [vmem:[%s1304 + $0x10] sm:$0xf]
      %v1310 = vld [vmem:[%s1304 + $0x14] sm:$0xf]
      %v1311 = vld [vmem:[%s1304 + $0x18] sm:$0xf]
      %v1312 = vld [vmem:[%s1304 + $0x1c] sm:$0x1]
      %v1313 = vld [vmem:[%s1304 + $0x20] sm:$0xf]
      %v1314 = vld [vmem:[%s1304 + $0x24] sm:$0xf]
      %v1315 = vld [vmem:[%s1304 + $0x28] sm:$0xf]
      %v1316 = vld [vmem:[%s1304 + $0x2c] sm:$0x1]
      %v1317 = vld [vmem:[%s1304 + $0x30] sm:$0xf]
      %v1318 = vld [vmem:[%s1304 + $0x34] sm:$0xf]
      %v1319 = vld [vmem:[%s1304 + $0x38] sm:$0xf]
      %v1320 = vld [vmem:[%s1304 + $0x3c] sm:$0x1]
      %v1321 = vld [vmem:[%s1304 + $0x40] sm:$0xf]
      %v1322 = vld [vmem:[%s1304 + $0x44] sm:$0xf]
      %v1323 = vld [vmem:[%s1304 + $0x48] sm:$0xf]
      %v1324 = vld [vmem:[%s1304 + $0x4c] sm:$0x1]
      %v1325 = vld [vmem:[%s1304 + $0x50] sm:$0xf]
      %v1326 = vld [vmem:[%s1304 + $0x54] sm:$0xf]
      %v1327 = vld [vmem:[%s1304 + $0x58] sm:$0xf]
      %v1328 = vld [vmem:[%s1304 + $0x5c] sm:$0x1]
      %v1329 = vld [vmem:[%s1304 + $0x60] sm:$0xf]
      %v1330 = vld [vmem:[%s1304 + $0x64] sm:$0xf]
      %v1331 = vld [vmem:[%s1304 + $0x68] sm:$0xf]
      %v1332 = vld [vmem:[%s1304 + $0x6c] sm:$0x1]
      %v1333 = vld [vmem:[%s1304 + $0x70] sm:$0xf]
      %v1334 = vld [vmem:[%s1304 + $0x74] sm:$0xf]
      %v1335 = vld [vmem:[%s1304 + $0x78] sm:$0xf]
      %v1336 = vld [vmem:[%s1304 + $0x7c] sm:$0x1]
      %s1337 = scalar_lea.vmem %s1, 48
      %v1338 = vld [vmem:[%s1337] sm:$0xf]
      %v1339 = vld [vmem:[%s1337 + $0x4] sm:$0xf]
      %v1340 = vld [vmem:[%s1337 + $0x8] sm:$0xf]
      %v1341 = vld [vmem:[%s1337 + $0xc] sm:$0xf]
      %v1366 = vunpack.c.l.b16 %v1305
      %v1367 = vunpack.c.l.b16 %v1306
      %v1368 = vunpack.c.l.b16 %v1307
      %v1369 = vunpack.c.l.b16 %v1309
      %v1370 = vunpack.c.l.b16 %v1310
      %v1371 = vunpack.c.l.b16 %v1311
      %v1372 = vunpack.c.l.b16 %v1313
      %v1373 = vunpack.c.l.b16 %v1314
      %v1374 = vunpack.c.l.b16 %v1315
      %v1375 = vunpack.c.l.b16 %v1317
      %v1376 = vunpack.c.l.b16 %v1318
      %v1377 = vunpack.c.l.b16 %v1319
      %v1378 = vunpack.c.l.b16 %v1321
      %v1379 = vunpack.c.l.b16 %v1322
      %v1380 = vunpack.c.l.b16 %v1323
      %v1381 = vunpack.c.l.b16 %v1325
      %v1382 = vunpack.c.l.b16 %v1326
      %v1383 = vunpack.c.l.b16 %v1327
      %v1384 = vunpack.c.l.b16 %v1329
      %v1385 = vunpack.c.l.b16 %v1330
      %v1386 = vunpack.c.l.b16 %v1331
      %v1387 = vunpack.c.l.b16 %v1333
      %v1388 = vunpack.c.l.b16 %v1334
      %v1389 = vunpack.c.l.b16 %v1335
      %v1390 = vpack.c.b16 %v1367, %v1366
      %v1391 = vpack.c.b16 %v1369, %v1368
      %v1392 = vpack.c.b16 %v1371, %v1370
      %v1393 = vpack.c.b16 %v1373, %v1372
      %v1394 = vpack.c.b16 %v1375, %v1374
      %v1395 = vpack.c.b16 %v1377, %v1376
      %v1396 = vpack.c.b16 %v1379, %v1378
      %v1397 = vpack.c.b16 %v1381, %v1380
      %v1398 = vpack.c.b16 %v1383, %v1382
      %v1399 = vpack.c.b16 %v1385, %v1384
      %v1400 = vpack.c.b16 %v1387, %v1386
      %v1401 = vpack.c.b16 %v1389, %v1388
      %v1406 = vunpack.c.l.b16 %v1338
      %v1407 = vunpack.c.l.b16 %v1339
      %v1408 = vunpack.c.l.b16 %v1340
      %v1409 = vunpack.c.l.b16 %v1341
      %v1410 = vpack.c.b16 %v1407, %v1406
      %v1411 = vpack.c.b16 %v1409, %v1408
      %v1415 = vsel %vm565, %v1390, 0
      %v1418 = vsel %vm565, %v1391, 0
      %v1421 = vsel %vm565, %v1392, 0
      %v1424 = vsel %vm565, %v1393, 0
      %v1427 = vsel %vm565, %v1394, 0
      %v1430 = vsel %vm565, %v1395, 0
      %v1433 = vsel %vm565, %v1396, 0
      %v1436 = vsel %vm565, %v1397, 0
      %v1439 = vsel %vm565, %v1398, 0
      %v1442 = vsel %vm565, %v1399, 0
      %v1445 = vsel %vm565, %v1400, 0
      %v1448 = vsel %vm565, %v1401, 0
      %1450 = vmatprep.subr.bf16.mxu0 0
      %1451 = vmatpush1.bf16.msra.mxu0 %v1410
      %1452 = vmatprep.subr.bf16.mxu0 0
      %1453 = vmatpush1.bf16.msra.mxu0 %v1411
      %1454 = vmatprep.subr.bf16.mxu0 0
      %1455 = vmatpush1.bf16.msra.mxu0 0
      %1456 = vmatprep.subr.bf16.mxu0 0
      %1457 = vmatpush1.bf16.msra.mxu0 0
      %1458 = vmatprep.subr.bf16.mxu0 0
      %1459 = vmatpush1.bf16.msra.mxu0 0
      %1460 = vmatprep.subr.bf16.mxu0 0
      %1461 = vmatpush1.bf16.msra.mxu0 0
      %1462 = vmatprep.subr.bf16.mxu0 0
      %1463 = vmatpush1.bf16.msra.mxu0 0
      %1464 = vmatprep.subr.bf16.mxu0 0
      %1465 = vmatpush1.bf16.msra.mxu0 0
      %1466 = vmatprep.subr.bf16.mxu0 0
      %1467 = vmatpush1.bf16.msra.mxu0 0
      %1468 = vmatprep.subr.bf16.mxu0 0
      %1469 = vmatpush1.bf16.msra.mxu0 0
      %1470 = vmatprep.subr.bf16.mxu0 0
      %1471 = vmatpush1.bf16.msra.mxu0 0
      %1472 = vmatprep.subr.bf16.mxu0 0
      %1473 = vmatpush1.bf16.msra.mxu0 0
      %1474 = vmatprep.subr.bf16.mxu0 0
      %1475 = vmatpush1.bf16.msra.mxu0 0
      %1476 = vmatprep.subr.bf16.mxu0 0
      %1477 = vmatpush1.bf16.msra.mxu0 0
      %1478 = vmatprep.subr.bf16.mxu0 0
      %1479 = vmatpush1.bf16.msra.mxu0 0
      %1480 = vmatprep.subr.bf16.mxu0 0
      %1481 = vmatpush1.bf16.msra.mxu0 0
      %1482 = vmatprep.mubr.bf16.mxu0 0
      %1483 = vmatmul.mubr.bf16.gmra.mrb[0].mxu0 %v1415
      %v1484 = vpop.f32.mrb[0].mxu0
      %v1485 = vadd.f32 0.0, %v1484
      %v1486 = vpop.f32.mrb[0].mxu0
      %v1487 = vpop.f32.mrb[0].mxu0
      %v1488 = vadd.f32 0.0, %v1487
      %v1489 = vpop.f32.mrb[0].mxu0
      %1490 = vmatprep.mubr.bf16.mxu0 0
      %1491 = vmatmul.mubr.bf16.gmra.mrb[0].mxu0 %v1418
      %v1492 = vpop.f32.mrb[0].mxu0
      %v1493 = vadd.f32 0.0, %v1492
      %v1494 = vpop.f32.mrb[0].mxu0
      %v1495 = vpop.f32.mrb[0].mxu0
      %v1496 = vadd.f32 0.0, %v1495
      %v1497 = vpop.f32.mrb[0].mxu0
      %1498 = vmatprep.mubr.bf16.mxu0 0
      %1499 = vmatmul.mubr.bf16.gmra.mrb[0].mxu0 %v1421
      %v1500 = vpop.f32.mrb[0].mxu0
      %v1501 = vadd.f32 0.0, %v1500
      %v1502 = vpop.f32.mrb[0].mxu0
      %v1503 = vpop.f32.mrb[0].mxu0
      %v1504 = vadd.f32 0.0, %v1503
      %v1505 = vpop.f32.mrb[0].mxu0
      %1506 = vmatprep.mubr.bf16.mxu0 0
      %1507 = vmatmul.mubr.bf16.gmra.mrb[0].mxu0 %v1424
      %v1508 = vpop.f32.mrb[0].mxu0
      %v1509 = vadd.f32 0.0, %v1508
      %v1510 = vpop.f32.mrb[0].mxu0
      %v1511 = vpop.f32.mrb[0].mxu0
      %v1512 = vadd.f32 0.0, %v1511
      %v1513 = vpop.f32.mrb[0].mxu0
      %1514 = vmatprep.mubr.bf16.mxu0 0
      %1515 = vmatmul.mubr.bf16.gmra.mrb[0].mxu0 %v1427
      %v1516 = vpop.f32.mrb[0].mxu0
      %v1517 = vadd.f32 0.0, %v1516
      %v1518 = vpop.f32.mrb[0].mxu0
      %v1519 = vpop.f32.mrb[0].mxu0
      %v1520 = vadd.f32 0.0, %v1519
      %v1521 = vpop.f32.mrb[0].mxu0
      %1522 = vmatprep.mubr.bf16.mxu0 0
      %1523 = vmatmul.mubr.bf16.gmra.mrb[0].mxu0 %v1430
      %v1524 = vpop.f32.mrb[0].mxu0
      %v1525 = vadd.f32 0.0, %v1524
      %v1526 = vpop.f32.mrb[0].mxu0
      %v1527 = vpop.f32.mrb[0].mxu0
      %v1528 = vadd.f32 0.0, %v1527
      %v1529 = vpop.f32.mrb[0].mxu0
      %1530 = vmatprep.mubr.bf16.mxu0 0
      %1531 = vmatmul.mubr.bf16.gmra.mrb[0].mxu0 %v1433
      %v1532 = vpop.f32.mrb[0].mxu0
      %v1533 = vadd.f32 0.0, %v1532
      %v1534 = vpop.f32.mrb[0].mxu0
      %v1535 = vpop.f32.mrb[0].mxu0
      %v1536 = vadd.f32 0.0, %v1535
      %v1537 = vpop.f32.mrb[0].mxu0
      %1538 = vmatprep.mubr.bf16.mxu0 0
      %1539 = vmatmul.mubr.bf16.gmra.mrb[0].mxu0 %v1436
      %v1540 = vpop.f32.mrb[0].mxu0
      %v1541 = vadd.f32 0.0, %v1540
      %v1542 = vpop.f32.mrb[0].mxu0
      %v1543 = vpop.f32.mrb[0].mxu0
      %v1544 = vadd.f32 0.0, %v1543
      %v1545 = vpop.f32.mrb[0].mxu0
      %1546 = vmatprep.mubr.bf16.mxu0 0
      %1547 = vmatmul.mubr.bf16.gmra.mrb[0].mxu0 %v1439
      %v1548 = vpop.f32.mrb[0].mxu0
      %v1549 = vadd.f32 0.0, %v1548
      %v1550 = vpop.f32.mrb[0].mxu0
      %v1551 = vpop.f32.mrb[0].mxu0
      %v1552 = vadd.f32 0.0, %v1551
      %v1553 = vpop.f32.mrb[0].mxu0
      %1554 = vmatprep.mubr.bf16.mxu0 0
      %1555 = vmatmul.mubr.bf16.gmra.mrb[0].mxu0 %v1442
      %v1556 = vpop.f32.mrb[0].mxu0
      %v1557 = vadd.f32 0.0, %v1556
      %v1558 = vpop.f32.mrb[0].mxu0
      %v1559 = vpop.f32.mrb[0].mxu0
      %v1560 = vadd.f32 0.0, %v1559
      %v1561 = vpop.f32.mrb[0].mxu0
      %1562 = vmatprep.mubr.bf16.mxu0 0
      %1563 = vmatmul.mubr.bf16.gmra.mrb[0].mxu0 %v1445
      %v1564 = vpop.f32.mrb[0].mxu0
      %v1565 = vadd.f32 0.0, %v1564
      %v1566 = vpop.f32.mrb[0].mxu0
      %v1567 = vpop.f32.mrb[0].mxu0
      %v1568 = vadd.f32 0.0, %v1567
      %v1569 = vpop.f32.mrb[0].mxu0
      %1570 = vmatprep.mubr.bf16.mxu0 0
      %1571 = vmatmul.mubr.bf16.gmra.mrb[0].mxu0 %v1448
      %v1572 = vpop.f32.mrb[0].mxu0
      %v1573 = vadd.f32 0.0, %v1572
      %v1574 = vpop.f32.mrb[0].mxu0
      %v1575 = vpop.f32.mrb[0].mxu0
      %v1576 = vadd.f32 0.0, %v1575
      %v1577 = vpop.f32.mrb[0].mxu0
      %1578 = vdwg.mxu0
      %v1579 = vadd.f32 %v1277, %v1485
      %v1580 = vadd.f32 %v1278, %v1488
      %v1581 = vadd.f32 %v1279, %v1493
      %v1582 = vadd.f32 %v1280, %v1496
      %v1583 = vadd.f32 %v1281, %v1501
      %v1584 = vadd.f32 %v1282, %v1504
      %v1585 = vadd.f32 %v1283, %v1509
      %v1586 = vadd.f32 %v1284, %v1512
      %v1587 = vadd.f32 %v1285, %v1517
      %v1588 = vadd.f32 %v1286, %v1520
      %v1589 = vadd.f32 %v1287, %v1525
      %v1590 = vadd.f32 %v1288, %v1528
      %v1591 = vadd.f32 %v1289, %v1533
      %v1592 = vadd.f32 %v1290, %v1536
      %v1593 = vadd.f32 %v1291, %v1541
      %v1594 = vadd.f32 %v1292, %v1544
      %v1595 = vadd.f32 %v1293, %v1549
      %v1596 = vadd.f32 %v1294, %v1552
      %v1597 = vadd.f32 %v1295, %v1557
      %v1598 = vadd.f32 %v1296, %v1560
      %v1599 = vadd.f32 %v1297, %v1565
      %v1600 = vadd.f32 %v1298, %v1568
      %v1601 = vadd.f32 %v1299, %v1573
      %v1602 = vadd.f32 %v1300, %v1576
      %v1604 = vshrl.u32 %v1305, 16
      %v1606 = vrot.slane %v1604, 4
      %v1607 = vshll.u32 %v1305, 16
      %v1609 = vrot.slane %v1607, 5
      %v1610 = vor.u32 %v1606, %v1609
      %v1611 = vrot.slane %v1610, 4
      %v1613 = vshll.u32 %v1306, 16
      %v1615 = vrot.slane %v1613, 5
      %v1616 = vsel %vm239, %v1611, %v1615
      %v1617 = vshrl.u32 %v1306, 16
      %v1619 = vrot.slane %v1617, 4
      %v1620 = vor.u32 %v1619, %v1615
      %v1621 = vrot.slane %v1620, 4
      %v1623 = vshll.u32 %v1307, 16
      %v1625 = vrot.slane %v1623, 5
      %v1626 = vsel %vm239, %v1621, %v1625
      %v1627 = vshrl.u32 %v1307, 16
      %v1629 = vrot.slane %v1627, 4
      %v1630 = vor.u32 %v1629, %v1625
      %v1631 = vrot.slane %v1630, 4
      %v1633 = vshll.u32 %v1308, 16
      %v1635 = vrot.slane %v1633, 5
      %v1636 = vsel %vm239, %v1631, %v1635
      %v1638 = vshrl.u32 %v1309, 16
      %v1640 = vrot.slane %v1638, 4
      %v1641 = vshll.u32 %v1309, 16
      %v1643 = vrot.slane %v1641, 5
      %v1644 = vor.u32 %v1640, %v1643
      %v1645 = vrot.slane %v1644, 4
      %v1647 = vshll.u32 %v1310, 16
      %v1649 = vrot.slane %v1647, 5
      %v1650 = vsel %vm239, %v1645, %v1649
      %v1651 = vshrl.u32 %v1310, 16
      %v1653 = vrot.slane %v1651, 4
      %v1654 = vor.u32 %v1653, %v1649
      %v1655 = vrot.slane %v1654, 4
      %v1657 = vshll.u32 %v1311, 16
      %v1659 = vrot.slane %v1657, 5
      %v1660 = vsel %vm239, %v1655, %v1659
      %v1661 = vshrl.u32 %v1311, 16
      %v1663 = vrot.slane %v1661, 4
      %v1664 = vor.u32 %v1663, %v1659
      %v1665 = vrot.slane %v1664, 4
      %v1667 = vshll.u32 %v1312, 16
      %v1669 = vrot.slane %v1667, 5
      %v1670 = vsel %vm239, %v1665, %v1669
      %v1672 = vshrl.u32 %v1313, 16
      %v1674 = vrot.slane %v1672, 4
      %v1675 = vshll.u32 %v1313, 16
      %v1677 = vrot.slane %v1675, 5
      %v1678 = vor.u32 %v1674, %v1677
      %v1679 = vrot.slane %v1678, 4
      %v1681 = vshll.u32 %v1314, 16
      %v1683 = vrot.slane %v1681, 5
      %v1684 = vsel %vm239, %v1679, %v1683
      %v1685 = vshrl.u32 %v1314, 16
      %v1687 = vrot.slane %v1685, 4
      %v1688 = vor.u32 %v1687, %v1683
      %v1689 = vrot.slane %v1688, 4
      %v1691 = vshll.u32 %v1315, 16
      %v1693 = vrot.slane %v1691, 5
      %v1694 = vsel %vm239, %v1689, %v1693
      %v1695 = vshrl.u32 %v1315, 16
      %v1697 = vrot.slane %v1695, 4
      %v1698 = vor.u32 %v1697, %v1693
      %v1699 = vrot.slane %v1698, 4
      %v1701 = vshll.u32 %v1316, 16
      %v1703 = vrot.slane %v1701, 5
      %v1704 = vsel %vm239, %v1699, %v1703
      %v1706 = vshrl.u32 %v1317, 16
      %v1708 = vrot.slane %v1706, 4
      %v1709 = vshll.u32 %v1317, 16
      %v1711 = vrot.slane %v1709, 5
      %v1712 = vor.u32 %v1708, %v1711
      %v1713 = vrot.slane %v1712, 4
      %v1715 = vshll.u32 %v1318, 16
      %v1717 = vrot.slane %v1715, 5
      %v1718 = vsel %vm239, %v1713, %v1717
      %v1719 = vshrl.u32 %v1318, 16
      %v1721 = vrot.slane %v1719, 4
      %v1722 = vor.u32 %v1721, %v1717
      %v1723 = vrot.slane %v1722, 4
      %v1725 = vshll.u32 %v1319, 16
      %v1727 = vrot.slane %v1725, 5
      %v1728 = vsel %vm239, %v1723, %v1727
      %v1729 = vshrl.u32 %v1319, 16
      %v1731 = vrot.slane %v1729, 4
      %v1732 = vor.u32 %v1731, %v1727
      %v1733 = vrot.slane %v1732, 4
      %v1735 = vshll.u32 %v1320, 16
      %v1737 = vrot.slane %v1735, 5
      %v1738 = vsel %vm239, %v1733, %v1737
      %v1740 = vshrl.u32 %v1321, 16
      %v1742 = vrot.slane %v1740, 4
      %v1743 = vshll.u32 %v1321, 16
      %v1745 = vrot.slane %v1743, 5
      %v1746 = vor.u32 %v1742, %v1745
      %v1747 = vrot.slane %v1746, 4
      %v1749 = vshll.u32 %v1322, 16
      %v1751 = vrot.slane %v1749, 5
      %v1752 = vsel %vm239, %v1747, %v1751
      %v1753 = vshrl.u32 %v1322, 16
      %v1755 = vrot.slane %v1753, 4
      %v1756 = vor.u32 %v1755, %v1751
      %v1757 = vrot.slane %v1756, 4
      %v1759 = vshll.u32 %v1323, 16
      %v1761 = vrot.slane %v1759, 5
      %v1762 = vsel %vm239, %v1757, %v1761
      %v1763 = vshrl.u32 %v1323, 16
      %v1765 = vrot.slane %v1763, 4
      %v1766 = vor.u32 %v1765, %v1761
      %v1767 = vrot.slane %v1766, 4
      %v1769 = vshll.u32 %v1324, 16
      %v1771 = vrot.slane %v1769, 5
      %v1772 = vsel %vm239, %v1767, %v1771
      %v1774 = vshrl.u32 %v1325, 16
      %v1776 = vrot.slane %v1774, 4
      %v1777 = vshll.u32 %v1325, 16
      %v1779 = vrot.slane %v1777, 5
      %v1780 = vor.u32 %v1776, %v1779
      %v1781 = vrot.slane %v1780, 4
      %v1783 = vshll.u32 %v1326, 16
      %v1785 = vrot.slane %v1783, 5
      %v1786 = vsel %vm239, %v1781, %v1785
      %v1787 = vshrl.u32 %v1326, 16
      %v1789 = vrot.slane %v1787, 4
      %v1790 = vor.u32 %v1789, %v1785
      %v1791 = vrot.slane %v1790, 4
      %v1793 = vshll.u32 %v1327, 16
      %v1795 = vrot.slane %v1793, 5
      %v1796 = vsel %vm239, %v1791, %v1795
      %v1797 = vshrl.u32 %v1327, 16
      %v1799 = vrot.slane %v1797, 4
      %v1800 = vor.u32 %v1799, %v1795
      %v1801 = vrot.slane %v1800, 4
      %v1803 = vshll.u32 %v1328, 16
      %v1805 = vrot.slane %v1803, 5
      %v1806 = vsel %vm239, %v1801, %v1805
      %v1808 = vshrl.u32 %v1329, 16
      %v1810 = vrot.slane %v1808, 4
      %v1811 = vshll.u32 %v1329, 16
      %v1813 = vrot.slane %v1811, 5
      %v1814 = vor.u32 %v1810, %v1813
      %v1815 = vrot.slane %v1814, 4
      %v1817 = vshll.u32 %v1330, 16
      %v1819 = vrot.slane %v1817, 5
      %v1820 = vsel %vm239, %v1815, %v1819
      %v1821 = vshrl.u32 %v1330, 16
      %v1823 = vrot.slane %v1821, 4
      %v1824 = vor.u32 %v1823, %v1819
      %v1825 = vrot.slane %v1824, 4
      %v1827 = vshll.u32 %v1331, 16
      %v1829 = vrot.slane %v1827, 5
      %v1830 = vsel %vm239, %v1825, %v1829
      %v1831 = vshrl.u32 %v1331, 16
      %v1833 = vrot.slane %v1831, 4
      %v1834 = vor.u32 %v1833, %v1829
      %v1835 = vrot.slane %v1834, 4
      %v1837 = vshll.u32 %v1332, 16
      %v1839 = vrot.slane %v1837, 5
      %v1840 = vsel %vm239, %v1835, %v1839
      %v1842 = vshrl.u32 %v1333, 16
      %v1844 = vrot.slane %v1842, 4
      %v1845 = vshll.u32 %v1333, 16
      %v1847 = vrot.slane %v1845, 5
      %v1848 = vor.u32 %v1844, %v1847
      %v1849 = vrot.slane %v1848, 4
      %v1851 = vshll.u32 %v1334, 16
      %v1853 = vrot.slane %v1851, 5
      %v1854 = vsel %vm239, %v1849, %v1853
      %v1855 = vshrl.u32 %v1334, 16
      %v1857 = vrot.slane %v1855, 4
      %v1858 = vor.u32 %v1857, %v1853
      %v1859 = vrot.slane %v1858, 4
      %v1861 = vshll.u32 %v1335, 16
      %v1863 = vrot.slane %v1861, 5
      %v1864 = vsel %vm239, %v1859, %v1863
      %v1865 = vshrl.u32 %v1335, 16
      %v1867 = vrot.slane %v1865, 4
      %v1868 = vor.u32 %v1867, %v1863
      %v1869 = vrot.slane %v1868, 4
      %v1871 = vshll.u32 %v1336, 16
      %v1873 = vrot.slane %v1871, 5
      %v1874 = vsel %vm239, %v1869, %v1873
      %s1875 = scalar_lea.vmem %s1, 64
      %v1876 = vld [vmem:[%s1875] sm:$0xf]
      %v1877 = vld [vmem:[%s1875 + $0x4] sm:$0xf]
      %v1878 = vld [vmem:[%s1875 + $0x8] sm:$0xf]
      %v1879 = vld [vmem:[%s1875 + $0xc] sm:$0xf]
      %v1880 = vunpack.c.l.b16 %v1616
      %v1881 = vunpack.c.l.b16 %v1626
      %v1882 = vunpack.c.l.b16 %v1636
      %v1883 = vunpack.c.l.b16 %v1650
      %v1884 = vunpack.c.l.b16 %v1660
      %v1885 = vunpack.c.l.b16 %v1670
      %v1886 = vunpack.c.l.b16 %v1684
      %v1887 = vunpack.c.l.b16 %v1694
      %v1888 = vunpack.c.l.b16 %v1704
      %v1889 = vunpack.c.l.b16 %v1718
      %v1890 = vunpack.c.l.b16 %v1728
      %v1891 = vunpack.c.l.b16 %v1738
      %v1892 = vunpack.c.l.b16 %v1752
      %v1893 = vunpack.c.l.b16 %v1762
      %v1894 = vunpack.c.l.b16 %v1772
      %v1895 = vunpack.c.l.b16 %v1786
      %v1896 = vunpack.c.l.b16 %v1796
      %v1897 = vunpack.c.l.b16 %v1806
      %v1898 = vunpack.c.l.b16 %v1820
      %v1899 = vunpack.c.l.b16 %v1830
      %v1900 = vunpack.c.l.b16 %v1840
      %v1901 = vunpack.c.l.b16 %v1854
      %v1902 = vunpack.c.l.b16 %v1864
      %v1903 = vunpack.c.l.b16 %v1874
      %v1904 = vpack.c.b16 %v1881, %v1880
      %v1905 = vpack.c.b16 %v1883, %v1882
      %v1906 = vpack.c.b16 %v1885, %v1884
      %v1907 = vpack.c.b16 %v1887, %v1886
      %v1908 = vpack.c.b16 %v1889, %v1888
      %v1909 = vpack.c.b16 %v1891, %v1890
      %v1910 = vpack.c.b16 %v1893, %v1892
      %v1911 = vpack.c.b16 %v1895, %v1894
      %v1912 = vpack.c.b16 %v1897, %v1896
      %v1913 = vpack.c.b16 %v1899, %v1898
      %v1914 = vpack.c.b16 %v1901, %v1900
      %v1915 = vpack.c.b16 %v1903, %v1902
      %v1920 = vunpack.c.l.b16 %v1876
      %v1921 = vunpack.c.l.b16 %v1877
      %v1922 = vunpack.c.l.b16 %v1878
      %v1923 = vunpack.c.l.b16 %v1879
      %v1924 = vpack.c.b16 %v1921, %v1920
      %v1925 = vpack.c.b16 %v1923, %v1922
      %v1929 = vsel %vm565, %v1904, 0
      %v1932 = vsel %vm565, %v1905, 0
      %v1935 = vsel %vm565, %v1906, 0
      %v1938 = vsel %vm565, %v1907, 0
      %v1941 = vsel %vm565, %v1908, 0
      %v1944 = vsel %vm565, %v1909, 0
      %v1947 = vsel %vm565, %v1910, 0
      %v1950 = vsel %vm565, %v1911, 0
      %v1953 = vsel %vm565, %v1912, 0
      %v1956 = vsel %vm565, %v1913, 0
      %v1959 = vsel %vm565, %v1914, 0
      %v1962 = vsel %vm565, %v1915, 0
      %1964 = vmatprep.subr.bf16.mxu0 0
      %1965 = vmatpush1.bf16.msra.mxu0 %v1924
      %1966 = vmatprep.subr.bf16.mxu0 0
      %1967 = vmatpush1.bf16.msra.mxu0 %v1925
      %1968 = vmatprep.subr.bf16.mxu0 0
      %1969 = vmatpush1.bf16.msra.mxu0 0
      %1970 = vmatprep.subr.bf16.mxu0 0
      %1971 = vmatpush1.bf16.msra.mxu0 0
      %1972 = vmatprep.subr.bf16.mxu0 0
      %1973 = vmatpush1.bf16.msra.mxu0 0
      %1974 = vmatprep.subr.bf16.mxu0 0
      %1975 = vmatpush1.bf16.msra.mxu0 0
      %1976 = vmatprep.subr.bf16.mxu0 0
      %1977 = vmatpush1.bf16.msra.mxu0 0
      %1978 = vmatprep.subr.bf16.mxu0 0
      %1979 = vmatpush1.bf16.msra.mxu0 0
      %1980 = vmatprep.subr.bf16.mxu0 0
      %1981 = vmatpush1.bf16.msra.mxu0 0
      %1982 = vmatprep.subr.bf16.mxu0 0
      %1983 = vmatpush1.bf16.msra.mxu0 0
      %1984 = vmatprep.subr.bf16.mxu0 0
      %1985 = vmatpush1.bf16.msra.mxu0 0
      %1986 = vmatprep.subr.bf16.mxu0 0
      %1987 = vmatpush1.bf16.msra.mxu0 0
      %1988 = vmatprep.subr.bf16.mxu0 0
      %1989 = vmatpush1.bf16.msra.mxu0 0
      %1990 = vmatprep.subr.bf16.mxu0 0
      %1991 = vmatpush1.bf16.msra.mxu0 0
      %1992 = vmatprep.subr.bf16.mxu0 0
      %1993 = vmatpush1.bf16.msra.mxu0 0
      %1994 = vmatprep.subr.bf16.mxu0 0
      %1995 = vmatpush1.bf16.msra.mxu0 0
      %1996 = vmatprep.mubr.bf16.mxu0 0
      %1997 = vmatmul.mubr.bf16.gmra.mrb[0].mxu0 %v1929
      %v1998 = vpop.f32.mrb[0].mxu0
      %v1999 = vadd.f32 0.0, %v1998
      %v2000 = vpop.f32.mrb[0].mxu0
      %v2001 = vpop.f32.mrb[0].mxu0
      %v2002 = vadd.f32 0.0, %v2001
      %v2003 = vpop.f32.mrb[0].mxu0
      %2004 = vmatprep.mubr.bf16.mxu0 0
      %2005 = vmatmul.mubr.bf16.gmra.mrb[0].mxu0 %v1932
      %v2006 = vpop.f32.mrb[0].mxu0
      %v2007 = vadd.f32 0.0, %v2006
      %v2008 = vpop.f32.mrb[0].mxu0
      %v2009 = vpop.f32.mrb[0].mxu0
      %v2010 = vadd.f32 0.0, %v2009
      %v2011 = vpop.f32.mrb[0].mxu0
      %2012 = vmatprep.mubr.bf16.mxu0 0
      %2013 = vmatmul.mubr.bf16.gmra.mrb[0].mxu0 %v1935
      %v2014 = vpop.f32.mrb[0].mxu0
      %v2015 = vadd.f32 0.0, %v2014
      %v2016 = vpop.f32.mrb[0].mxu0
      %v2017 = vpop.f32.mrb[0].mxu0
      %v2018 = vadd.f32 0.0, %v2017
      %v2019 = vpop.f32.mrb[0].mxu0
      %2020 = vmatprep.mubr.bf16.mxu0 0
      %2021 = vmatmul.mubr.bf16.gmra.mrb[0].mxu0 %v1938
      %v2022 = vpop.f32.mrb[0].mxu0
      %v2023 = vadd.f32 0.0, %v2022
      %v2024 = vpop.f32.mrb[0].mxu0
      %v2025 = vpop.f32.mrb[0].mxu0
      %v2026 = vadd.f32 0.0, %v2025
      %v2027 = vpop.f32.mrb[0].mxu0
      %2028 = vmatprep.mubr.bf16.mxu0 0
      %2029 = vmatmul.mubr.bf16.gmra.mrb[0].mxu0 %v1941
      %v2030 = vpop.f32.mrb[0].mxu0
      %v2031 = vadd.f32 0.0, %v2030
      %v2032 = vpop.f32.mrb[0].mxu0
      %v2033 = vpop.f32.mrb[0].mxu0
      %v2034 = vadd.f32 0.0, %v2033
      %v2035 = vpop.f32.mrb[0].mxu0
      %2036 = vmatprep.mubr.bf16.mxu0 0
      %2037 = vmatmul.mubr.bf16.gmra.mrb[0].mxu0 %v1944
      %v2038 = vpop.f32.mrb[0].mxu0
      %v2039 = vadd.f32 0.0, %v2038
      %v2040 = vpop.f32.mrb[0].mxu0
      %v2041 = vpop.f32.mrb[0].mxu0
      %v2042 = vadd.f32 0.0, %v2041
      %v2043 = vpop.f32.mrb[0].mxu0
      %2044 = vmatprep.mubr.bf16.mxu0 0
      %2045 = vmatmul.mubr.bf16.gmra.mrb[0].mxu0 %v1947
      %v2046 = vpop.f32.mrb[0].mxu0
      %v2047 = vadd.f32 0.0, %v2046
      %v2048 = vpop.f32.mrb[0].mxu0
      %v2049 = vpop.f32.mrb[0].mxu0
      %v2050 = vadd.f32 0.0, %v2049
      %v2051 = vpop.f32.mrb[0].mxu0
      %2052 = vmatprep.mubr.bf16.mxu0 0
      %2053 = vmatmul.mubr.bf16.gmra.mrb[0].mxu0 %v1950
      %v2054 = vpop.f32.mrb[0].mxu0
      %v2055 = vadd.f32 0.0, %v2054
      %v2056 = vpop.f32.mrb[0].mxu0
      %v2057 = vpop.f32.mrb[0].mxu0
      %v2058 = vadd.f32 0.0, %v2057
      %v2059 = vpop.f32.mrb[0].mxu0
      %2060 = vmatprep.mubr.bf16.mxu0 0
      %2061 = vmatmul.mubr.bf16.gmra.mrb[0].mxu0 %v1953
      %v2062 = vpop.f32.mrb[0].mxu0
      %v2063 = vadd.f32 0.0, %v2062
      %v2064 = vpop.f32.mrb[0].mxu0
      %v2065 = vpop.f32.mrb[0].mxu0
      %v2066 = vadd.f32 0.0, %v2065
      %v2067 = vpop.f32.mrb[0].mxu0
      %2068 = vmatprep.mubr.bf16.mxu0 0
      %2069 = vmatmul.mubr.bf16.gmra.mrb[0].mxu0 %v1956
      %v2070 = vpop.f32.mrb[0].mxu0
      %v2071 = vadd.f32 0.0, %v2070
      %v2072 = vpop.f32.mrb[0].mxu0
      %v2073 = vpop.f32.mrb[0].mxu0
      %v2074 = vadd.f32 0.0, %v2073
      %v2075 = vpop.f32.mrb[0].mxu0
      %2076 = vmatprep.mubr.bf16.mxu0 0
      %2077 = vmatmul.mubr.bf16.gmra.mrb[0].mxu0 %v1959
      %v2078 = vpop.f32.mrb[0].mxu0
      %v2079 = vadd.f32 0.0, %v2078
      %v2080 = vpop.f32.mrb[0].mxu0
      %v2081 = vpop.f32.mrb[0].mxu0
      %v2082 = vadd.f32 0.0, %v2081
      %v2083 = vpop.f32.mrb[0].mxu0
      %2084 = vmatprep.mubr.bf16.mxu0 0
      %2085 = vmatmul.mubr.bf16.gmra.mrb[0].mxu0 %v1962
      %v2086 = vpop.f32.mrb[0].mxu0
      %v2087 = vadd.f32 0.0, %v2086
      %v2088 = vpop.f32.mrb[0].mxu0
      %v2089 = vpop.f32.mrb[0].mxu0
      %v2090 = vadd.f32 0.0, %v2089
      %v2091 = vpop.f32.mrb[0].mxu0
      %2092 = vdwg.mxu0
      %v2093 = vadd.f32 %v1579, %v1999
      %v2094 = vadd.f32 %v1580, %v2002
      %v2095 = vadd.f32 %v1581, %v2007
      %v2096 = vadd.f32 %v1582, %v2010
      %v2097 = vadd.f32 %v1583, %v2015
      %v2098 = vadd.f32 %v1584, %v2018
      %v2099 = vadd.f32 %v1585, %v2023
      %v2100 = vadd.f32 %v1586, %v2026
      %v2101 = vadd.f32 %v1587, %v2031
      %v2102 = vadd.f32 %v1588, %v2034
      %v2103 = vadd.f32 %v1589, %v2039
      %v2104 = vadd.f32 %v1590, %v2042
      %v2105 = vadd.f32 %v1591, %v2047
      %v2106 = vadd.f32 %v1592, %v2050
      %v2107 = vadd.f32 %v1593, %v2055
      %v2108 = vadd.f32 %v1594, %v2058
      %v2109 = vadd.f32 %v1595, %v2063
      %v2110 = vadd.f32 %v1596, %v2066
      %v2111 = vadd.f32 %v1597, %v2071
      %v2112 = vadd.f32 %v1598, %v2074
      %v2113 = vadd.f32 %v1599, %v2079
      %v2114 = vadd.f32 %v1600, %v2082
      %v2115 = vadd.f32 %v1601, %v2087
      %v2116 = vadd.f32 %v1602, %v2090
      %v2125 = vrot.slane %v1305, 5
      %v2126 = vrot.slane %v2125, 4
      %v2127 = vrot.slane %v1306, 5
      %v2128 = vsel %vm978, %v2126, %v2127
      %v2129 = vrot.slane %v2127, 4
      %v2130 = vrot.slane %v1307, 5
      %v2131 = vsel %vm978, %v2129, %v2130
      %v2132 = vrot.slane %v2130, 4
      %v2133 = vrot.slane %v1308, 5
      %v2134 = vsel %vm978, %v2132, %v2133
      %v2135 = vrot.slane %v1309, 5
      %v2136 = vrot.slane %v2135, 4
      %v2137 = vrot.slane %v1310, 5
      %v2138 = vsel %vm978, %v2136, %v2137
      %v2139 = vrot.slane %v2137, 4
      %v2140 = vrot.slane %v1311, 5
      %v2141 = vsel %vm978, %v2139, %v2140
      %v2142 = vrot.slane %v2140, 4
      %v2143 = vrot.slane %v1312, 5
      %v2144 = vsel %vm978, %v2142, %v2143
      %v2145 = vrot.slane %v1313, 5
      %v2146 = vrot.slane %v2145, 4
      %v2147 = vrot.slane %v1314, 5
      %v2148 = vsel %vm978, %v2146, %v2147
      %v2149 = vrot.slane %v2147, 4
      %v2150 = vrot.slane %v1315, 5
      %v2151 = vsel %vm978, %v2149, %v2150
      %v2152 = vrot.slane %v2150, 4
      %v2153 = vrot.slane %v1316, 5
      %v2154 = vsel %vm978, %v2152, %v2153
      %v2155 = vrot.slane %v1317, 5
      %v2156 = vrot.slane %v2155, 4
      %v2157 = vrot.slane %v1318, 5
      %v2158 = vsel %vm978, %v2156, %v2157
      %v2159 = vrot.slane %v2157, 4
      %v2160 = vrot.slane %v1319, 5
      %v2161 = vsel %vm978, %v2159, %v2160
      %v2162 = vrot.slane %v2160, 4
      %v2163 = vrot.slane %v1320, 5
      %v2164 = vsel %vm978, %v2162, %v2163
      %v2165 = vrot.slane %v1321, 5
      %v2166 = vrot.slane %v2165, 4
      %v2167 = vrot.slane %v1322, 5
      %v2168 = vsel %vm978, %v2166, %v2167
      %v2169 = vrot.slane %v2167, 4
      %v2170 = vrot.slane %v1323, 5
      %v2171 = vsel %vm978, %v2169, %v2170
      %v2172 = vrot.slane %v2170, 4
      %v2173 = vrot.slane %v1324, 5
      %v2174 = vsel %vm978, %v2172, %v2173
      %v2175 = vrot.slane %v1325, 5
      %v2176 = vrot.slane %v2175, 4
      %v2177 = vrot.slane %v1326, 5
      %v2178 = vsel %vm978, %v2176, %v2177
      %v2179 = vrot.slane %v2177, 4
      %v2180 = vrot.slane %v1327, 5
      %v2181 = vsel %vm978, %v2179, %v2180
      %v2182 = vrot.slane %v2180, 4
      %v2183 = vrot.slane %v1328, 5
      %v2184 = vsel %vm978, %v2182, %v2183
      %v2185 = vrot.slane %v1329, 5
      %v2186 = vrot.slane %v2185, 4
      %v2187 = vrot.slane %v1330, 5
      %v2188 = vsel %vm978, %v2186, %v2187
      %v2189 = vrot.slane %v2187, 4
      %v2190 = vrot.slane %v1331, 5
      %v2191 = vsel %vm978, %v2189, %v2190
      %v2192 = vrot.slane %v2190, 4
      %v2193 = vrot.slane %v1332, 5
      %v2194 = vsel %vm978, %v2192, %v2193
      %v2195 = vrot.slane %v1333, 5
      %v2196 = vrot.slane %v2195, 4
      %v2197 = vrot.slane %v1334, 5
      %v2198 = vsel %vm978, %v2196, %v2197
      %v2199 = vrot.slane %v2197, 4
      %v2200 = vrot.slane %v1335, 5
      %v2201 = vsel %vm978, %v2199, %v2200
      %v2202 = vrot.slane %v2200, 4
      %v2203 = vrot.slane %v1336, 5
      %v2204 = vsel %vm978, %v2202, %v2203
      %s2205 = scalar_lea.vmem %s1, 80
      %v2206 = vld [vmem:[%s2205] sm:$0xf]
      %v2207 = vld [vmem:[%s2205 + $0x4] sm:$0xf]
      %v2208 = vld [vmem:[%s2205 + $0x8] sm:$0xf]
      %v2209 = vld [vmem:[%s2205 + $0xc] sm:$0xf]
      %v2210 = vunpack.c.l.b16 %v2128
      %v2211 = vunpack.c.l.b16 %v2131
      %v2212 = vunpack.c.l.b16 %v2134
      %v2213 = vunpack.c.l.b16 %v2138
      %v2214 = vunpack.c.l.b16 %v2141
      %v2215 = vunpack.c.l.b16 %v2144
      %v2216 = vunpack.c.l.b16 %v2148
      %v2217 = vunpack.c.l.b16 %v2151
      %v2218 = vunpack.c.l.b16 %v2154
      %v2219 = vunpack.c.l.b16 %v2158
      %v2220 = vunpack.c.l.b16 %v2161
      %v2221 = vunpack.c.l.b16 %v2164
      %v2222 = vunpack.c.l.b16 %v2168
      %v2223 = vunpack.c.l.b16 %v2171
      %v2224 = vunpack.c.l.b16 %v2174
      %v2225 = vunpack.c.l.b16 %v2178
      %v2226 = vunpack.c.l.b16 %v2181
      %v2227 = vunpack.c.l.b16 %v2184
      %v2228 = vunpack.c.l.b16 %v2188
      %v2229 = vunpack.c.l.b16 %v2191
      %v2230 = vunpack.c.l.b16 %v2194
      %v2231 = vunpack.c.l.b16 %v2198
      %v2232 = vunpack.c.l.b16 %v2201
      %v2233 = vunpack.c.l.b16 %v2204
      %v2234 = vpack.c.b16 %v2211, %v2210
      %v2235 = vpack.c.b16 %v2213, %v2212
      %v2236 = vpack.c.b16 %v2215, %v2214
      %v2237 = vpack.c.b16 %v2217, %v2216
      %v2238 = vpack.c.b16 %v2219, %v2218
      %v2239 = vpack.c.b16 %v2221, %v2220
      %v2240 = vpack.c.b16 %v2223, %v2222
      %v2241 = vpack.c.b16 %v2225, %v2224
      %v2242 = vpack.c.b16 %v2227, %v2226
      %v2243 = vpack.c.b16 %v2229, %v2228
      %v2244 = vpack.c.b16 %v2231, %v2230
      %v2245 = vpack.c.b16 %v2233, %v2232
      %v2250 = vunpack.c.l.b16 %v2206
      %v2251 = vunpack.c.l.b16 %v2207
      %v2252 = vunpack.c.l.b16 %v2208
      %v2253 = vunpack.c.l.b16 %v2209
      %v2254 = vpack.c.b16 %v2251, %v2250
      %v2255 = vpack.c.b16 %v2253, %v2252
      %v2259 = vsel %vm565, %v2234, 0
      %v2262 = vsel %vm565, %v2235, 0
      %v2265 = vsel %vm565, %v2236, 0
      %v2268 = vsel %vm565, %v2237, 0
      %v2271 = vsel %vm565, %v2238, 0
      %v2274 = vsel %vm565, %v2239, 0
      %v2277 = vsel %vm565, %v2240, 0
      %v2280 = vsel %vm565, %v2241, 0
      %v2283 = vsel %vm565, %v2242, 0
      %v2286 = vsel %vm565, %v2243, 0
      %v2289 = vsel %vm565, %v2244, 0
      %v2292 = vsel %vm565, %v2245, 0
      %2294 = vmatprep.subr.bf16.mxu0 0
      %2295 = vmatpush1.bf16.msra.mxu0 %v2254
      %2296 = vmatprep.subr.bf16.mxu0 0
      %2297 = vmatpush1.bf16.msra.mxu0 %v2255
      %2298 = vmatprep.subr.bf16.mxu0 0
      %2299 = vmatpush1.bf16.msra.mxu0 0
      %2300 = vmatprep.subr.bf16.mxu0 0
      %2301 = vmatpush1.bf16.msra.mxu0 0
      %2302 = vmatprep.subr.bf16.mxu0 0
      %2303 = vmatpush1.bf16.msra.mxu0 0
      %2304 = vmatprep.subr.bf16.mxu0 0
      %2305 = vmatpush1.bf16.msra.mxu0 0
      %2306 = vmatprep.subr.bf16.mxu0 0
      %2307 = vmatpush1.bf16.msra.mxu0 0
      %2308 = vmatprep.subr.bf16.mxu0 0
      %2309 = vmatpush1.bf16.msra.mxu0 0
      %2310 = vmatprep.subr.bf16.mxu0 0
      %2311 = vmatpush1.bf16.msra.mxu0 0
      %2312 = vmatprep.subr.bf16.mxu0 0
      %2313 = vmatpush1.bf16.msra.mxu0 0
      %2314 = vmatprep.subr.bf16.mxu0 0
      %2315 = vmatpush1.bf16.msra.mxu0 0
      %2316 = vmatprep.subr.bf16.mxu0 0
      %2317 = vmatpush1.bf16.msra.mxu0 0
      %2318 = vmatprep.subr.bf16.mxu0 0
      %2319 = vmatpush1.bf16.msra.mxu0 0
      %2320 = vmatprep.subr.bf16.mxu0 0
      %2321 = vmatpush1.bf16.msra.mxu0 0
      %2322 = vmatprep.subr.bf16.mxu0 0
      %2323 = vmatpush1.bf16.msra.mxu0 0
      %2324 = vmatprep.subr.bf16.mxu0 0
      %2325 = vmatpush1.bf16.msra.mxu0 0
      %2326 = vmatprep.mubr.bf16.mxu0 0
      %2327 = vmatmul.mubr.bf16.gmra.mrb[0].mxu0 %v2259
      %v2328 = vpop.f32.mrb[0].mxu0
      %v2329 = vadd.f32 0.0, %v2328
      %v2330 = vpop.f32.mrb[0].mxu0
      %v2331 = vpop.f32.mrb[0].mxu0
      %v2332 = vadd.f32 0.0, %v2331
      %v2333 = vpop.f32.mrb[0].mxu0
      %2334 = vmatprep.mubr.bf16.mxu0 0
      %2335 = vmatmul.mubr.bf16.gmra.mrb[0].mxu0 %v2262
      %v2336 = vpop.f32.mrb[0].mxu0
      %v2337 = vadd.f32 0.0, %v2336
      %v2338 = vpop.f32.mrb[0].mxu0
      %v2339 = vpop.f32.mrb[0].mxu0
      %v2340 = vadd.f32 0.0, %v2339
      %v2341 = vpop.f32.mrb[0].mxu0
      %2342 = vmatprep.mubr.bf16.mxu0 0
      %2343 = vmatmul.mubr.bf16.gmra.mrb[0].mxu0 %v2265
      %v2344 = vpop.f32.mrb[0].mxu0
      %v2345 = vadd.f32 0.0, %v2344
      %v2346 = vpop.f32.mrb[0].mxu0
      %v2347 = vpop.f32.mrb[0].mxu0
      %v2348 = vadd.f32 0.0, %v2347
      %v2349 = vpop.f32.mrb[0].mxu0
      %2350 = vmatprep.mubr.bf16.mxu0 0
      %2351 = vmatmul.mubr.bf16.gmra.mrb[0].mxu0 %v2268
      %v2352 = vpop.f32.mrb[0].mxu0
      %v2353 = vadd.f32 0.0, %v2352
      %v2354 = vpop.f32.mrb[0].mxu0
      %v2355 = vpop.f32.mrb[0].mxu0
      %v2356 = vadd.f32 0.0, %v2355
      %v2357 = vpop.f32.mrb[0].mxu0
      %2358 = vmatprep.mubr.bf16.mxu0 0
      %2359 = vmatmul.mubr.bf16.gmra.mrb[0].mxu0 %v2271
      %v2360 = vpop.f32.mrb[0].mxu0
      %v2361 = vadd.f32 0.0, %v2360
      %v2362 = vpop.f32.mrb[0].mxu0
      %v2363 = vpop.f32.mrb[0].mxu0
      %v2364 = vadd.f32 0.0, %v2363
      %v2365 = vpop.f32.mrb[0].mxu0
      %2366 = vmatprep.mubr.bf16.mxu0 0
      %2367 = vmatmul.mubr.bf16.gmra.mrb[0].mxu0 %v2274
      %v2368 = vpop.f32.mrb[0].mxu0
      %v2369 = vadd.f32 0.0, %v2368
      %v2370 = vpop.f32.mrb[0].mxu0
      %v2371 = vpop.f32.mrb[0].mxu0
      %v2372 = vadd.f32 0.0, %v2371
      %v2373 = vpop.f32.mrb[0].mxu0
      %2374 = vmatprep.mubr.bf16.mxu0 0
      %2375 = vmatmul.mubr.bf16.gmra.mrb[0].mxu0 %v2277
      %v2376 = vpop.f32.mrb[0].mxu0
      %v2377 = vadd.f32 0.0, %v2376
      %v2378 = vpop.f32.mrb[0].mxu0
      %v2379 = vpop.f32.mrb[0].mxu0
      %v2380 = vadd.f32 0.0, %v2379
      %v2381 = vpop.f32.mrb[0].mxu0
      %2382 = vmatprep.mubr.bf16.mxu0 0
      %2383 = vmatmul.mubr.bf16.gmra.mrb[0].mxu0 %v2280
      %v2384 = vpop.f32.mrb[0].mxu0
      %v2385 = vadd.f32 0.0, %v2384
      %v2386 = vpop.f32.mrb[0].mxu0
      %v2387 = vpop.f32.mrb[0].mxu0
      %v2388 = vadd.f32 0.0, %v2387
      %v2389 = vpop.f32.mrb[0].mxu0
      %2390 = vmatprep.mubr.bf16.mxu0 0
      %2391 = vmatmul.mubr.bf16.gmra.mrb[0].mxu0 %v2283
      %v2392 = vpop.f32.mrb[0].mxu0
      %v2393 = vadd.f32 0.0, %v2392
      %v2394 = vpop.f32.mrb[0].mxu0
      %v2395 = vpop.f32.mrb[0].mxu0
      %v2396 = vadd.f32 0.0, %v2395
      %v2397 = vpop.f32.mrb[0].mxu0
      %2398 = vmatprep.mubr.bf16.mxu0 0
      %2399 = vmatmul.mubr.bf16.gmra.mrb[0].mxu0 %v2286
      %v2400 = vpop.f32.mrb[0].mxu0
      %v2401 = vadd.f32 0.0, %v2400
      %v2402 = vpop.f32.mrb[0].mxu0
      %v2403 = vpop.f32.mrb[0].mxu0
      %v2404 = vadd.f32 0.0, %v2403
      %v2405 = vpop.f32.mrb[0].mxu0
      %2406 = vmatprep.mubr.bf16.mxu0 0
      %2407 = vmatmul.mubr.bf16.gmra.mrb[0].mxu0 %v2289
      %v2408 = vpop.f32.mrb[0].mxu0
      %v2409 = vadd.f32 0.0, %v2408
      %v2410 = vpop.f32.mrb[0].mxu0
      %v2411 = vpop.f32.mrb[0].mxu0
      %v2412 = vadd.f32 0.0, %v2411
      %v2413 = vpop.f32.mrb[0].mxu0
      %2414 = vmatprep.mubr.bf16.mxu0 0
      %2415 = vmatmul.mubr.bf16.gmra.mrb[0].mxu0 %v2292
      %v2416 = vpop.f32.mrb[0].mxu0
      %v2417 = vadd.f32 0.0, %v2416
      %v2418 = vpop.f32.mrb[0].mxu0
      %v2419 = vpop.f32.mrb[0].mxu0
      %v2420 = vadd.f32 0.0, %v2419
      %v2421 = vpop.f32.mrb[0].mxu0
      %2422 = vdwg.mxu0
      %v2423 = vadd.f32 %v2093, %v2329
      %v2424 = vadd.f32 %v2094, %v2332
      %v2425 = vadd.f32 %v2095, %v2337
      %v2426 = vadd.f32 %v2096, %v2340
      %v2427 = vadd.f32 %v2097, %v2345
      %v2428 = vadd.f32 %v2098, %v2348
      %v2429 = vadd.f32 %v2099, %v2353
      %v2430 = vadd.f32 %v2100, %v2356
      %v2431 = vadd.f32 %v2101, %v2361
      %v2432 = vadd.f32 %v2102, %v2364
      %v2433 = vadd.f32 %v2103, %v2369
      %v2434 = vadd.f32 %v2104, %v2372
      %v2435 = vadd.f32 %v2105, %v2377
      %v2436 = vadd.f32 %v2106, %v2380
      %v2437 = vadd.f32 %v2107, %v2385
      %v2438 = vadd.f32 %v2108, %v2388
      %v2439 = vadd.f32 %v2109, %v2393
      %v2440 = vadd.f32 %v2110, %v2396
      %v2441 = vadd.f32 %v2111, %v2401
      %v2442 = vadd.f32 %v2112, %v2404
      %v2443 = vadd.f32 %v2113, %v2409
      %v2444 = vadd.f32 %v2114, %v2412
      %v2445 = vadd.f32 %v2115, %v2417
      %v2446 = vadd.f32 %v2116, %v2420
      %s2447 = sadd.s32 %s197, 2
      %s2448 = smul.u32 %s2447, 4
      %s2449 = smul.addr %s2448, 4
      %s2450 = scalar_lea.vmem %s184, %s2449
      %v2451 = vld [vmem:[%s2450] sm:$0xf]
      %v2452 = vld [vmem:[%s2450 + $0x4] sm:$0xf]
      %v2453 = vld [vmem:[%s2450 + $0x8] sm:$0xf]
      %v2454 = vld [vmem:[%s2450 + $0xc] sm:$0x1]
      %v2455 = vld [vmem:[%s2450 + $0x10] sm:$0xf]
      %v2456 = vld [vmem:[%s2450 + $0x14] sm:$0xf]
      %v2457 = vld [vmem:[%s2450 + $0x18] sm:$0xf]
      %v2458 = vld [vmem:[%s2450 + $0x1c] sm:$0x1]
      %v2459 = vld [vmem:[%s2450 + $0x20] sm:$0xf]
      %v2460 = vld [vmem:[%s2450 + $0x24] sm:$0xf]
      %v2461 = vld [vmem:[%s2450 + $0x28] sm:$0xf]
      %v2462 = vld [vmem:[%s2450 + $0x2c] sm:$0x1]
      %v2463 = vld [vmem:[%s2450 + $0x30] sm:$0xf]
      %v2464 = vld [vmem:[%s2450 + $0x34] sm:$0xf]
      %v2465 = vld [vmem:[%s2450 + $0x38] sm:$0xf]
      %v2466 = vld [vmem:[%s2450 + $0x3c] sm:$0x1]
      %v2467 = vld [vmem:[%s2450 + $0x40] sm:$0xf]
      %v2468 = vld [vmem:[%s2450 + $0x44] sm:$0xf]
      %v2469 = vld [vmem:[%s2450 + $0x48] sm:$0xf]
      %v2470 = vld [vmem:[%s2450 + $0x4c] sm:$0x1]
      %v2471 = vld [vmem:[%s2450 + $0x50] sm:$0xf]
      %v2472 = vld [vmem:[%s2450 + $0x54] sm:$0xf]
      %v2473 = vld [vmem:[%s2450 + $0x58] sm:$0xf]
      %v2474 = vld [vmem:[%s2450 + $0x5c] sm:$0x1]
      %v2475 = vld [vmem:[%s2450 + $0x60] sm:$0xf]
      %v2476 = vld [vmem:[%s2450 + $0x64] sm:$0xf]
      %v2477 = vld [vmem:[%s2450 + $0x68] sm:$0xf]
      %v2478 = vld [vmem:[%s2450 + $0x6c] sm:$0x1]
      %v2479 = vld [vmem:[%s2450 + $0x70] sm:$0xf]
      %v2480 = vld [vmem:[%s2450 + $0x74] sm:$0xf]
      %v2481 = vld [vmem:[%s2450 + $0x78] sm:$0xf]
      %v2482 = vld [vmem:[%s2450 + $0x7c] sm:$0x1]
      %s2483 = scalar_lea.vmem %s1, 96
      %v2484 = vld [vmem:[%s2483] sm:$0xf]
      %v2485 = vld [vmem:[%s2483 + $0x4] sm:$0xf]
      %v2486 = vld [vmem:[%s2483 + $0x8] sm:$0xf]
      %v2487 = vld [vmem:[%s2483 + $0xc] sm:$0xf]
      %v2512 = vunpack.c.l.b16 %v2451
      %v2513 = vunpack.c.l.b16 %v2452
      %v2514 = vunpack.c.l.b16 %v2453
      %v2515 = vunpack.c.l.b16 %v2455
      %v2516 = vunpack.c.l.b16 %v2456
      %v2517 = vunpack.c.l.b16 %v2457
      %v2518 = vunpack.c.l.b16 %v2459
      %v2519 = vunpack.c.l.b16 %v2460
      %v2520 = vunpack.c.l.b16 %v2461
      %v2521 = vunpack.c.l.b16 %v2463
      %v2522 = vunpack.c.l.b16 %v2464
      %v2523 = vunpack.c.l.b16 %v2465
      %v2524 = vunpack.c.l.b16 %v2467
      %v2525 = vunpack.c.l.b16 %v2468
      %v2526 = vunpack.c.l.b16 %v2469
      %v2527 = vunpack.c.l.b16 %v2471
      %v2528 = vunpack.c.l.b16 %v2472
      %v2529 = vunpack.c.l.b16 %v2473
      %v2530 = vunpack.c.l.b16 %v2475
      %v2531 = vunpack.c.l.b16 %v2476
      %v2532 = vunpack.c.l.b16 %v2477
      %v2533 = vunpack.c.l.b16 %v2479
      %v2534 = vunpack.c.l.b16 %v2480
      %v2535 = vunpack.c.l.b16 %v2481
      %v2536 = vpack.c.b16 %v2513, %v2512
      %v2537 = vpack.c.b16 %v2515, %v2514
      %v2538 = vpack.c.b16 %v2517, %v2516
      %v2539 = vpack.c.b16 %v2519, %v2518
      %v2540 = vpack.c.b16 %v2521, %v2520
      %v2541 = vpack.c.b16 %v2523, %v2522
      %v2542 = vpack.c.b16 %v2525, %v2524
      %v2543 = vpack.c.b16 %v2527, %v2526
      %v2544 = vpack.c.b16 %v2529, %v2528
      %v2545 = vpack.c.b16 %v2531, %v2530
      %v2546 = vpack.c.b16 %v2533, %v2532
      %v2547 = vpack.c.b16 %v2535, %v2534
      %v2552 = vunpack.c.l.b16 %v2484
      %v2553 = vunpack.c.l.b16 %v2485
      %v2554 = vunpack.c.l.b16 %v2486
      %v2555 = vunpack.c.l.b16 %v2487
      %v2556 = vpack.c.b16 %v2553, %v2552
      %v2557 = vpack.c.b16 %v2555, %v2554
      %v2561 = vsel %vm565, %v2536, 0
      %v2564 = vsel %vm565, %v2537, 0
      %v2567 = vsel %vm565, %v2538, 0
      %v2570 = vsel %vm565, %v2539, 0
      %v2573 = vsel %vm565, %v2540, 0
      %v2576 = vsel %vm565, %v2541, 0
      %v2579 = vsel %vm565, %v2542, 0
      %v2582 = vsel %vm565, %v2543, 0
      %v2585 = vsel %vm565, %v2544, 0
      %v2588 = vsel %vm565, %v2545, 0
      %v2591 = vsel %vm565, %v2546, 0
      %v2594 = vsel %vm565, %v2547, 0
      %2596 = vmatprep.subr.bf16.mxu0 0
      %2597 = vmatpush1.bf16.msra.mxu0 %v2556
      %2598 = vmatprep.subr.bf16.mxu0 0
      %2599 = vmatpush1.bf16.msra.mxu0 %v2557
      %2600 = vmatprep.subr.bf16.mxu0 0
      %2601 = vmatpush1.bf16.msra.mxu0 0
      %2602 = vmatprep.subr.bf16.mxu0 0
      %2603 = vmatpush1.bf16.msra.mxu0 0
      %2604 = vmatprep.subr.bf16.mxu0 0
      %2605 = vmatpush1.bf16.msra.mxu0 0
      %2606 = vmatprep.subr.bf16.mxu0 0
      %2607 = vmatpush1.bf16.msra.mxu0 0
      %2608 = vmatprep.subr.bf16.mxu0 0
      %2609 = vmatpush1.bf16.msra.mxu0 0
      %2610 = vmatprep.subr.bf16.mxu0 0
      %2611 = vmatpush1.bf16.msra.mxu0 0
      %2612 = vmatprep.subr.bf16.mxu0 0
      %2613 = vmatpush1.bf16.msra.mxu0 0
      %2614 = vmatprep.subr.bf16.mxu0 0
      %2615 = vmatpush1.bf16.msra.mxu0 0
      %2616 = vmatprep.subr.bf16.mxu0 0
      %2617 = vmatpush1.bf16.msra.mxu0 0
      %2618 = vmatprep.subr.bf16.mxu0 0
      %2619 = vmatpush1.bf16.msra.mxu0 0
      %2620 = vmatprep.subr.bf16.mxu0 0
      %2621 = vmatpush1.bf16.msra.mxu0 0
      %2622 = vmatprep.subr.bf16.mxu0 0
      %2623 = vmatpush1.bf16.msra.mxu0 0
      %2624 = vmatprep.subr.bf16.mxu0 0
      %2625 = vmatpush1.bf16.msra.mxu0 0
      %2626 = vmatprep.subr.bf16.mxu0 0
      %2627 = vmatpush1.bf16.msra.mxu0 0
      %2628 = vmatprep.mubr.bf16.mxu0 0
      %2629 = vmatmul.mubr.bf16.gmra.mrb[0].mxu0 %v2561
      %v2630 = vpop.f32.mrb[0].mxu0
      %v2631 = vadd.f32 0.0, %v2630
      %v2632 = vpop.f32.mrb[0].mxu0
      %v2633 = vpop.f32.mrb[0].mxu0
      %v2634 = vadd.f32 0.0, %v2633
      %v2635 = vpop.f32.mrb[0].mxu0
      %2636 = vmatprep.mubr.bf16.mxu0 0
      %2637 = vmatmul.mubr.bf16.gmra.mrb[0].mxu0 %v2564
      %v2638 = vpop.f32.mrb[0].mxu0
      %v2639 = vadd.f32 0.0, %v2638
      %v2640 = vpop.f32.mrb[0].mxu0
      %v2641 = vpop.f32.mrb[0].mxu0
      %v2642 = vadd.f32 0.0, %v2641
      %v2643 = vpop.f32.mrb[0].mxu0
      %2644 = vmatprep.mubr.bf16.mxu0 0
      %2645 = vmatmul.mubr.bf16.gmra.mrb[0].mxu0 %v2567
      %v2646 = vpop.f32.mrb[0].mxu0
      %v2647 = vadd.f32 0.0, %v2646
      %v2648 = vpop.f32.mrb[0].mxu0
      %v2649 = vpop.f32.mrb[0].mxu0
      %v2650 = vadd.f32 0.0, %v2649
      %v2651 = vpop.f32.mrb[0].mxu0
      %2652 = vmatprep.mubr.bf16.mxu0 0
      %2653 = vmatmul.mubr.bf16.gmra.mrb[0].mxu0 %v2570
      %v2654 = vpop.f32.mrb[0].mxu0
      %v2655 = vadd.f32 0.0, %v2654
      %v2656 = vpop.f32.mrb[0].mxu0
      %v2657 = vpop.f32.mrb[0].mxu0
      %v2658 = vadd.f32 0.0, %v2657
      %v2659 = vpop.f32.mrb[0].mxu0
      %2660 = vmatprep.mubr.bf16.mxu0 0
      %2661 = vmatmul.mubr.bf16.gmra.mrb[0].mxu0 %v2573
      %v2662 = vpop.f32.mrb[0].mxu0
      %v2663 = vadd.f32 0.0, %v2662
      %v2664 = vpop.f32.mrb[0].mxu0
      %v2665 = vpop.f32.mrb[0].mxu0
      %v2666 = vadd.f32 0.0, %v2665
      %v2667 = vpop.f32.mrb[0].mxu0
      %2668 = vmatprep.mubr.bf16.mxu0 0
      %2669 = vmatmul.mubr.bf16.gmra.mrb[0].mxu0 %v2576
      %v2670 = vpop.f32.mrb[0].mxu0
      %v2671 = vadd.f32 0.0, %v2670
      %v2672 = vpop.f32.mrb[0].mxu0
      %v2673 = vpop.f32.mrb[0].mxu0
      %v2674 = vadd.f32 0.0, %v2673
      %v2675 = vpop.f32.mrb[0].mxu0
      %2676 = vmatprep.mubr.bf16.mxu0 0
      %2677 = vmatmul.mubr.bf16.gmra.mrb[0].mxu0 %v2579
      %v2678 = vpop.f32.mrb[0].mxu0
      %v2679 = vadd.f32 0.0, %v2678
      %v2680 = vpop.f32.mrb[0].mxu0
      %v2681 = vpop.f32.mrb[0].mxu0
      %v2682 = vadd.f32 0.0, %v2681
      %v2683 = vpop.f32.mrb[0].mxu0
      %2684 = vmatprep.mubr.bf16.mxu0 0
      %2685 = vmatmul.mubr.bf16.gmra.mrb[0].mxu0 %v2582
      %v2686 = vpop.f32.mrb[0].mxu0
      %v2687 = vadd.f32 0.0, %v2686
      %v2688 = vpop.f32.mrb[0].mxu0
      %v2689 = vpop.f32.mrb[0].mxu0
      %v2690 = vadd.f32 0.0, %v2689
      %v2691 = vpop.f32.mrb[0].mxu0
      %2692 = vmatprep.mubr.bf16.mxu0 0
      %2693 = vmatmul.mubr.bf16.gmra.mrb[0].mxu0 %v2585
      %v2694 = vpop.f32.mrb[0].mxu0
      %v2695 = vadd.f32 0.0, %v2694
      %v2696 = vpop.f32.mrb[0].mxu0
      %v2697 = vpop.f32.mrb[0].mxu0
      %v2698 = vadd.f32 0.0, %v2697
      %v2699 = vpop.f32.mrb[0].mxu0
      %2700 = vmatprep.mubr.bf16.mxu0 0
      %2701 = vmatmul.mubr.bf16.gmra.mrb[0].mxu0 %v2588
      %v2702 = vpop.f32.mrb[0].mxu0
      %v2703 = vadd.f32 0.0, %v2702
      %v2704 = vpop.f32.mrb[0].mxu0
      %v2705 = vpop.f32.mrb[0].mxu0
      %v2706 = vadd.f32 0.0, %v2705
      %v2707 = vpop.f32.mrb[0].mxu0
      %2708 = vmatprep.mubr.bf16.mxu0 0
      %2709 = vmatmul.mubr.bf16.gmra.mrb[0].mxu0 %v2591
      %v2710 = vpop.f32.mrb[0].mxu0
      %v2711 = vadd.f32 0.0, %v2710
      %v2712 = vpop.f32.mrb[0].mxu0
      %v2713 = vpop.f32.mrb[0].mxu0
      %v2714 = vadd.f32 0.0, %v2713
      %v2715 = vpop.f32.mrb[0].mxu0
      %2716 = vmatprep.mubr.bf16.mxu0 0
      %2717 = vmatmul.mubr.bf16.gmra.mrb[0].mxu0 %v2594
      %v2718 = vpop.f32.mrb[0].mxu0
      %v2719 = vadd.f32 0.0, %v2718
      %v2720 = vpop.f32.mrb[0].mxu0
      %v2721 = vpop.f32.mrb[0].mxu0
      %v2722 = vadd.f32 0.0, %v2721
      %v2723 = vpop.f32.mrb[0].mxu0
      %2724 = vdwg.mxu0
      %v2725 = vadd.f32 %v2423, %v2631
      %v2726 = vadd.f32 %v2424, %v2634
      %v2727 = vadd.f32 %v2425, %v2639
      %v2728 = vadd.f32 %v2426, %v2642
      %v2729 = vadd.f32 %v2427, %v2647
      %v2730 = vadd.f32 %v2428, %v2650
      %v2731 = vadd.f32 %v2429, %v2655
      %v2732 = vadd.f32 %v2430, %v2658
      %v2733 = vadd.f32 %v2431, %v2663
      %v2734 = vadd.f32 %v2432, %v2666
      %v2735 = vadd.f32 %v2433, %v2671
      %v2736 = vadd.f32 %v2434, %v2674
      %v2737 = vadd.f32 %v2435, %v2679
      %v2738 = vadd.f32 %v2436, %v2682
      %v2739 = vadd.f32 %v2437, %v2687
      %v2740 = vadd.f32 %v2438, %v2690
      %v2741 = vadd.f32 %v2439, %v2695
      %v2742 = vadd.f32 %v2440, %v2698
      %v2743 = vadd.f32 %v2441, %v2703
      %v2744 = vadd.f32 %v2442, %v2706
      %v2745 = vadd.f32 %v2443, %v2711
      %v2746 = vadd.f32 %v2444, %v2714
      %v2747 = vadd.f32 %v2445, %v2719
      %v2748 = vadd.f32 %v2446, %v2722
      %v2750 = vshrl.u32 %v2451, 16
      %v2752 = vrot.slane %v2750, 4
      %v2753 = vshll.u32 %v2451, 16
      %v2755 = vrot.slane %v2753, 5
      %v2756 = vor.u32 %v2752, %v2755
      %v2757 = vrot.slane %v2756, 4
      %v2759 = vshll.u32 %v2452, 16
      %v2761 = vrot.slane %v2759, 5
      %v2762 = vsel %vm239, %v2757, %v2761
      %v2763 = vshrl.u32 %v2452, 16
      %v2765 = vrot.slane %v2763, 4
      %v2766 = vor.u32 %v2765, %v2761
      %v2767 = vrot.slane %v2766, 4
      %v2769 = vshll.u32 %v2453, 16
      %v2771 = vrot.slane %v2769, 5
      %v2772 = vsel %vm239, %v2767, %v2771
      %v2773 = vshrl.u32 %v2453, 16
      %v2775 = vrot.slane %v2773, 4
      %v2776 = vor.u32 %v2775, %v2771
      %v2777 = vrot.slane %v2776, 4
      %v2779 = vshll.u32 %v2454, 16
      %v2781 = vrot.slane %v2779, 5
      %v2782 = vsel %vm239, %v2777, %v2781
      %v2784 = vshrl.u32 %v2455, 16
      %v2786 = vrot.slane %v2784, 4
      %v2787 = vshll.u32 %v2455, 16
      %v2789 = vrot.slane %v2787, 5
      %v2790 = vor.u32 %v2786, %v2789
      %v2791 = vrot.slane %v2790, 4
      %v2793 = vshll.u32 %v2456, 16
      %v2795 = vrot.slane %v2793, 5
      %v2796 = vsel %vm239, %v2791, %v2795
      %v2797 = vshrl.u32 %v2456, 16
      %v2799 = vrot.slane %v2797, 4
      %v2800 = vor.u32 %v2799, %v2795
      %v2801 = vrot.slane %v2800, 4
      %v2803 = vshll.u32 %v2457, 16
      %v2805 = vrot.slane %v2803, 5
      %v2806 = vsel %vm239, %v2801, %v2805
      %v2807 = vshrl.u32 %v2457, 16
      %v2809 = vrot.slane %v2807, 4
      %v2810 = vor.u32 %v2809, %v2805
      %v2811 = vrot.slane %v2810, 4
      %v2813 = vshll.u32 %v2458, 16
      %v2815 = vrot.slane %v2813, 5
      %v2816 = vsel %vm239, %v2811, %v2815
      %v2818 = vshrl.u32 %v2459, 16
      %v2820 = vrot.slane %v2818, 4
      %v2821 = vshll.u32 %v2459, 16
      %v2823 = vrot.slane %v2821, 5
      %v2824 = vor.u32 %v2820, %v2823
      %v2825 = vrot.slane %v2824, 4
      %v2827 = vshll.u32 %v2460, 16
      %v2829 = vrot.slane %v2827, 5
      %v2830 = vsel %vm239, %v2825, %v2829
      %v2831 = vshrl.u32 %v2460, 16
      %v2833 = vrot.slane %v2831, 4
      %v2834 = vor.u32 %v2833, %v2829
      %v2835 = vrot.slane %v2834, 4
      %v2837 = vshll.u32 %v2461, 16
      %v2839 = vrot.slane %v2837, 5
      %v2840 = vsel %vm239, %v2835, %v2839
      %v2841 = vshrl.u32 %v2461, 16
      %v2843 = vrot.slane %v2841, 4
      %v2844 = vor.u32 %v2843, %v2839
      %v2845 = vrot.slane %v2844, 4
      %v2847 = vshll.u32 %v2462, 16
      %v2849 = vrot.slane %v2847, 5
      %v2850 = vsel %vm239, %v2845, %v2849
      %v2852 = vshrl.u32 %v2463, 16
      %v2854 = vrot.slane %v2852, 4
      %v2855 = vshll.u32 %v2463, 16
      %v2857 = vrot.slane %v2855, 5
      %v2858 = vor.u32 %v2854, %v2857
      %v2859 = vrot.slane %v2858, 4
      %v2861 = vshll.u32 %v2464, 16
      %v2863 = vrot.slane %v2861, 5
      %v2864 = vsel %vm239, %v2859, %v2863
      %v2865 = vshrl.u32 %v2464, 16
      %v2867 = vrot.slane %v2865, 4
      %v2868 = vor.u32 %v2867, %v2863
      %v2869 = vrot.slane %v2868, 4
      %v2871 = vshll.u32 %v2465, 16
      %v2873 = vrot.slane %v2871, 5
      %v2874 = vsel %vm239, %v2869, %v2873
      %v2875 = vshrl.u32 %v2465, 16
      %v2877 = vrot.slane %v2875, 4
      %v2878 = vor.u32 %v2877, %v2873
      %v2879 = vrot.slane %v2878, 4
      %v2881 = vshll.u32 %v2466, 16
      %v2883 = vrot.slane %v2881, 5
      %v2884 = vsel %vm239, %v2879, %v2883
      %v2886 = vshrl.u32 %v2467, 16
      %v2888 = vrot.slane %v2886, 4
      %v2889 = vshll.u32 %v2467, 16
      %v2891 = vrot.slane %v2889, 5
      %v2892 = vor.u32 %v2888, %v2891
      %v2893 = vrot.slane %v2892, 4
      %v2895 = vshll.u32 %v2468, 16
      %v2897 = vrot.slane %v2895, 5
      %v2898 = vsel %vm239, %v2893, %v2897
      %v2899 = vshrl.u32 %v2468, 16
      %v2901 = vrot.slane %v2899, 4
      %v2902 = vor.u32 %v2901, %v2897
      %v2903 = vrot.slane %v2902, 4
      %v2905 = vshll.u32 %v2469, 16
      %v2907 = vrot.slane %v2905, 5
      %v2908 = vsel %vm239, %v2903, %v2907
      %v2909 = vshrl.u32 %v2469, 16
      %v2911 = vrot.slane %v2909, 4
      %v2912 = vor.u32 %v2911, %v2907
      %v2913 = vrot.slane %v2912, 4
      %v2915 = vshll.u32 %v2470, 16
      %v2917 = vrot.slane %v2915, 5
      %v2918 = vsel %vm239, %v2913, %v2917
      %v2920 = vshrl.u32 %v2471, 16
      %v2922 = vrot.slane %v2920, 4
      %v2923 = vshll.u32 %v2471, 16
      %v2925 = vrot.slane %v2923, 5
      %v2926 = vor.u32 %v2922, %v2925
      %v2927 = vrot.slane %v2926, 4
      %v2929 = vshll.u32 %v2472, 16
      %v2931 = vrot.slane %v2929, 5
      %v2932 = vsel %vm239, %v2927, %v2931
      %v2933 = vshrl.u32 %v2472, 16
      %v2935 = vrot.slane %v2933, 4
      %v2936 = vor.u32 %v2935, %v2931
      %v2937 = vrot.slane %v2936, 4
      %v2939 = vshll.u32 %v2473, 16
      %v2941 = vrot.slane %v2939, 5
      %v2942 = vsel %vm239, %v2937, %v2941
      %v2943 = vshrl.u32 %v2473, 16
      %v2945 = vrot.slane %v2943, 4
      %v2946 = vor.u32 %v2945, %v2941
      %v2947 = vrot.slane %v2946, 4
      %v2949 = vshll.u32 %v2474, 16
      %v2951 = vrot.slane %v2949, 5
      %v2952 = vsel %vm239, %v2947, %v2951
      %v2954 = vshrl.u32 %v2475, 16
      %v2956 = vrot.slane %v2954, 4
      %v2957 = vshll.u32 %v2475, 16
      %v2959 = vrot.slane %v2957, 5
      %v2960 = vor.u32 %v2956, %v2959
      %v2961 = vrot.slane %v2960, 4
      %v2963 = vshll.u32 %v2476, 16
      %v2965 = vrot.slane %v2963, 5
      %v2966 = vsel %vm239, %v2961, %v2965
      %v2967 = vshrl.u32 %v2476, 16
      %v2969 = vrot.slane %v2967, 4
      %v2970 = vor.u32 %v2969, %v2965
      %v2971 = vrot.slane %v2970, 4
      %v2973 = vshll.u32 %v2477, 16
      %v2975 = vrot.slane %v2973, 5
      %v2976 = vsel %vm239, %v2971, %v2975
      %v2977 = vshrl.u32 %v2477, 16
      %v2979 = vrot.slane %v2977, 4
      %v2980 = vor.u32 %v2979, %v2975
      %v2981 = vrot.slane %v2980, 4
      %v2983 = vshll.u32 %v2478, 16
      %v2985 = vrot.slane %v2983, 5
      %v2986 = vsel %vm239, %v2981, %v2985
      %v2988 = vshrl.u32 %v2479, 16
      %v2990 = vrot.slane %v2988, 4
      %v2991 = vshll.u32 %v2479, 16
      %v2993 = vrot.slane %v2991, 5
      %v2994 = vor.u32 %v2990, %v2993
      %v2995 = vrot.slane %v2994, 4
      %v2997 = vshll.u32 %v2480, 16
      %v2999 = vrot.slane %v2997, 5
      %v3000 = vsel %vm239, %v2995, %v2999
      %v3001 = vshrl.u32 %v2480, 16
      %v3003 = vrot.slane %v3001, 4
      %v3004 = vor.u32 %v3003, %v2999
      %v3005 = vrot.slane %v3004, 4
      %v3007 = vshll.u32 %v2481, 16
      %v3009 = vrot.slane %v3007, 5
      %v3010 = vsel %vm239, %v3005, %v3009
      %v3011 = vshrl.u32 %v2481, 16
      %v3013 = vrot.slane %v3011, 4
      %v3014 = vor.u32 %v3013, %v3009
      %v3015 = vrot.slane %v3014, 4
      %v3017 = vshll.u32 %v2482, 16
      %v3019 = vrot.slane %v3017, 5
      %v3020 = vsel %vm239, %v3015, %v3019
      %s3021 = scalar_lea.vmem %s1, 112
      %v3022 = vld [vmem:[%s3021] sm:$0xf]
      %v3023 = vld [vmem:[%s3021 + $0x4] sm:$0xf]
      %v3024 = vld [vmem:[%s3021 + $0x8] sm:$0xf]
      %v3025 = vld [vmem:[%s3021 + $0xc] sm:$0xf]
      %v3026 = vunpack.c.l.b16 %v2762
      %v3027 = vunpack.c.l.b16 %v2772
      %v3028 = vunpack.c.l.b16 %v2782
      %v3029 = vunpack.c.l.b16 %v2796
      %v3030 = vunpack.c.l.b16 %v2806
      %v3031 = vunpack.c.l.b16 %v2816
      %v3032 = vunpack.c.l.b16 %v2830
      %v3033 = vunpack.c.l.b16 %v2840
      %v3034 = vunpack.c.l.b16 %v2850
      %v3035 = vunpack.c.l.b16 %v2864
      %v3036 = vunpack.c.l.b16 %v2874
      %v3037 = vunpack.c.l.b16 %v2884
      %v3038 = vunpack.c.l.b16 %v2898
      %v3039 = vunpack.c.l.b16 %v2908
      %v3040 = vunpack.c.l.b16 %v2918
      %v3041 = vunpack.c.l.b16 %v2932
      %v3042 = vunpack.c.l.b16 %v2942
      %v3043 = vunpack.c.l.b16 %v2952
      %v3044 = vunpack.c.l.b16 %v2966
      %v3045 = vunpack.c.l.b16 %v2976
      %v3046 = vunpack.c.l.b16 %v2986
      %v3047 = vunpack.c.l.b16 %v3000
      %v3048 = vunpack.c.l.b16 %v3010
      %v3049 = vunpack.c.l.b16 %v3020
      %v3050 = vpack.c.b16 %v3027, %v3026
      %v3051 = vpack.c.b16 %v3029, %v3028
      %v3052 = vpack.c.b16 %v3031, %v3030
      %v3053 = vpack.c.b16 %v3033, %v3032
      %v3054 = vpack.c.b16 %v3035, %v3034
      %v3055 = vpack.c.b16 %v3037, %v3036
      %v3056 = vpack.c.b16 %v3039, %v3038
      %v3057 = vpack.c.b16 %v3041, %v3040
      %v3058 = vpack.c.b16 %v3043, %v3042
      %v3059 = vpack.c.b16 %v3045, %v3044
      %v3060 = vpack.c.b16 %v3047, %v3046
      %v3061 = vpack.c.b16 %v3049, %v3048
      %v3066 = vunpack.c.l.b16 %v3022
      %v3067 = vunpack.c.l.b16 %v3023
      %v3068 = vunpack.c.l.b16 %v3024
      %v3069 = vunpack.c.l.b16 %v3025
      %v3070 = vpack.c.b16 %v3067, %v3066
      %v3071 = vpack.c.b16 %v3069, %v3068
      %v3075 = vsel %vm565, %v3050, 0
      %v3078 = vsel %vm565, %v3051, 0
      %v3081 = vsel %vm565, %v3052, 0
      %v3084 = vsel %vm565, %v3053, 0
      %v3087 = vsel %vm565, %v3054, 0
      %v3090 = vsel %vm565, %v3055, 0
      %v3093 = vsel %vm565, %v3056, 0
      %v3096 = vsel %vm565, %v3057, 0
      %v3099 = vsel %vm565, %v3058, 0
      %v3102 = vsel %vm565, %v3059, 0
      %v3105 = vsel %vm565, %v3060, 0
      %v3108 = vsel %vm565, %v3061, 0
      %3110 = vmatprep.subr.bf16.mxu0 0
      %3111 = vmatpush1.bf16.msra.mxu0 %v3070
      %3112 = vmatprep.subr.bf16.mxu0 0
      %3113 = vmatpush1.bf16.msra.mxu0 %v3071
      %3114 = vmatprep.subr.bf16.mxu0 0
      %3115 = vmatpush1.bf16.msra.mxu0 0
      %3116 = vmatprep.subr.bf16.mxu0 0
      %3117 = vmatpush1.bf16.msra.mxu0 0
      %3118 = vmatprep.subr.bf16.mxu0 0
      %3119 = vmatpush1.bf16.msra.mxu0 0
      %3120 = vmatprep.subr.bf16.mxu0 0
      %3121 = vmatpush1.bf16.msra.mxu0 0
      %3122 = vmatprep.subr.bf16.mxu0 0
      %3123 = vmatpush1.bf16.msra.mxu0 0
      %3124 = vmatprep.subr.bf16.mxu0 0
      %3125 = vmatpush1.bf16.msra.mxu0 0
      %3126 = vmatprep.subr.bf16.mxu0 0
      %3127 = vmatpush1.bf16.msra.mxu0 0
      %3128 = vmatprep.subr.bf16.mxu0 0
      %3129 = vmatpush1.bf16.msra.mxu0 0
      %3130 = vmatprep.subr.bf16.mxu0 0
      %3131 = vmatpush1.bf16.msra.mxu0 0
      %3132 = vmatprep.subr.bf16.mxu0 0
      %3133 = vmatpush1.bf16.msra.mxu0 0
      %3134 = vmatprep.subr.bf16.mxu0 0
      %3135 = vmatpush1.bf16.msra.mxu0 0
      %3136 = vmatprep.subr.bf16.mxu0 0
      %3137 = vmatpush1.bf16.msra.mxu0 0
      %3138 = vmatprep.subr.bf16.mxu0 0
      %3139 = vmatpush1.bf16.msra.mxu0 0
      %3140 = vmatprep.subr.bf16.mxu0 0
      %3141 = vmatpush1.bf16.msra.mxu0 0
      %3142 = vmatprep.mubr.bf16.mxu0 0
      %3143 = vmatmul.mubr.bf16.gmra.mrb[0].mxu0 %v3075
      %v3144 = vpop.f32.mrb[0].mxu0
      %v3145 = vadd.f32 0.0, %v3144
      %v3146 = vpop.f32.mrb[0].mxu0
      %v3147 = vpop.f32.mrb[0].mxu0
      %v3148 = vadd.f32 0.0, %v3147
      %v3149 = vpop.f32.mrb[0].mxu0
      %3150 = vmatprep.mubr.bf16.mxu0 0
      %3151 = vmatmul.mubr.bf16.gmra.mrb[0].mxu0 %v3078
      %v3152 = vpop.f32.mrb[0].mxu0
      %v3153 = vadd.f32 0.0, %v3152
      %v3154 = vpop.f32.mrb[0].mxu0
      %v3155 = vpop.f32.mrb[0].mxu0
      %v3156 = vadd.f32 0.0, %v3155
      %v3157 = vpop.f32.mrb[0].mxu0
      %3158 = vmatprep.mubr.bf16.mxu0 0
      %3159 = vmatmul.mubr.bf16.gmra.mrb[0].mxu0 %v3081
      %v3160 = vpop.f32.mrb[0].mxu0
      %v3161 = vadd.f32 0.0, %v3160
      %v3162 = vpop.f32.mrb[0].mxu0
      %v3163 = vpop.f32.mrb[0].mxu0
      %v3164 = vadd.f32 0.0, %v3163
      %v3165 = vpop.f32.mrb[0].mxu0
      %3166 = vmatprep.mubr.bf16.mxu0 0
      %3167 = vmatmul.mubr.bf16.gmra.mrb[0].mxu0 %v3084
      %v3168 = vpop.f32.mrb[0].mxu0
      %v3169 = vadd.f32 0.0, %v3168
      %v3170 = vpop.f32.mrb[0].mxu0
      %v3171 = vpop.f32.mrb[0].mxu0
      %v3172 = vadd.f32 0.0, %v3171
      %v3173 = vpop.f32.mrb[0].mxu0
      %3174 = vmatprep.mubr.bf16.mxu0 0
      %3175 = vmatmul.mubr.bf16.gmra.mrb[0].mxu0 %v3087
      %v3176 = vpop.f32.mrb[0].mxu0
      %v3177 = vadd.f32 0.0, %v3176
      %v3178 = vpop.f32.mrb[0].mxu0
      %v3179 = vpop.f32.mrb[0].mxu0
      %v3180 = vadd.f32 0.0, %v3179
      %v3181 = vpop.f32.mrb[0].mxu0
      %3182 = vmatprep.mubr.bf16.mxu0 0
      %3183 = vmatmul.mubr.bf16.gmra.mrb[0].mxu0 %v3090
      %v3184 = vpop.f32.mrb[0].mxu0
      %v3185 = vadd.f32 0.0, %v3184
      %v3186 = vpop.f32.mrb[0].mxu0
      %v3187 = vpop.f32.mrb[0].mxu0
      %v3188 = vadd.f32 0.0, %v3187
      %v3189 = vpop.f32.mrb[0].mxu0
      %3190 = vmatprep.mubr.bf16.mxu0 0
      %3191 = vmatmul.mubr.bf16.gmra.mrb[0].mxu0 %v3093
      %v3192 = vpop.f32.mrb[0].mxu0
      %v3193 = vadd.f32 0.0, %v3192
      %v3194 = vpop.f32.mrb[0].mxu0
      %v3195 = vpop.f32.mrb[0].mxu0
      %v3196 = vadd.f32 0.0, %v3195
      %v3197 = vpop.f32.mrb[0].mxu0
      %3198 = vmatprep.mubr.bf16.mxu0 0
      %3199 = vmatmul.mubr.bf16.gmra.mrb[0].mxu0 %v3096
      %v3200 = vpop.f32.mrb[0].mxu0
      %v3201 = vadd.f32 0.0, %v3200
      %v3202 = vpop.f32.mrb[0].mxu0
      %v3203 = vpop.f32.mrb[0].mxu0
      %v3204 = vadd.f32 0.0, %v3203
      %v3205 = vpop.f32.mrb[0].mxu0
      %3206 = vmatprep.mubr.bf16.mxu0 0
      %3207 = vmatmul.mubr.bf16.gmra.mrb[0].mxu0 %v3099
      %v3208 = vpop.f32.mrb[0].mxu0
      %v3209 = vadd.f32 0.0, %v3208
      %v3210 = vpop.f32.mrb[0].mxu0
      %v3211 = vpop.f32.mrb[0].mxu0
      %v3212 = vadd.f32 0.0, %v3211
      %v3213 = vpop.f32.mrb[0].mxu0
      %3214 = vmatprep.mubr.bf16.mxu0 0
      %3215 = vmatmul.mubr.bf16.gmra.mrb[0].mxu0 %v3102
      %v3216 = vpop.f32.mrb[0].mxu0
      %v3217 = vadd.f32 0.0, %v3216
      %v3218 = vpop.f32.mrb[0].mxu0
      %v3219 = vpop.f32.mrb[0].mxu0
      %v3220 = vadd.f32 0.0, %v3219
      %v3221 = vpop.f32.mrb[0].mxu0
      %3222 = vmatprep.mubr.bf16.mxu0 0
      %3223 = vmatmul.mubr.bf16.gmra.mrb[0].mxu0 %v3105
      %v3224 = vpop.f32.mrb[0].mxu0
      %v3225 = vadd.f32 0.0, %v3224
      %v3226 = vpop.f32.mrb[0].mxu0
      %v3227 = vpop.f32.mrb[0].mxu0
      %v3228 = vadd.f32 0.0, %v3227
      %v3229 = vpop.f32.mrb[0].mxu0
      %3230 = vmatprep.mubr.bf16.mxu0 0
      %3231 = vmatmul.mubr.bf16.gmra.mrb[0].mxu0 %v3108
      %v3232 = vpop.f32.mrb[0].mxu0
      %v3233 = vadd.f32 0.0, %v3232
      %v3234 = vpop.f32.mrb[0].mxu0
      %v3235 = vpop.f32.mrb[0].mxu0
      %v3236 = vadd.f32 0.0, %v3235
      %v3237 = vpop.f32.mrb[0].mxu0
      %3238 = vdwg.mxu0
      %v3239 = vadd.f32 %v2725, %v3145
      %v3240 = vadd.f32 %v2726, %v3148
      %v3241 = vadd.f32 %v2727, %v3153
      %v3242 = vadd.f32 %v2728, %v3156
      %v3243 = vadd.f32 %v2729, %v3161
      %v3244 = vadd.f32 %v2730, %v3164
      %v3245 = vadd.f32 %v2731, %v3169
      %v3246 = vadd.f32 %v2732, %v3172
      %v3247 = vadd.f32 %v2733, %v3177
      %v3248 = vadd.f32 %v2734, %v3180
      %v3249 = vadd.f32 %v2735, %v3185
      %v3250 = vadd.f32 %v2736, %v3188
      %v3251 = vadd.f32 %v2737, %v3193
      %v3252 = vadd.f32 %v2738, %v3196
      %v3253 = vadd.f32 %v2739, %v3201
      %v3254 = vadd.f32 %v2740, %v3204
      %v3255 = vadd.f32 %v2741, %v3209
      %v3256 = vadd.f32 %v2742, %v3212
      %v3257 = vadd.f32 %v2743, %v3217
      %v3258 = vadd.f32 %v2744, %v3220
      %v3259 = vadd.f32 %v2745, %v3225
      %v3260 = vadd.f32 %v2746, %v3228
      %v3261 = vadd.f32 %v2747, %v3233
      %v3262 = vadd.f32 %v2748, %v3236
      %v3271 = vrot.slane %v2451, 5
      %v3272 = vrot.slane %v3271, 4
      %v3273 = vrot.slane %v2452, 5
      %v3274 = vsel %vm978, %v3272, %v3273
      %v3275 = vrot.slane %v3273, 4
      %v3276 = vrot.slane %v2453, 5
      %v3277 = vsel %vm978, %v3275, %v3276
      %v3278 = vrot.slane %v3276, 4
      %v3279 = vrot.slane %v2454, 5
      %v3280 = vsel %vm978, %v3278, %v3279
      %v3281 = vrot.slane %v2455, 5
      %v3282 = vrot.slane %v3281, 4
      %v3283 = vrot.slane %v2456, 5
      %v3284 = vsel %vm978, %v3282, %v3283
      %v3285 = vrot.slane %v3283, 4
      %v3286 = vrot.slane %v2457, 5
      %v3287 = vsel %vm978, %v3285, %v3286
      %v3288 = vrot.slane %v3286, 4
      %v3289 = vrot.slane %v2458, 5
      %v3290 = vsel %vm978, %v3288, %v3289
      %v3291 = vrot.slane %v2459, 5
      %v3292 = vrot.slane %v3291, 4
      %v3293 = vrot.slane %v2460, 5
      %v3294 = vsel %vm978, %v3292, %v3293
      %v3295 = vrot.slane %v3293, 4
      %v3296 = vrot.slane %v2461, 5
      %v3297 = vsel %vm978, %v3295, %v3296
      %v3298 = vrot.slane %v3296, 4
      %v3299 = vrot.slane %v2462, 5
      %v3300 = vsel %vm978, %v3298, %v3299
      %v3301 = vrot.slane %v2463, 5
      %v3302 = vrot.slane %v3301, 4
      %v3303 = vrot.slane %v2464, 5
      %v3304 = vsel %vm978, %v3302, %v3303
      %v3305 = vrot.slane %v3303, 4
      %v3306 = vrot.slane %v2465, 5
      %v3307 = vsel %vm978, %v3305, %v3306
      %v3308 = vrot.slane %v3306, 4
      %v3309 = vrot.slane %v2466, 5
      %v3310 = vsel %vm978, %v3308, %v3309
      %v3311 = vrot.slane %v2467, 5
      %v3312 = vrot.slane %v3311, 4
      %v3313 = vrot.slane %v2468, 5
      %v3314 = vsel %vm978, %v3312, %v3313
      %v3315 = vrot.slane %v3313, 4
      %v3316 = vrot.slane %v2469, 5
      %v3317 = vsel %vm978, %v3315, %v3316
      %v3318 = vrot.slane %v3316, 4
      %v3319 = vrot.slane %v2470, 5
      %v3320 = vsel %vm978, %v3318, %v3319
      %v3321 = vrot.slane %v2471, 5
      %v3322 = vrot.slane %v3321, 4
      %v3323 = vrot.slane %v2472, 5
      %v3324 = vsel %vm978, %v3322, %v3323
      %v3325 = vrot.slane %v3323, 4
      %v3326 = vrot.slane %v2473, 5
      %v3327 = vsel %vm978, %v3325, %v3326
      %v3328 = vrot.slane %v3326, 4
      %v3329 = vrot.slane %v2474, 5
      %v3330 = vsel %vm978, %v3328, %v3329
      %v3331 = vrot.slane %v2475, 5
      %v3332 = vrot.slane %v3331, 4
      %v3333 = vrot.slane %v2476, 5
      %v3334 = vsel %vm978, %v3332, %v3333
      %v3335 = vrot.slane %v3333, 4
      %v3336 = vrot.slane %v2477, 5
      %v3337 = vsel %vm978, %v3335, %v3336
      %v3338 = vrot.slane %v3336, 4
      %v3339 = vrot.slane %v2478, 5
      %v3340 = vsel %vm978, %v3338, %v3339
      %v3341 = vrot.slane %v2479, 5
      %v3342 = vrot.slane %v3341, 4
      %v3343 = vrot.slane %v2480, 5
      %v3344 = vsel %vm978, %v3342, %v3343
      %v3345 = vrot.slane %v3343, 4
      %v3346 = vrot.slane %v2481, 5
      %v3347 = vsel %vm978, %v3345, %v3346
      %v3348 = vrot.slane %v3346, 4
      %v3349 = vrot.slane %v2482, 5
      %v3350 = vsel %vm978, %v3348, %v3349
      %s3351 = scalar_lea.vmem %s1, 128
      %v3352 = vld [vmem:[%s3351] sm:$0xf]
      %v3353 = vld [vmem:[%s3351 + $0x4] sm:$0xf]
      %v3354 = vld [vmem:[%s3351 + $0x8] sm:$0xf]
      %v3355 = vld [vmem:[%s3351 + $0xc] sm:$0xf]
      %v3356 = vunpack.c.l.b16 %v3274
      %v3357 = vunpack.c.l.b16 %v3277
      %v3358 = vunpack.c.l.b16 %v3280
      %v3359 = vunpack.c.l.b16 %v3284
      %v3360 = vunpack.c.l.b16 %v3287
      %v3361 = vunpack.c.l.b16 %v3290
      %v3362 = vunpack.c.l.b16 %v3294
      %v3363 = vunpack.c.l.b16 %v3297
      %v3364 = vunpack.c.l.b16 %v3300
      %v3365 = vunpack.c.l.b16 %v3304
      %v3366 = vunpack.c.l.b16 %v3307
      %v3367 = vunpack.c.l.b16 %v3310
      %v3368 = vunpack.c.l.b16 %v3314
      %v3369 = vunpack.c.l.b16 %v3317
      %v3370 = vunpack.c.l.b16 %v3320
      %v3371 = vunpack.c.l.b16 %v3324
      %v3372 = vunpack.c.l.b16 %v3327
      %v3373 = vunpack.c.l.b16 %v3330
      %v3374 = vunpack.c.l.b16 %v3334
      %v3375 = vunpack.c.l.b16 %v3337
      %v3376 = vunpack.c.l.b16 %v3340
      %v3377 = vunpack.c.l.b16 %v3344
      %v3378 = vunpack.c.l.b16 %v3347
      %v3379 = vunpack.c.l.b16 %v3350
      %v3380 = vpack.c.b16 %v3357, %v3356
      %v3381 = vpack.c.b16 %v3359, %v3358
      %v3382 = vpack.c.b16 %v3361, %v3360
      %v3383 = vpack.c.b16 %v3363, %v3362
      %v3384 = vpack.c.b16 %v3365, %v3364
      %v3385 = vpack.c.b16 %v3367, %v3366
      %v3386 = vpack.c.b16 %v3369, %v3368
      %v3387 = vpack.c.b16 %v3371, %v3370
      %v3388 = vpack.c.b16 %v3373, %v3372
      %v3389 = vpack.c.b16 %v3375, %v3374
      %v3390 = vpack.c.b16 %v3377, %v3376
      %v3391 = vpack.c.b16 %v3379, %v3378
      %v3396 = vunpack.c.l.b16 %v3352
      %v3397 = vunpack.c.l.b16 %v3353
      %v3398 = vunpack.c.l.b16 %v3354
      %v3399 = vunpack.c.l.b16 %v3355
      %v3400 = vpack.c.b16 %v3397, %v3396
      %v3401 = vpack.c.b16 %v3399, %v3398
      %v3405 = vsel %vm565, %v3380, 0
      %v3408 = vsel %vm565, %v3381, 0
      %v3411 = vsel %vm565, %v3382, 0
      %v3414 = vsel %vm565, %v3383, 0
      %v3417 = vsel %vm565, %v3384, 0
      %v3420 = vsel %vm565, %v3385, 0
      %v3423 = vsel %vm565, %v3386, 0
      %v3426 = vsel %vm565, %v3387, 0
      %v3429 = vsel %vm565, %v3388, 0
      %v3432 = vsel %vm565, %v3389, 0
      %v3435 = vsel %vm565, %v3390, 0
      %v3438 = vsel %vm565, %v3391, 0
      %3440 = vmatprep.subr.bf16.mxu0 0
      %3441 = vmatpush1.bf16.msra.mxu0 %v3400
      %3442 = vmatprep.subr.bf16.mxu0 0
      %3443 = vmatpush1.bf16.msra.mxu0 %v3401
      %3444 = vmatprep.subr.bf16.mxu0 0
      %3445 = vmatpush1.bf16.msra.mxu0 0
      %3446 = vmatprep.subr.bf16.mxu0 0
      %3447 = vmatpush1.bf16.msra.mxu0 0
      %3448 = vmatprep.subr.bf16.mxu0 0
      %3449 = vmatpush1.bf16.msra.mxu0 0
      %3450 = vmatprep.subr.bf16.mxu0 0
      %3451 = vmatpush1.bf16.msra.mxu0 0
      %3452 = vmatprep.subr.bf16.mxu0 0
      %3453 = vmatpush1.bf16.msra.mxu0 0
      %3454 = vmatprep.subr.bf16.mxu0 0
      %3455 = vmatpush1.bf16.msra.mxu0 0
      %3456 = vmatprep.subr.bf16.mxu0 0
      %3457 = vmatpush1.bf16.msra.mxu0 0
      %3458 = vmatprep.subr.bf16.mxu0 0
      %3459 = vmatpush1.bf16.msra.mxu0 0
      %3460 = vmatprep.subr.bf16.mxu0 0
      %3461 = vmatpush1.bf16.msra.mxu0 0
      %3462 = vmatprep.subr.bf16.mxu0 0
      %3463 = vmatpush1.bf16.msra.mxu0 0
      %3464 = vmatprep.subr.bf16.mxu0 0
      %3465 = vmatpush1.bf16.msra.mxu0 0
      %3466 = vmatprep.subr.bf16.mxu0 0
      %3467 = vmatpush1.bf16.msra.mxu0 0
      %3468 = vmatprep.subr.bf16.mxu0 0
      %3469 = vmatpush1.bf16.msra.mxu0 0
      %3470 = vmatprep.subr.bf16.mxu0 0
      %3471 = vmatpush1.bf16.msra.mxu0 0
      %3472 = vmatprep.mubr.bf16.mxu0 0
      %3473 = vmatmul.mubr.bf16.gmra.mrb[0].mxu0 %v3405
      %v3474 = vpop.f32.mrb[0].mxu0
      %v3475 = vadd.f32 0.0, %v3474
      %v3476 = vpop.f32.mrb[0].mxu0
      %v3477 = vpop.f32.mrb[0].mxu0
      %v3478 = vadd.f32 0.0, %v3477
      %v3479 = vpop.f32.mrb[0].mxu0
      %3480 = vmatprep.mubr.bf16.mxu0 0
      %3481 = vmatmul.mubr.bf16.gmra.mrb[0].mxu0 %v3408
      %v3482 = vpop.f32.mrb[0].mxu0
      %v3483 = vadd.f32 0.0, %v3482
      %v3484 = vpop.f32.mrb[0].mxu0
      %v3485 = vpop.f32.mrb[0].mxu0
      %v3486 = vadd.f32 0.0, %v3485
      %v3487 = vpop.f32.mrb[0].mxu0
      %3488 = vmatprep.mubr.bf16.mxu0 0
      %3489 = vmatmul.mubr.bf16.gmra.mrb[0].mxu0 %v3411
      %v3490 = vpop.f32.mrb[0].mxu0
      %v3491 = vadd.f32 0.0, %v3490
      %v3492 = vpop.f32.mrb[0].mxu0
      %v3493 = vpop.f32.mrb[0].mxu0
      %v3494 = vadd.f32 0.0, %v3493
      %v3495 = vpop.f32.mrb[0].mxu0
      %3496 = vmatprep.mubr.bf16.mxu0 0
      %3497 = vmatmul.mubr.bf16.gmra.mrb[0].mxu0 %v3414
      %v3498 = vpop.f32.mrb[0].mxu0
      %v3499 = vadd.f32 0.0, %v3498
      %v3500 = vpop.f32.mrb[0].mxu0
      %v3501 = vpop.f32.mrb[0].mxu0
      %v3502 = vadd.f32 0.0, %v3501
      %v3503 = vpop.f32.mrb[0].mxu0
      %3504 = vmatprep.mubr.bf16.mxu0 0
      %3505 = vmatmul.mubr.bf16.gmra.mrb[0].mxu0 %v3417
      %v3506 = vpop.f32.mrb[0].mxu0
      %v3507 = vadd.f32 0.0, %v3506
      %v3508 = vpop.f32.mrb[0].mxu0
      %v3509 = vpop.f32.mrb[0].mxu0
      %v3510 = vadd.f32 0.0, %v3509
      %v3511 = vpop.f32.mrb[0].mxu0
      %3512 = vmatprep.mubr.bf16.mxu0 0
      %3513 = vmatmul.mubr.bf16.gmra.mrb[0].mxu0 %v3420
      %v3514 = vpop.f32.mrb[0].mxu0
      %v3515 = vadd.f32 0.0, %v3514
      %v3516 = vpop.f32.mrb[0].mxu0
      %v3517 = vpop.f32.mrb[0].mxu0
      %v3518 = vadd.f32 0.0, %v3517
      %v3519 = vpop.f32.mrb[0].mxu0
      %3520 = vmatprep.mubr.bf16.mxu0 0
      %3521 = vmatmul.mubr.bf16.gmra.mrb[0].mxu0 %v3423
      %v3522 = vpop.f32.mrb[0].mxu0
      %v3523 = vadd.f32 0.0, %v3522
      %v3524 = vpop.f32.mrb[0].mxu0
      %v3525 = vpop.f32.mrb[0].mxu0
      %v3526 = vadd.f32 0.0, %v3525
      %v3527 = vpop.f32.mrb[0].mxu0
      %3528 = vmatprep.mubr.bf16.mxu0 0
      %3529 = vmatmul.mubr.bf16.gmra.mrb[0].mxu0 %v3426
      %v3530 = vpop.f32.mrb[0].mxu0
      %v3531 = vadd.f32 0.0, %v3530
      %v3532 = vpop.f32.mrb[0].mxu0
      %v3533 = vpop.f32.mrb[0].mxu0
      %v3534 = vadd.f32 0.0, %v3533
      %v3535 = vpop.f32.mrb[0].mxu0
      %3536 = vmatprep.mubr.bf16.mxu0 0
      %3537 = vmatmul.mubr.bf16.gmra.mrb[0].mxu0 %v3429
      %v3538 = vpop.f32.mrb[0].mxu0
      %v3539 = vadd.f32 0.0, %v3538
      %v3540 = vpop.f32.mrb[0].mxu0
      %v3541 = vpop.f32.mrb[0].mxu0
      %v3542 = vadd.f32 0.0, %v3541
      %v3543 = vpop.f32.mrb[0].mxu0
      %3544 = vmatprep.mubr.bf16.mxu0 0
      %3545 = vmatmul.mubr.bf16.gmra.mrb[0].mxu0 %v3432
      %v3546 = vpop.f32.mrb[0].mxu0
      %v3547 = vadd.f32 0.0, %v3546
      %v3548 = vpop.f32.mrb[0].mxu0
      %v3549 = vpop.f32.mrb[0].mxu0
      %v3550 = vadd.f32 0.0, %v3549
      %v3551 = vpop.f32.mrb[0].mxu0
      %3552 = vmatprep.mubr.bf16.mxu0 0
      %3553 = vmatmul.mubr.bf16.gmra.mrb[0].mxu0 %v3435
      %v3554 = vpop.f32.mrb[0].mxu0
      %v3555 = vadd.f32 0.0, %v3554
      %v3556 = vpop.f32.mrb[0].mxu0
      %v3557 = vpop.f32.mrb[0].mxu0
      %v3558 = vadd.f32 0.0, %v3557
      %v3559 = vpop.f32.mrb[0].mxu0
      %3560 = vmatprep.mubr.bf16.mxu0 0
      %3561 = vmatmul.mubr.bf16.gmra.mrb[0].mxu0 %v3438
      %v3562 = vpop.f32.mrb[0].mxu0
      %v3563 = vadd.f32 0.0, %v3562
      %v3564 = vpop.f32.mrb[0].mxu0
      %v3565 = vpop.f32.mrb[0].mxu0
      %v3566 = vadd.f32 0.0, %v3565
      %v3567 = vpop.f32.mrb[0].mxu0
      %3568 = vdwg.mxu0
      %v3569 = vadd.f32 %v3239, %v3475
      %v3570 = vadd.f32 %v3240, %v3478
      %v3571 = vadd.f32 %v3241, %v3483
      %v3572 = vadd.f32 %v3242, %v3486
      %v3573 = vadd.f32 %v3243, %v3491
      %v3574 = vadd.f32 %v3244, %v3494
      %v3575 = vadd.f32 %v3245, %v3499
      %v3576 = vadd.f32 %v3246, %v3502
      %v3577 = vadd.f32 %v3247, %v3507
      %v3578 = vadd.f32 %v3248, %v3510
      %v3579 = vadd.f32 %v3249, %v3515
      %v3580 = vadd.f32 %v3250, %v3518
      %v3581 = vadd.f32 %v3251, %v3523
      %v3582 = vadd.f32 %v3252, %v3526
      %v3583 = vadd.f32 %v3253, %v3531
      %v3584 = vadd.f32 %v3254, %v3534
      %v3585 = vadd.f32 %v3255, %v3539
      %v3586 = vadd.f32 %v3256, %v3542
      %v3587 = vadd.f32 %v3257, %v3547
      %v3588 = vadd.f32 %v3258, %v3550
      %v3589 = vadd.f32 %v3259, %v3555
      %v3590 = vadd.f32 %v3260, %v3558
      %v3591 = vadd.f32 %v3261, %v3563
      %v3592 = vadd.f32 %v3262, %v3566
      %v3593 = vld [vmem:[%s2] sm:$0x1]
      %v3595 = vlaneseq
      %v3596 = vshrl.u32 %v3595, 7
      %v3597 = vsub.s32 0, %v3596
      %v3598 = vrot.slane %v3593, %v3597
      %v3600 = vadd.f32 %v3569, %v3598
      %v3601 = vadd.f32 %v3570, %v3598
      %v3602 = vadd.f32 %v3571, %v3598
      %v3603 = vadd.f32 %v3572, %v3598
      %v3604 = vadd.f32 %v3573, %v3598
      %v3605 = vadd.f32 %v3574, %v3598
      %v3606 = vadd.f32 %v3575, %v3598
      %v3607 = vadd.f32 %v3576, %v3598
      %v3608 = vadd.f32 %v3577, %v3598
      %v3609 = vadd.f32 %v3578, %v3598
      %v3610 = vadd.f32 %v3579, %v3598
      %v3611 = vadd.f32 %v3580, %v3598
      %v3612 = vadd.f32 %v3581, %v3598
      %v3613 = vadd.f32 %v3582, %v3598
      %v3614 = vadd.f32 %v3583, %v3598
      %v3615 = vadd.f32 %v3584, %v3598
      %v3616 = vadd.f32 %v3585, %v3598
      %v3617 = vadd.f32 %v3586, %v3598
      %v3618 = vadd.f32 %v3587, %v3598
      %v3619 = vadd.f32 %v3588, %v3598
      %v3620 = vadd.f32 %v3589, %v3598
      %v3621 = vadd.f32 %v3590, %v3598
      %v3622 = vadd.f32 %v3591, %v3598
      %v3623 = vadd.f32 %v3592, %v3598
      %v3624 = vmax.f32 %v3600, 0.0
      %v3625 = vmax.f32 %v3601, 0.0
      %v3626 = vmax.f32 %v3602, 0.0
      %v3627 = vmax.f32 %v3603, 0.0
      %v3628 = vmax.f32 %v3604, 0.0
      %v3629 = vmax.f32 %v3605, 0.0
      %v3630 = vmax.f32 %v3606, 0.0
      %v3631 = vmax.f32 %v3607, 0.0
      %v3632 = vmax.f32 %v3608, 0.0
      %v3633 = vmax.f32 %v3609, 0.0
      %v3634 = vmax.f32 %v3610, 0.0
      %v3635 = vmax.f32 %v3611, 0.0
      %v3636 = vmax.f32 %v3612, 0.0
      %v3637 = vmax.f32 %v3613, 0.0
      %v3638 = vmax.f32 %v3614, 0.0
      %v3639 = vmax.f32 %v3615, 0.0
      %v3640 = vmax.f32 %v3616, 0.0
      %v3641 = vmax.f32 %v3617, 0.0
      %v3642 = vmax.f32 %v3618, 0.0
      %v3643 = vmax.f32 %v3619, 0.0
      %v3644 = vmax.f32 %v3620, 0.0
      %v3645 = vmax.f32 %v3621, 0.0
      %v3646 = vmax.f32 %v3622, 0.0
      %v3647 = vmax.f32 %v3623, 0.0
      %v3648 = vpack.c.bf16 %v3625, %v3624
      %v3649 = vpack.c.bf16 %v3626, %v3626
      %v3650 = vpack.c.bf16 %v3628, %v3627
      %v3651 = vpack.c.bf16 %v3629, %v3629
      %v3652 = vpack.c.bf16 %v3631, %v3630
      %v3653 = vpack.c.bf16 %v3632, %v3632
      %v3654 = vpack.c.bf16 %v3634, %v3633
      %v3655 = vpack.c.bf16 %v3635, %v3635
      %v3656 = vpack.c.bf16 %v3637, %v3636
      %v3657 = vpack.c.bf16 %v3638, %v3638
      %v3658 = vpack.c.bf16 %v3640, %v3639
      %v3659 = vpack.c.bf16 %v3641, %v3641
      %v3660 = vpack.c.bf16 %v3643, %v3642
      %v3661 = vpack.c.bf16 %v3644, %v3644
      %v3662 = vpack.c.bf16 %v3646, %v3645
      %v3663 = vpack.c.bf16 %v3647, %v3647
      %v3680 = vunpack.c.l.b16 %v3648
      %v3681 = vunpack.c.h.b16 %v3648
      %v3682 = vunpack.c.l.b16 %v3649
      %v3683 = vunpack.c.l.b16 %v3650
      %v3684 = vunpack.c.h.b16 %v3650
      %v3685 = vunpack.c.l.b16 %v3651
      %v3686 = vunpack.c.l.b16 %v3652
      %v3687 = vunpack.c.h.b16 %v3652
      %v3688 = vunpack.c.l.b16 %v3653
      %v3689 = vunpack.c.l.b16 %v3654
      %v3690 = vunpack.c.h.b16 %v3654
      %v3691 = vunpack.c.l.b16 %v3655
      %v3692 = vunpack.c.l.b16 %v3656
      %v3693 = vunpack.c.h.b16 %v3656
      %v3694 = vunpack.c.l.b16 %v3657
      %v3695 = vunpack.c.l.b16 %v3658
      %v3696 = vunpack.c.h.b16 %v3658
      %v3697 = vunpack.c.l.b16 %v3659
      %v3698 = vunpack.c.l.b16 %v3660
      %v3699 = vunpack.c.h.b16 %v3660
      %v3700 = vunpack.c.l.b16 %v3661
      %v3701 = vunpack.c.l.b16 %v3662
      %v3702 = vunpack.c.h.b16 %v3662
      %v3703 = vunpack.c.l.b16 %v3663
      %v3704 = vpack.c.b16 %v3680, %v3680
      %v3705 = vpack.c.b16 %v3681, %v3681
      %v3706 = vpack.c.b16 %v3682, %v3682
      %v3707 = vpack.c.b16 %v3683, %v3683
      %v3708 = vpack.c.b16 %v3684, %v3684
      %v3709 = vpack.c.b16 %v3685, %v3685
      %v3710 = vpack.c.b16 %v3686, %v3686
      %v3711 = vpack.c.b16 %v3687, %v3687
      %v3712 = vpack.c.b16 %v3688, %v3688
      %v3713 = vpack.c.b16 %v3689, %v3689
      %v3714 = vpack.c.b16 %v3690, %v3690
      %v3715 = vpack.c.b16 %v3691, %v3691
      %v3716 = vpack.c.b16 %v3692, %v3692
      %v3717 = vpack.c.b16 %v3693, %v3693
      %v3718 = vpack.c.b16 %v3694, %v3694
      %v3719 = vpack.c.b16 %v3695, %v3695
      %v3720 = vpack.c.b16 %v3696, %v3696
      %v3721 = vpack.c.b16 %v3697, %v3697
      %v3722 = vpack.c.b16 %v3698, %v3698
      %v3723 = vpack.c.b16 %v3699, %v3699
      %v3724 = vpack.c.b16 %v3700, %v3700
      %v3725 = vpack.c.b16 %v3701, %v3701
      %v3726 = vpack.c.b16 %v3702, %v3702
      %v3727 = vpack.c.b16 %v3703, %v3703
      %vm3752 = vcmask 519168
      %3753 = vst.msk [vmem:[%s194] sm:$0xf] %vm3752, %v3704
      %3754 = vst.msk [vmem:[%s194 + $0x4] sm:$0xf] %vm3752, %v3705
      %3755 = vst.msk [vmem:[%s194 + $0x8] sm:$0xf] %vm3752, %v3706
      %3756 = vst.msk [vmem:[%s194 + $0xc] sm:$0xf] %vm3752, %v3707
      %3757 = vst.msk [vmem:[%s194 + $0x10] sm:$0xf] %vm3752, %v3708
      %3758 = vst.msk [vmem:[%s194 + $0x14] sm:$0xf] %vm3752, %v3709
      %3759 = vst.msk [vmem:[%s194 + $0x18] sm:$0xf] %vm3752, %v3710
      %3760 = vst.msk [vmem:[%s194 + $0x1c] sm:$0xf] %vm3752, %v3711
      %3761 = vst.msk [vmem:[%s194 + $0x20] sm:$0xf] %vm3752, %v3712
      %3762 = vst.msk [vmem:[%s194 + $0x24] sm:$0xf] %vm3752, %v3713
      %3763 = vst.msk [vmem:[%s194 + $0x28] sm:$0xf] %vm3752, %v3714
      %3764 = vst.msk [vmem:[%s194 + $0x2c] sm:$0xf] %vm3752, %v3715
      %3765 = vst.msk [vmem:[%s194 + $0x30] sm:$0xf] %vm3752, %v3716
      %3766 = vst.msk [vmem:[%s194 + $0x34] sm:$0xf] %vm3752, %v3717
      %3767 = vst.msk [vmem:[%s194 + $0x38] sm:$0xf] %vm3752, %v3718
      %3768 = vst.msk [vmem:[%s194 + $0x3c] sm:$0xf] %vm3752, %v3719
      %3769 = vst.msk [vmem:[%s194 + $0x40] sm:$0xf] %vm3752, %v3720
      %3770 = vst.msk [vmem:[%s194 + $0x44] sm:$0xf] %vm3752, %v3721
      %3771 = vst.msk [vmem:[%s194 + $0x48] sm:$0xf] %vm3752, %v3722
      %3772 = vst.msk [vmem:[%s194 + $0x4c] sm:$0xf] %vm3752, %v3723
      %3773 = vst.msk [vmem:[%s194 + $0x50] sm:$0xf] %vm3752, %v3724
      %3774 = vst.msk [vmem:[%s194 + $0x54] sm:$0xf] %vm3752, %v3725
      %3775 = vst.msk [vmem:[%s194 + $0x58] sm:$0xf] %vm3752, %v3726
      %3776 = vst.msk [vmem:[%s194 + $0x5c] sm:$0xf] %vm3752, %v3727
      %s3777 = smul.u32 8, %s19
      %p3778 = scmp.lt.s32.totalorder %s18, 1
      %s3779 = scalar_select %p3778, %s18, 1
      %p3780 = scmp.lt.s32.totalorder %s3777, 23
      %s3781 = scalar_select %p3780, %s3777, 23
      %s3782 = smul.addr %s3781, 3
      %s3783 = smul.addr %s3779, 72
      %s3784 = sadd.s32 %s3782, %s3783
      %s3785 = smul.addr %s3784, 4
      %s3786 = scalar_lea.vmem %s3, %s3785
      // Predicated region
      $region33: #{digit_cnn_forward.5} parent=31 // pred_check
        %p3787 = pneg %p114
      $region34: #{digit_cnn_forward.5} parent=31 // pred_check_branch
        %3789 = sbr.rel (%p3787) target = $region36
      $region35: #{digit_cnn_forward.5} parent=31 // pred_region
        %s3790 = smul.u32 8, %s19
      $region36: #{digit_cnn_forward.5} parent=31 // pred_fallthru
        _
    $region32: #{digit_cnn_forward.5} parent=5 // pred_fallthru
      _
    %p3791 = scmp.le.s32.totalorder 2, %s9
    // Predicated region
    $region37: #{digit_cnn_forward.5} parent=5 // pred_check
      %p3792 = pneg %p3791
    $region38: #{digit_cnn_forward.5} parent=5 // pred_check_branch
      %3794 = sbr.rel (%p3792) target = $region40
    $region39: #{digit_cnn_forward.5} parent=5 // pred_region
      %s3795 = ssub.s32 %s9, 2
      // Predicated region
      $region41: #{digit_cnn_forward.5} parent=39 // pred_check
        %p3796 = pneg %p120
      $region42: #{digit_cnn_forward.5} parent=39 // pred_check_branch
        %3798 = sbr.rel (%p3796) target = $region44
      $region43: #{digit_cnn_forward.5} parent=39 // pred_region
        %s3799 = smul.u32 8, %s21
        %p3800 = scmp.lt.s32.totalorder %s20, 1
        %s3801 = scalar_select %p3800, %s20, 1
        %p3802 = scmp.lt.s32.totalorder %s3799, 23
        %s3803 = scalar_select %p3802, %s3799, 23
        %s3804 = smul.addr %s3803, 3
        %s3805 = smul.addr %s3801, 72
        %s3806 = sadd.s32 %s3804, %s3805
        %s3807 = smul.addr %s3806, 4
        %s3808 = scalar_lea.vmem %s3, %s3807
      $region44: #{digit_cnn_forward.5} parent=39 // pred_fallthru
        _
    $region40: #{digit_cnn_forward.5} parent=5 // pred_fallthru
      _
  $region6: #{digit_cnn_forward.5} parent=0 // loop_footer
    %s13 = sadd.s32 1, %s9
  $region7: #{digit_cnn_forward.5} parent=0 // loop_footer_branch
    %8 = sbr.rel target = $region3
  $region8: #{digit_cnn_forward.5} parent=0 // loop_exit
    _

// kernel: digit_cnn_forward.7
$region0: #{digit_cnn_forward.7}
  #allocation0 [shape = 'u32[]', space=smem, size = 0x4, offset = 0x4, fixed_abs, tag = 'smem constant byte address 0x4 - core index']
  #allocation1 [shape = 'u32[144,128]{1,0:T(1,128)}', space=vmem, size = 0x12000, scoped, tag = 'internal scratch']
  #allocation2 [shape = 'f32[2,100]{1,0:T(2,128)}', space=vmem, size = 0x400, scoped, tag = 'scratch operand']
  %s0 = inlined_call_operand.vmem [shape: bf16[2,9216], index: 0, kind: input, shape index: {}]
  %s1 = inlined_call_operand.vmem [shape: bf16[9216,100], index: 1, kind: input, shape index: {}]
  %s2 = inlined_call_operand.vmem [shape: f32[1,100], index: 2, kind: input, shape index: {}]
  %s3 = inlined_call_operand.vmem [shape: f32[100,10], index: 3, kind: input, shape index: {}]
  %s4 = inlined_call_operand.vmem [shape: f32[1,10], index: 4, kind: input, shape index: {}]
  %s5 = inlined_call_operand.hbm [shape: f32[2,10], index: 5, kind: output, shape index: {}]
  %s6 = sld [smem:[#allocation0]]
  $region61: #{digit_cnn_forward.7} parent=0
    _
  %s8 = ssub.s32 1, %s6
  %s9 = scalar_select 0, %s8, %s6
  $region1: #{digit_cnn_forward.7} parent=0
    #allocation3 [shape = 'u8[1024]{0}', space=vmem, size = 0x400, scoped, tag = 'output window, operand 0, single buffered']
    #allocation4 [shape = 's32[2]{0}', space=sflag, size = 0x8, scoped, tag = 'scoped memory for digit_cnn_forward.7']
    %10 = vsyncpa [#allocation4], 0
    loop: start=0, step=1, limit=14
    $region2: #{digit_cnn_forward.7} parent=1 // loop_pre_header
      _
    $region3: #{digit_cnn_forward.7} parent=1 // loop_header
      %s12 = sphi 0, %s16
      %p13 = scmp.ge.s32.totalorder %s12, 14
      %s22 = sphi 0, %s24
      %s25 = sphi 0, %s22
      %s26 = sphi 0, %s25
      %s42 = sphi 0, %s26
      %s48 = sphi 0, %s50
      %s51 = sphi 0, %s48
      %s52 = sphi 0, %s51
      %s68 = sphi 0, %s52
      %s72 = sphi 0, %s72
      %s74 = sphi 0, %s72
      %s75 = sphi 0, %s74
      %s89 = sphi 0, %s75
      %s93 = sphi 0, %s93
      %s95 = sphi 0, %s93
      %s96 = sphi 0, %s95
      %s110 = sphi 0, %s96
      %s114 = sphi 0, %s114
      %s116 = sphi 0, %s114
      %s117 = sphi 0, %s116
      %s131 = sphi 0, %s117
      %s135 = sphi 0, %s135
      %s137 = sphi 0, %s135
      %s138 = sphi 0, %s137
      %s152 = sphi 0, %s138
    $region4: #{digit_cnn_forward.7} parent=1 // loop_header_branch
      %15 = sbr.rel (%p13) target = $region8
    $region5: #{digit_cnn_forward.7} parent=1 // loop_body
      %s17 = ssub.s32 %s12, 1
      %s18 = ssub.s32 %s12, 2
      %s19 = sadd.s32 %s12, 1
      %s20 = ssub.s32 %s12, %s19
      %p21 = scmp.eq.s32.totalorder %s20, 0
      %s23 = sadd.s32 %s22, 1
      %s24 = scalar_select %p21, %s22, %s23
      %p27 = pneg %p21
      %p28 = scmp.eq.s32.totalorder %s12, 11
      %p29 = por %p27, %p28
      %p30 = scmp.ne.s32.totalorder %s22, %s25
      %p31 = scmp.eq.s32.totalorder %s12, 0
      %p32 = por %p30, %p31
      %p33 = scmp.ne.s32.totalorder %s22, %s25
      %p34 = scmp.eq.s32.totalorder %s17, 11
      %p35 = por %p33, %p34
      %p36 = scmp.ne.s32.totalorder %s25, %s26
      %p37 = scmp.eq.s32.totalorder %s17, 0
      %p38 = por %p36, %p37
      %p39 = scmp.ne.s32.totalorder %s25, %s26
      %p40 = scmp.eq.s32.totalorder %s18, 11
      %p41 = por %p39, %p40
      %p43 = scmp.ne.s32.totalorder %s26, %s42
      %p44 = scmp.eq.s32.totalorder %s18, 0
      %p45 = por %p43, %p44
      %s46 = ssub.s32 %s12, %s19
      %p47 = scmp.eq.s32.totalorder %s46, 0
      %s49 = sadd.s32 %s48, 1
      %s50 = scalar_select %p47, %s48, %s49
      %p53 = pneg %p47
      %p54 = scmp.eq.s32.totalorder %s12, 11
      %p55 = por %p53, %p54
      %p56 = scmp.ne.s32.totalorder %s48, %s51
      %p57 = scmp.eq.s32.totalorder %s12, 0
      %p58 = por %p56, %p57
      %p59 = scmp.ne.s32.totalorder %s48, %s51
      %p60 = scmp.eq.s32.totalorder %s17, 11
      %p61 = por %p59, %p60
      %p62 = scmp.ne.s32.totalorder %s51, %s52
      %p63 = scmp.eq.s32.totalorder %s17, 0
      %p64 = por %p62, %p63
      %p65 = scmp.ne.s32.totalorder %s51, %s52
      %p66 = scmp.eq.s32.totalorder %s18, 11
      %p67 = por %p65, %p66
      %p69 = scmp.ne.s32.totalorder %s52, %s68
      %p70 = scmp.eq.s32.totalorder %s18, 0
      %p71 = por %p69, %p70
      %s73 = sadd.s32 %s72, 1
      %p76 = scmp.eq.s32.totalorder %s12, 11
      %p77 = scmp.ne.s32.totalorder %s72, %s74
      %p78 = scmp.eq.s32.totalorder %s12, 0
      %p79 = por %p77, %p78
      %p80 = scmp.ne.s32.totalorder %s72, %s74
      %p81 = scmp.eq.s32.totalorder %s17, 11
      %p82 = por %p80, %p81
      %p83 = scmp.ne.s32.totalorder %s74, %s75
      %p84 = scmp.eq.s32.totalorder %s17, 0
      %p85 = por %p83, %p84
      %p86 = scmp.ne.s32.totalorder %s74, %s75
      %p87 = scmp.eq.s32.totalorder %s18, 11
      %p88 = por %p86, %p87
      %p90 = scmp.ne.s32.totalorder %s75, %s89
      %p91 = scmp.eq.s32.totalorder %s18, 0
      %p92 = por %p90, %p91
      %s94 = sadd.s32 %s93, 1
      %p97 = scmp.eq.s32.totalorder %s12, 11
      %p98 = scmp.ne.s32.totalorder %s93, %s95
      %p99 = scmp.eq.s32.totalorder %s12, 0
      %p100 = por %p98, %p99
      %p101 = scmp.ne.s32.totalorder %s93, %s95
      %p102 = scmp.eq.s32.totalorder %s17, 11
      %p103 = por %p101, %p102
      %p104 = scmp.ne.s32.totalorder %s95, %s96
      %p105 = scmp.eq.s32.totalorder %s17, 0
      %p106 = por %p104, %p105
      %p107 = scmp.ne.s32.totalorder %s95, %s96
      %p108 = scmp.eq.s32.totalorder %s18, 11
      %p109 = por %p107, %p108
      %p111 = scmp.ne.s32.totalorder %s96, %s110
      %p112 = scmp.eq.s32.totalorder %s18, 0
      %p113 = por %p111, %p112
      %s115 = sadd.s32 %s114, 1
      %p118 = scmp.eq.s32.totalorder %s12, 11
      %p119 = scmp.ne.s32.totalorder %s114, %s116
      %p120 = scmp.eq.s32.totalorder %s12, 0
      %p121 = por %p119, %p120
      %p122 = scmp.ne.s32.totalorder %s114, %s116
      %p123 = scmp.eq.s32.totalorder %s17, 11
      %p124 = por %p122, %p123
      %p125 = scmp.ne.s32.totalorder %s116, %s117
      %p126 = scmp.eq.s32.totalorder %s17, 0
      %p127 = por %p125, %p126
      %p128 = scmp.ne.s32.totalorder %s116, %s117
      %p129 = scmp.eq.s32.totalorder %s18, 11
      %p130 = por %p128, %p129
      %p132 = scmp.ne.s32.totalorder %s117, %s131
      %p133 = scmp.eq.s32.totalorder %s18, 0
      %p134 = por %p132, %p133
      %s136 = sadd.s32 %s135, 1
      %p139 = scmp.eq.s32.totalorder %s12, 11
      %p140 = scmp.ne.s32.totalorder %s135, %s137
      %p141 = scmp.eq.s32.totalorder %s12, 0
      %p142 = por %p140, %p141
      %p143 = scmp.ne.s32.totalorder %s135, %s137
      %p144 = scmp.eq.s32.totalorder %s17, 11
      %p145 = por %p143, %p144
      %p146 = scmp.ne.s32.totalorder %s137, %s138
      %p147 = scmp.eq.s32.totalorder %s17, 0
      %p148 = por %p146, %p147
      %p149 = scmp.ne.s32.totalorder %s137, %s138
      %p150 = scmp.eq.s32.totalorder %s18, 11
      %p151 = por %p149, %p150
      %p153 = scmp.ne.s32.totalorder %s138, %s152
      %p154 = scmp.eq.s32.totalorder %s18, 0
      %p155 = por %p153, %p154
      %p156 = scmp.le.s32.totalorder 1, %s12
      %p157 = scmp.lt.s32.totalorder %s12, 13
      %p158 = pnand %p156, %p157
      %p159 = pneg %p158
      // Predicated region
      $region9: #{digit_cnn_forward.7} parent=5 // pred_check
        _
      $region10: #{digit_cnn_forward.7} parent=5 // pred_check_branch
        %161 = sbr.rel (%p158) target = $region12
      $region11: #{digit_cnn_forward.7} parent=5 // pred_region
        %s162 = ssub.s32 %s12, 1
        // Predicated region
        $region13: #{digit_cnn_forward.7} parent=11 // pred_check
          %p163 = pneg %p85
        $region14: #{digit_cnn_forward.7} parent=11 // pred_check_branch
          %165 = sbr.rel (%p163) target = $region16
        $region15: #{digit_cnn_forward.7} parent=11 // pred_region
          _
        $region16: #{digit_cnn_forward.7} parent=11 // pred_fallthru
          _
        // Predicated region
        $region17: #{digit_cnn_forward.7} parent=11 // pred_check
          %p166 = pneg %p106
        $region18: #{digit_cnn_forward.7} parent=11 // pred_check_branch
          %168 = sbr.rel (%p166) target = $region20
        $region19: #{digit_cnn_forward.7} parent=11 // pred_region
          _
        $region20: #{digit_cnn_forward.7} parent=11 // pred_fallthru
          _
        // Predicated region
        $region21: #{digit_cnn_forward.7} parent=11 // pred_check
          %p169 = pneg %p127
        $region22: #{digit_cnn_forward.7} parent=11 // pred_check_branch
          %171 = sbr.rel (%p169) target = $region24
        $region23: #{digit_cnn_forward.7} parent=11 // pred_region
          _
        $region24: #{digit_cnn_forward.7} parent=11 // pred_fallthru
          _
      $region12: #{digit_cnn_forward.7} parent=5 // pred_fallthru
        _
      %p172 = scmp.lt.s32.totalorder %s12, 12
      // Predicated region
      $region25: #{digit_cnn_forward.7} parent=5 // pred_check
        %p173 = pneg %p172
      $region26: #{digit_cnn_forward.7} parent=5 // pred_check_branch
        %175 = sbr.rel (%p173) target = $region28
      $region27: #{digit_cnn_forward.7} parent=5 // pred_region
        // Predicated region
        $region29: #{digit_cnn_forward.7} parent=27 // pred_check
          %p176 = pneg %p32
        $region30: #{digit_cnn_forward.7} parent=27 // pred_check_branch
          %178 = sbr.rel (%p176) target = $region32
        $region31: #{digit_cnn_forward.7} parent=27 // pred_region
          %s179 = smul.u32 6, %s12
          %p180 = scmp.lt.s32.totalorder %s179, 71
          %s181 = scalar_select %p180, %s179, 71
          %s182 = scalar_lea.vmem %s0, %s181
          %s183 = smul.u32 6, %s12
        $region32: #{digit_cnn_forward.7} parent=27 // pred_fallthru
          _
        // Predicated region
        $region33: #{digit_cnn_forward.7} parent=27 // pred_check
          %p184 = pneg %p58
        $region34: #{digit_cnn_forward.7} parent=27 // pred_check_branch
          %186 = sbr.rel (%p184) target = $region36
        $region35: #{digit_cnn_forward.7} parent=27 // pred_region
          %s187 = smul.u32 96, %s12
          %p188 = scmp.lt.s32.totalorder %s187, 1151
          %s189 = scalar_select %p188, %s187, 1151
          %s190 = smul.addr %s189, 4
          %s191 = scalar_lea.vmem %s1, %s190
          %s192 = smul.u32 96, %s12
        $region36: #{digit_cnn_forward.7} parent=27 // pred_fallthru
          _
      $region28: #{digit_cnn_forward.7} parent=5 // pred_fallthru
        _
      %p193 = scmp.le.s32.totalorder 1, %s12
      %p194 = scmp.lt.s32.totalorder %s12, 13
      %p195 = pnand %p193, %p194
      %p196 = pneg %p195
      // Predicated region
      $region37: #{digit_cnn_forward.7} parent=5 // pred_check
        _
      $region38: #{digit_cnn_forward.7} parent=5 // pred_check_branch
        %198 = sbr.rel (%p195) target = $region40
      $region39: #{digit_cnn_forward.7} parent=5 // pred_region
        %s199 = ssub.s32 %s12, 1
        %s200 = smul.u32 6, %s17
        %p201 = scmp.lt.s32.totalorder %s200, 71
        %s202 = scalar_select %p201, %s200, 71
        %s203 = scalar_lea.vmem %s0, %s202
        %p204 = pneg %p38
        %p205 = pneg %p35
        %s206 = smul.u32 96, %s17
        %p207 = scmp.lt.s32.totalorder %s206, 1151
        %s208 = scalar_select %p207, %s206, 1151
        %s209 = smul.addr %s208, 4
        %s210 = scalar_lea.vmem %s1, %s209
        %p211 = pneg %p64
        %p212 = pneg %p61
        %p213 = pneg %p85
        %p214 = pneg %p82
        %p215 = pneg %p106
        %p216 = pneg %p103
        %p217 = pneg %p127
        %p218 = pneg %p124
        %p219 = pneg %p148
        %p220 = pneg %p145
        %s221 = smul.u32 6, %s17
        %p222 = scmp.lt.s32.totalorder %s221, 71
        %s223 = scalar_select %p222, %s221, 71
        %s224 = scalar_lea.vmem %s0, %s223
        %s225 = smul.u32 6, %s17
        %s226 = smul.u32 96, %s17
        %p227 = scmp.lt.s32.totalorder %s226, 1151
        %s228 = scalar_select %p227, %s226, 1151
        %s229 = smul.addr %s228, 4
        %s230 = scalar_lea.vmem %s1, %s229
        %s231 = smul.u32 96, %s17
        %p233 = scmp.eq.s32.totalorder %s17, 0
        // Predicated region
        $region41: #{digit_cnn_forward.7} parent=39 // pred_check
          %p234 = pneg %p233
        $region42: #{digit_cnn_forward.7} parent=39 // pred_check_branch
          %236 = sbr.rel (%p234) target = $region44
        $region43: #{digit_cnn_forward.7} parent=39 // pred_region
          %vm237 = vcmask 812032
          %238 = vst.msk [vmem:[#allocation2] sm:$0x3] %vm237, 0.0
        $region44: #{digit_cnn_forward.7} parent=39 // pred_fallthru
          _
        %v239 = vld [vmem:[#allocation2] sm:$0x3]
        %v240 = vld [vmem:[%s224] sm:$0x3f]
        %v241 = vld [vmem:[%s230] sm:$0xf]
        %v242 = vld [vmem:[%s230 + $0x4] sm:$0xf]
        %v243 = vld [vmem:[%s230 + $0x8] sm:$0xf]
        %v244 = vld [vmem:[%s230 + $0xc] sm:$0xf]
        %v245 = vld [vmem:[%s230 + $0x10] sm:$0xf]
        %v246 = vld [vmem:[%s230 + $0x14] sm:$0xf]
        %v247 = vld [vmem:[%s230 + $0x18] sm:$0xf]
        %v248 = vld [vmem:[%s230 + $0x1c] sm:$0xf]
        %v249 = vld [vmem:[%s230 + $0x20] sm:$0xf]
        %v250 = vld [vmem:[%s230 + $0x24] sm:$0xf]
        %v251 = vld [vmem:[%s230 + $0x28] sm:$0xf]
        %v252 = vld [vmem:[%s230 + $0x2c] sm:$0xf]
        %v253 = vld [vmem:[%s230 + $0x30] sm:$0xf]
        %v254 = vld [vmem:[%s230 + $0x34] sm:$0xf]
        %v255 = vld [vmem:[%s230 + $0x38] sm:$0xf]
        %v256 = vld [vmem:[%s230 + $0x3c] sm:$0xf]
        %v257 = vld [vmem:[%s230 + $0x40] sm:$0xf]
        %v258 = vld [vmem:[%s230 + $0x44] sm:$0xf]
        %v259 = vld [vmem:[%s230 + $0x48] sm:$0xf]
        %v260 = vld [vmem:[%s230 + $0x4c] sm:$0xf]
        %v261 = vld [vmem:[%s230 + $0x50] sm:$0xf]
        %v262 = vld [vmem:[%s230 + $0x54] sm:$0xf]
        %v263 = vld [vmem:[%s230 + $0x58] sm:$0xf]
        %v264 = vld [vmem:[%s230 + $0x5c] sm:$0xf]
        %v265 = vld [vmem:[%s230 + $0x60] sm:$0xf]
        %v266 = vld [vmem:[%s230 + $0x64] sm:$0xf]
        %v267 = vld [vmem:[%s230 + $0x68] sm:$0xf]
        %v268 = vld [vmem:[%s230 + $0x6c] sm:$0xf]
        %v269 = vld [vmem:[%s230 + $0x70] sm:$0xf]
        %v270 = vld [vmem:[%s230 + $0x74] sm:$0xf]
        %v271 = vld [vmem:[%s230 + $0x78] sm:$0xf]
        %v272 = vld [vmem:[%s230 + $0x7c] sm:$0xf]
        %v273 = vld [vmem:[%s230 + $0x80] sm:$0xf]
        %v274 = vld [vmem:[%s230 + $0x84] sm:$0xf]
        %v275 = vld [vmem:[%s230 + $0x88] sm:$0xf]
        %v276 = vld [vmem:[%s230 + $0x8c] sm:$0xf]
        %v277 = vld [vmem:[%s230 + $0x90] sm:$0xf]
        %v278 = vld [vmem:[%s230 + $0x94] sm:$0xf]
        %v279 = vld [vmem:[%s230 + $0x98] sm:$0xf]
        %v280 = vld [vmem:[%s230 + $0x9c] sm:$0xf]
        %v281 = vld [vmem:[%s230 + $0xa0] sm:$0xf]
        %v282 = vld [vmem:[%s230 + $0xa4] sm:$0xf]
        %v283 = vld [vmem:[%s230 + $0xa8] sm:$0xf]
        %v284 = vld [vmem:[%s230 + $0xac] sm:$0xf]
        %v285 = vld [vmem:[%s230 + $0xb0] sm:$0xf]
        %v286 = vld [vmem:[%s230 + $0xb4] sm:$0xf]
        %v287 = vld [vmem:[%s230 + $0xb8] sm:$0xf]
        %v288 = vld [vmem:[%s230 + $0xbc] sm:$0xf]
        %v289 = vld [vmem:[%s230 + $0xc0] sm:$0xf]
        %v290 = vld [vmem:[%s230 + $0xc4] sm:$0xf]
        %v291 = vld [vmem:[%s230 + $0xc8] sm:$0xf]
        %v292 = vld [vmem:[%s230 + $0xcc] sm:$0xf]
        %v293 = vld [vmem:[%s230 + $0xd0] sm:$0xf]
        %v294 = vld [vmem:[%s230 + $0xd4] sm:$0xf]
        %v295 = vld [vmem:[%s230 + $0xd8] sm:$0xf]
        %v296 = vld [vmem:[%s230 + $0xdc] sm:$0xf]
        %v297 = vld [vmem:[%s230 + $0xe0] sm:$0xf]
        %v298 = vld [vmem:[%s230 + $0xe4] sm:$0xf]
        %v299 = vld [vmem:[%s230 + $0xe8] sm:$0xf]
        %v300 = vld [vmem:[%s230 + $0xec] sm:$0xf]
        %v301 = vld [vmem:[%s230 + $0xf0] sm:$0xf]
        %v302 = vld [vmem:[%s230 + $0xf4] sm:$0xf]
        %v303 = vld [vmem:[%s230 + $0xf8] sm:$0xf]
        %v304 = vld [vmem:[%s230 + $0xfc] sm:$0xf]
        %v305 = vld [vmem:[%s230 + $0x100] sm:$0xf]
        %v306 = vld [vmem:[%s230 + $0x104] sm:$0xf]
        %v307 = vld [vmem:[%s230 + $0x108] sm:$0xf]
        %v308 = vld [vmem:[%s230 + $0x10c] sm:$0xf]
        %v309 = vld [vmem:[%s230 + $0x110] sm:$0xf]
        %v310 = vld [vmem:[%s230 + $0x114] sm:$0xf]
        %v311 = vld [vmem:[%s230 + $0x118] sm:$0xf]
        %v312 = vld [vmem:[%s230 + $0x11c] sm:$0xf]
        %v313 = vld [vmem:[%s230 + $0x120] sm:$0xf]
        %v314 = vld [vmem:[%s230 + $0x124] sm:$0xf]
        %v315 = vld [vmem:[%s230 + $0x128] sm:$0xf]
        %v316 = vld [vmem:[%s230 + $0x12c] sm:$0xf]
        %v317 = vld [vmem:[%s230 + $0x130] sm:$0xf]
        %v318 = vld [vmem:[%s230 + $0x134] sm:$0xf]
        %v319 = vld [vmem:[%s230 + $0x138] sm:$0xf]
        %v320 = vld [vmem:[%s230 + $0x13c] sm:$0xf]
        %v321 = vld [vmem:[%s230 + $0x140] sm:$0xf]
        %v322 = vld [vmem:[%s230 + $0x144] sm:$0xf]
        %v323 = vld [vmem:[%s230 + $0x148] sm:$0xf]
        %v324 = vld [vmem:[%s230 + $0x14c] sm:$0xf]
        %v325 = vld [vmem:[%s230 + $0x150] sm:$0xf]
        %v326 = vld [vmem:[%s230 + $0x154] sm:$0xf]
        %v327 = vld [vmem:[%s230 + $0x158] sm:$0xf]
        %v328 = vld [vmem:[%s230 + $0x15c] sm:$0xf]
        %v329 = vld [vmem:[%s230 + $0x160] sm:$0xf]
        %v330 = vld [vmem:[%s230 + $0x164] sm:$0xf]
        %v331 = vld [vmem:[%s230 + $0x168] sm:$0xf]
        %v332 = vld [vmem:[%s230 + $0x16c] sm:$0xf]
        %v333 = vld [vmem:[%s230 + $0x170] sm:$0xf]
        %v334 = vld [vmem:[%s230 + $0x174] sm:$0xf]
        %v335 = vld [vmem:[%s230 + $0x178] sm:$0xf]
        %v336 = vld [vmem:[%s230 + $0x17c] sm:$0xf]
        %v338 = vcombine.high %v240, %v240
        %v340 = vunpack.c.l.s4 1966171168
        %v341 = vunpack.c.0.s8 %v340
        %v342 = vlaneseq
        %v343 = vshrl.u32 %v342, 7
        %v344 = vsub.s32 %v341, %v343
        %v345 = vrot.slane %v240, %v344
        %v347 = vunpack.c.l.s4 1966171168
        %v348 = vunpack.c.0.s8 %v347
        %v349 = vlaneseq
        %v350 = vshrl.u32 %v349, 7
        %v351 = vsub.s32 %v348, %v350
        %v352 = vrot.slane %v338, %v351
        %v353 = vcombine.high %v345, %v345
        %v354 = vcombine.high %v352, %v352
        %v356 = vunpack.c.l.s4 1966171168
        %v357 = vunpack.c.0.s8 %v356
        %v358 = vlaneseq
        %v359 = vshrl.u32 %v358, 7
        %v360 = vsub.s32 %v357, %v359
        %v361 = vrot.slane %v345, %v360
        %v363 = vunpack.c.l.s4 1966171168
        %v364 = vunpack.c.0.s8 %v363
        %v365 = vlaneseq
        %v366 = vshrl.u32 %v365, 7
        %v367 = vsub.s32 %v364, %v366
        %v368 = vrot.slane %v352, %v367
        %v370 = vunpack.c.l.s4 1966171168
        %v371 = vunpack.c.0.s8 %v370
        %v372 = vlaneseq
        %v373 = vshrl.u32 %v372, 7
        %v374 = vsub.s32 %v371, %v373
        %v375 = vrot.slane %v353, %v374
        %v377 = vunpack.c.l.s4 1966171168
        %v378 = vunpack.c.0.s8 %v377
        %v379 = vlaneseq
        %v380 = vshrl.u32 %v379, 7
        %v381 = vsub.s32 %v378, %v380
        %v382 = vrot.slane %v354, %v381
        %v383 = vcombine.high %v361, %v361
        %v384 = vcombine.high %v375, %v375
        %v487 = vunpack.c.l.b16 %v241
        %v488 = vunpack.c.l.b16 %v242
        %v489 = vunpack.c.l.b16 %v243
        %v490 = vunpack.c.l.b16 %v244
        %v491 = vunpack.c.l.b16 %v245
        %v492 = vunpack.c.l.b16 %v246
        %v493 = vunpack.c.l.b16 %v247
        %v494 = vunpack.c.l.b16 %v248
        %v495 = vunpack.c.l.b16 %v249
        %v496 = vunpack.c.l.b16 %v250
        %v497 = vunpack.c.l.b16 %v251
        %v498 = vunpack.c.l.b16 %v252
        %v499 = vunpack.c.l.b16 %v253
        %v500 = vunpack.c.l.b16 %v254
        %v501 = vunpack.c.l.b16 %v255
        %v502 = vunpack.c.l.b16 %v256
        %v503 = vunpack.c.l.b16 %v257
        %v504 = vunpack.c.l.b16 %v258
        %v505 = vunpack.c.l.b16 %v259
        %v506 = vunpack.c.l.b16 %v260
        %v507 = vunpack.c.l.b16 %v261
        %v508 = vunpack.c.l.b16 %v262
        %v509 = vunpack.c.l.b16 %v263
        %v510 = vunpack.c.l.b16 %v264
        %v511 = vunpack.c.l.b16 %v265
        %v512 = vunpack.c.l.b16 %v266
        %v513 = vunpack.c.l.b16 %v267
        %v514 = vunpack.c.l.b16 %v268
        %v515 = vunpack.c.l.b16 %v269
        %v516 = vunpack.c.l.b16 %v270
        %v517 = vunpack.c.l.b16 %v271
        %v518 = vunpack.c.l.b16 %v272
        %v519 = vunpack.c.l.b16 %v273
        %v520 = vunpack.c.l.b16 %v274
        %v521 = vunpack.c.l.b16 %v275
        %v522 = vunpack.c.l.b16 %v276
        %v523 = vunpack.c.l.b16 %v277
        %v524 = vunpack.c.l.b16 %v278
        %v525 = vunpack.c.l.b16 %v279
        %v526 = vunpack.c.l.b16 %v280
        %v527 = vunpack.c.l.b16 %v281
        %v528 = vunpack.c.l.b16 %v282
        %v529 = vunpack.c.l.b16 %v283
        %v530 = vunpack.c.l.b16 %v284
        %v531 = vunpack.c.l.b16 %v285
        %v532 = vunpack.c.l.b16 %v286
        %v533 = vunpack.c.l.b16 %v287
        %v534 = vunpack.c.l.b16 %v288
        %v535 = vunpack.c.l.b16 %v289
        %v536 = vunpack.c.l.b16 %v290
        %v537 = vunpack.c.l.b16 %v291
        %v538 = vunpack.c.l.b16 %v292
        %v539 = vunpack.c.l.b16 %v293
        %v540 = vunpack.c.l.b16 %v294
        %v541 = vunpack.c.l.b16 %v295
        %v542 = vunpack.c.l.b16 %v296
        %v543 = vunpack.c.l.b16 %v297
        %v544 = vunpack.c.l.b16 %v298
        %v545 = vunpack.c.l.b16 %v299
        %v546 = vunpack.c.l.b16 %v300
        %v547 = vunpack.c.l.b16 %v301
        %v548 = vunpack.c.l.b16 %v302
        %v549 = vunpack.c.l.b16 %v303
        %v550 = vunpack.c.l.b16 %v304
        %v551 = vunpack.c.l.b16 %v305
        %v552 = vunpack.c.l.b16 %v306
        %v553 = vunpack.c.l.b16 %v307
        %v554 = vunpack.c.l.b16 %v308
        %v555 = vunpack.c.l.b16 %v309
        %v556 = vunpack.c.l.b16 %v310
        %v557 = vunpack.c.l.b16 %v311
        %v558 = vunpack.c.l.b16 %v312
        %v559 = vunpack.c.l.b16 %v313
        %v560 = vunpack.c.l.b16 %v314
        %v561 = vunpack.c.l.b16 %v315
        %v562 = vunpack.c.l.b16 %v316
        %v563 = vunpack.c.l.b16 %v317
        %v564 = vunpack.c.l.b16 %v318
        %v565 = vunpack.c.l.b16 %v319
        %v566 = vunpack.c.l.b16 %v320
        %v567 = vunpack.c.l.b16 %v321
        %v568 = vunpack.c.l.b16 %v322
        %v569 = vunpack.c.l.b16 %v323
        %v570 = vunpack.c.l.b16 %v324
        %v571 = vunpack.c.l.b16 %v325
        %v572 = vunpack.c.l.b16 %v326
        %v573 = vunpack.c.l.b16 %v327
        %v574 = vunpack.c.l.b16 %v328
        %v575 = vunpack.c.l.b16 %v329
        %v576 = vunpack.c.l.b16 %v330
        %v577 = vunpack.c.l.b16 %v331
        %v578 = vunpack.c.l.b16 %v332
        %v579 = vunpack.c.l.b16 %v333
        %v580 = vunpack.c.l.b16 %v334
        %v581 = vunpack.c.l.b16 %v335
        %v582 = vunpack.c.l.b16 %v336
        %v583 = vpack.c.b16 %v488, %v487
        %v584 = vpack.c.b16 %v490, %v489
        %v585 = vpack.c.b16 %v492, %v491
        %v586 = vpack.c.b16 %v494, %v493
        %v587 = vpack.c.b16 %v496, %v495
        %v588 = vpack.c.b16 %v498, %v497
        %v589 = vpack.c.b16 %v500, %v499
        %v590 = vpack.c.b16 %v502, %v501
        %v591 = vpack.c.b16 %v504, %v503
        %v592 = vpack.c.b16 %v506, %v505
        %v593 = vpack.c.b16 %v508, %v507
        %v594 = vpack.c.b16 %v510, %v509
        %v595 = vpack.c.b16 %v512, %v511
        %v596 = vpack.c.b16 %v514, %v513
        %v597 = vpack.c.b16 %v516, %v515
        %v598 = vpack.c.b16 %v518, %v517
        %v599 = vpack.c.b16 %v520, %v519
        %v600 = vpack.c.b16 %v522, %v521
        %v601 = vpack.c.b16 %v524, %v523
        %v602 = vpack.c.b16 %v526, %v525
        %v603 = vpack.c.b16 %v528, %v527
        %v604 = vpack.c.b16 %v530, %v529
        %v605 = vpack.c.b16 %v532, %v531
        %v606 = vpack.c.b16 %v534, %v533
        %v607 = vpack.c.b16 %v536, %v535
        %v608 = vpack.c.b16 %v538, %v537
        %v609 = vpack.c.b16 %v540, %v539
        %v610 = vpack.c.b16 %v542, %v541
        %v611 = vpack.c.b16 %v544, %v543
        %v612 = vpack.c.b16 %v546, %v545
        %v613 = vpack.c.b16 %v548, %v547
        %v614 = vpack.c.b16 %v550, %v549
        %v615 = vpack.c.b16 %v552, %v551
        %v616 = vpack.c.b16 %v554, %v553
        %v617 = vpack.c.b16 %v556, %v555
        %v618 = vpack.c.b16 %v558, %v557
        %v619 = vpack.c.b16 %v560, %v559
        %v620 = vpack.c.b16 %v562, %v561
        %v621 = vpack.c.b16 %v564, %v563
        %v622 = vpack.c.b16 %v566, %v565
        %v623 = vpack.c.b16 %v568, %v567
        %v624 = vpack.c.b16 %v570, %v569
        %v625 = vpack.c.b16 %v572, %v571
        %v626 = vpack.c.b16 %v574, %v573
        %v627 = vpack.c.b16 %v576, %v575
        %v628 = vpack.c.b16 %v578, %v577
        %v629 = vpack.c.b16 %v580, %v579
        %v630 = vpack.c.b16 %v582, %v581
        %679 = vmatprep.subr.bf16.mxu0 0
        %680 = vmatpush1.bf16.msra.mxu0 %v583
        %681 = vmatprep.subr.bf16.mxu0 0
        %682 = vmatpush1.bf16.msra.mxu0 %v584
        %683 = vmatprep.subr.bf16.mxu0 0
        %684 = vmatpush1.bf16.msra.mxu0 %v585
        %685 = vmatprep.subr.bf16.mxu0 0
        %686 = vmatpush1.bf16.msra.mxu0 %v586
        %687 = vmatprep.subr.bf16.mxu0 0
        %688 = vmatpush1.bf16.msra.mxu0 %v587
        %689 = vmatprep.subr.bf16.mxu0 0
        %690 = vmatpush1.bf16.msra.mxu0 %v588
        %691 = vmatprep.subr.bf16.mxu0 0
        %692 = vmatpush1.bf16.msra.mxu0 %v589
        %693 = vmatprep.subr.bf16.mxu0 0
        %694 = vmatpush1.bf16.msra.mxu0 %v590
        %695 = vmatprep.subr.bf16.mxu0 0
        %696 = vmatpush1.bf16.msra.mxu0 %v591
        %697 = vmatprep.subr.bf16.mxu0 0
        %698 = vmatpush1.bf16.msra.mxu0 %v592
        %699 = vmatprep.subr.bf16.mxu0 0
        %700 = vmatpush1.bf16.msra.mxu0 %v593
        %701 = vmatprep.subr.bf16.mxu0 0
        %702 = vmatpush1.bf16.msra.mxu0 %v594
        %703 = vmatprep.subr.bf16.mxu0 0
        %704 = vmatpush1.bf16.msra.mxu0 %v595
        %705 = vmatprep.subr.bf16.mxu0 0
        %706 = vmatpush1.bf16.msra.mxu0 %v596
        %707 = vmatprep.subr.bf16.mxu0 0
        %708 = vmatpush1.bf16.msra.mxu0 %v597
        %709 = vmatprep.subr.bf16.mxu0 0
        %710 = vmatpush1.bf16.msra.mxu0 %v598
        %711 = vmatprep.mubr.bf16.mxu0 %v375
        %712 = vmatmul.mubr.bf16.gmra.mrb[0].mxu0 %v361
        %v713 = vpop.f32.mrb[0].mxu0
        %v714 = vadd.f32 0.0, %v713
        %v715 = vpop.f32.mrb[0].mxu0
        %v716 = vpop.f32.mrb[0].mxu0
        %v717 = vpop.f32.mrb[0].mxu0
        %718 = vdwg.mxu0
        %719 = vmatprep.subr.bf16.mxu0 0
        %720 = vmatpush1.bf16.msra.mxu0 %v599
        %721 = vmatprep.subr.bf16.mxu0 0
        %722 = vmatpush1.bf16.msra.mxu0 %v600
        %723 = vmatprep.subr.bf16.mxu0 0
        %724 = vmatpush1.bf16.msra.mxu0 %v601
        %725 = vmatprep.subr.bf16.mxu0 0
        %726 = vmatpush1.bf16.msra.mxu0 %v602
        %727 = vmatprep.subr.bf16.mxu0 0
        %728 = vmatpush1.bf16.msra.mxu0 %v603
        %729 = vmatprep.subr.bf16.mxu0 0
        %730 = vmatpush1.bf16.msra.mxu0 %v604
        %731 = vmatprep.subr.bf16.mxu0 0
        %732 = vmatpush1.bf16.msra.mxu0 %v605
        %733 = vmatprep.subr.bf16.mxu0 0
        %734 = vmatpush1.bf16.msra.mxu0 %v606
        %735 = vmatprep.subr.bf16.mxu0 0
        %736 = vmatpush1.bf16.msra.mxu0 %v607
        %737 = vmatprep.subr.bf16.mxu0 0
        %738 = vmatpush1.bf16.msra.mxu0 %v608
        %739 = vmatprep.subr.bf16.mxu0 0
        %740 = vmatpush1.bf16.msra.mxu0 %v609
        %741 = vmatprep.subr.bf16.mxu0 0
        %742 = vmatpush1.bf16.msra.mxu0 %v610
        %743 = vmatprep.subr.bf16.mxu0 0
        %744 = vmatpush1.bf16.msra.mxu0 %v611
        %745 = vmatprep.subr.bf16.mxu0 0
        %746 = vmatpush1.bf16.msra.mxu0 %v612
        %747 = vmatprep.subr.bf16.mxu0 0
        %748 = vmatpush1.bf16.msra.mxu0 %v613
        %749 = vmatprep.subr.bf16.mxu0 0
        %750 = vmatpush1.bf16.msra.mxu0 %v614
        %751 = vmatprep.mubr.bf16.mxu0 %v384
        %752 = vmatmul.mubr.bf16.gmra.mrb[0].mxu0 %v383
        %v753 = vpop.f32.mrb[0].mxu0
        %v754 = vadd.f32 %v714, %v753
        %v755 = vpop.f32.mrb[0].mxu0
        %v756 = vpop.f32.mrb[0].mxu0
        %v757 = vpop.f32.mrb[0].mxu0
        %758 = vdwg.mxu0
        %759 = vmatprep.subr.bf16.mxu0 0
        %760 = vmatpush1.bf16.msra.mxu0 %v615
        %761 = vmatprep.subr.bf16.mxu0 0
        %762 = vmatpush1.bf16.msra.mxu0 %v616
        %763 = vmatprep.subr.bf16.mxu0 0
        %764 = vmatpush1.bf16.msra.mxu0 %v617
        %765 = vmatprep.subr.bf16.mxu0 0
        %766 = vmatpush1.bf16.msra.mxu0 %v618
        %767 = vmatprep.subr.bf16.mxu0 0
        %768 = vmatpush1.bf16.msra.mxu0 %v619
        %769 = vmatprep.subr.bf16.mxu0 0
        %770 = vmatpush1.bf16.msra.mxu0 %v620
        %771 = vmatprep.subr.bf16.mxu0 0
        %772 = vmatpush1.bf16.msra.mxu0 %v621
        %773 = vmatprep.subr.bf16.mxu0 0
        %774 = vmatpush1.bf16.msra.mxu0 %v622
        %775 = vmatprep.subr.bf16.mxu0 0
        %776 = vmatpush1.bf16.msra.mxu0 %v623
        %777 = vmatprep.subr.bf16.mxu0 0
        %778 = vmatpush1.bf16.msra.mxu0 %v624
        %779 = vmatprep.subr.bf16.mxu0 0
        %780 = vmatpush1.bf16.msra.mxu0 %v625
        %781 = vmatprep.subr.bf16.mxu0 0
        %782 = vmatpush1.bf16.msra.mxu0 %v626
        %783 = vmatprep.subr.bf16.mxu0 0
        %784 = vmatpush1.bf16.msra.mxu0 %v627
        %785 = vmatprep.subr.bf16.mxu0 0
        %786 = vmatpush1.bf16.msra.mxu0 %v628
        %787 = vmatprep.subr.bf16.mxu0 0
        %788 = vmatpush1.bf16.msra.mxu0 %v629
        %789 = vmatprep.subr.bf16.mxu0 0
        %790 = vmatpush1.bf16.msra.mxu0 %v630
        %791 = vmatprep.mubr.bf16.mxu0 %v382
        %792 = vmatmul.mubr.bf16.gmra.mrb[0].mxu0 %v368
        %v793 = vpop.f32.mrb[0].mxu0
        %v794 = vadd.f32 %v754, %v793
        %v795 = vpop.f32.mrb[0].mxu0
        %v796 = vpop.f32.mrb[0].mxu0
        %v797 = vpop.f32.mrb[0].mxu0
        %798 = vdwg.mxu0
        %v799 = vadd.f32 %v239, %v794
        %vm800 = vcmask 812032
        %801 = vst.msk [vmem:[#allocation2] sm:$0x3] %vm800, %v799
        %p802 = scmp.eq.s32.totalorder %s17, 11
        // Predicated region
        $region45: #{digit_cnn_forward.7} parent=39 // pred_check
          %p803 = pneg %p802
        $region46: #{digit_cnn_forward.7} parent=39 // pred_check_branch
          %805 = sbr.rel (%p803) target = $region48
        $region47: #{digit_cnn_forward.7} parent=39 // pred_region
          %v806 = vld [vmem:[#allocation2] sm:$0x3]
          %v807 = vld [vmem:[%s2] sm:$0x1]
          %v809 = vlaneseq
          %v810 = vshrl.u32 %v809, 7
          %v811 = vsub.s32 0, %v810
          %v812 = vrot.slane %v807, %v811
          %v814 = vadd.f32 %v806, %v812
          %v815 = vmax.f32 %v814, 0.0
          %v816 = vld [vmem:[%s3] sm:$0xff]
          %v817 = vld [vmem:[%s3 + $0x8] sm:$0xff]
          %v818 = vld [vmem:[%s3 + $0x10] sm:$0xff]
          %v819 = vld [vmem:[%s3 + $0x18] sm:$0xff]
          %v820 = vld [vmem:[%s3 + $0x20] sm:$0xff]
          %v821 = vld [vmem:[%s3 + $0x28] sm:$0xff]
          %v822 = vld [vmem:[%s3 + $0x30] sm:$0xff]
          %v823 = vld [vmem:[%s3 + $0x38] sm:$0xff]
          %v824 = vld [vmem:[%s3 + $0x40] sm:$0xff]
          %v825 = vld [vmem:[%s3 + $0x48] sm:$0xff]
          %v826 = vld [vmem:[%s3 + $0x50] sm:$0xff]
          %v827 = vld [vmem:[%s3 + $0x58] sm:$0xff]
          %v828 = vld [vmem:[%s3 + $0x60] sm:$0xf]
          %v829 = vld [vmem:[%s4] sm:$0x1]
          %v831 = vlaneseq
          %v832 = vshrl.u32 %v831, 7
          %v833 = vsub.s32 0, %v832
          %v834 = vrot.slane %v829, %v833
          %vm836 = vcmask 818176
          %v838 = vsel %vm836, %v815, 0
          %vm840 = vcmask 1043456
          %v842 = vsel %vm840, %v828, 0
          %844 = vmatprep.subr.mxu0 0.0
          %845 = vmatpush1.msra.mxu0 %v816
          %846 = vmatprep.subr.mxu0 0.0
          %847 = vmatpush1.msra.mxu0 %v817
          %848 = vmatprep.subr.mxu0 0.0
          %849 = vmatpush1.msra.mxu0 %v818
          %850 = vmatprep.subr.mxu0 0.0
          %851 = vmatpush1.msra.mxu0 %v819
          %852 = vmatprep.subr.mxu0 0.0
          %853 = vmatpush1.msra.mxu0 %v820
          %854 = vmatprep.subr.mxu0 0.0
          %855 = vmatpush1.msra.mxu0 %v821
          %856 = vmatprep.subr.mxu0 0.0
          %857 = vmatpush1.msra.mxu0 %v822
          %858 = vmatprep.subr.mxu0 0.0
          %859 = vmatpush1.msra.mxu0 %v823
          %860 = vmatprep.subr.mxu0 0.0
          %861 = vmatpush1.msra.mxu0 %v824
          %862 = vmatprep.subr.mxu0 0.0
          %863 = vmatpush1.msra.mxu0 %v825
          %864 = vmatprep.subr.mxu0 0.0
          %865 = vmatpush1.msra.mxu0 %v826
          %866 = vmatprep.subr.mxu0 0.0
          %867 = vmatpush1.msra.mxu0 %v827
          %868 = vmatprep.subr.mxu0 0.0
          %869 = vmatpush1.msra.mxu0 %v842
          %870 = vmatprep.subr.mxu0 0.0
          %871 = vmatpush1.msra.mxu0 0.0
          %872 = vmatprep.subr.mxu0 0.0
          %873 = vmatpush1.msra.mxu0 0.0
          %874 = vmatprep.subr.mxu0 0.0
          %875 = vmatpush1.msra.mxu0 0.0
          %876 = vmatprep.subr.mxu0 0.0
          %877 = vmatpush1.msra.mxu0 0.0
          %878 = vmatprep.subr.mxu0 0.0
          %879 = vmatpush1.msra.mxu0 0.0
          %880 = vmatprep.subr.mxu0 0.0
          %881 = vmatpush1.msra.mxu0 0.0
          %882 = vmatprep.subr.mxu0 0.0
          %883 = vmatpush1.msra.mxu0 0.0
          %884 = vmatprep.subr.mxu0 0.0
          %885 = vmatpush1.msra.mxu0 0.0
          %886 = vmatprep.subr.mxu0 0.0
          %887 = vmatpush1.msra.mxu0 0.0
          %888 = vmatprep.subr.mxu0 0.0
          %889 = vmatpush1.msra.mxu0 0.0
          %890 = vmatprep.subr.mxu0 0.0
          %891 = vmatpush1.msra.mxu0 0.0
          %892 = vmatprep.subr.mxu0 0.0
          %893 = vmatpush1.msra.mxu0 0.0
          %894 = vmatprep.subr.mxu0 0.0
          %895 = vmatpush1.msra.mxu0 0.0
          %896 = vmatprep.subr.mxu0 0.0
          %897 = vmatpush1.msra.mxu0 0.0
          %898 = vmatprep.subr.mxu0 0.0
          %899 = vmatpush1.msra.mxu0 0.0
          %900 = vmatprep.subr.mxu0 0.0
          %901 = vmatpush1.msra.mxu0 0.0
          %902 = vmatprep.subr.mxu0 0.0
          %903 = vmatpush1.msra.mxu0 0.0
          %904 = vmatprep.subr.mxu0 0.0
          %905 = vmatpush1.msra.mxu0 0.0
          %906 = vmatprep.subr.mxu0 0.0
          %907 = vmatpush1.msra.mxu0 0.0
          %908 = vmatprep.mubr.f32.mxu0 0.0
          %909 = vmatmul.mubr.f32.gmra.mrb[0].mxu0 %v838
          %v910 = vpop.f32.mrb[0].mxu0
          %v911 = vadd.f32 %v834, %v910
          %v912 = vpop.f32.mrb[0].mxu0
          %913 = vdwg.mxu0
          %vm914 = vcmask 74752
          %v915 = vsel %vm914, %v911, -inf
          %916 = vmax.xlane.f32.xlu0 %v915
          %v917 = vpop.xlane.xlu0 %916
          %v918 = vsub.f32 %v911, %v917
          %v919 = vmul.f32 %v918, 1.442695
          %v920 = vpow.pop %v919
          %v921 = vsel %vm914, %v920, 0.0
          %922 = vadd.xlane.f32.xlu0 %v921
          %v923 = vpop.xlane.xlu0 %922
          %v924 = vlog2.pop %v923
          %v925 = vmul.f32 %v924, 0.6931472
          %v926 = vsub.f32 %v918, %v925
          %927 = vst.msk [vmem:[#allocation3] sm:$0x3] %vm914, %v926
        $region48: #{digit_cnn_forward.7} parent=39 // pred_fallthru
          _
        // Predicated region
        $region49: #{digit_cnn_forward.7} parent=39 // pred_check
          %p928 = pneg %p145
        $region50: #{digit_cnn_forward.7} parent=39 // pred_check_branch
          %930 = sbr.rel (%p928) target = $region52
        $region51: #{digit_cnn_forward.7} parent=39 // pred_region
          %s932 = ssub.s32 32, 32
          %933 = vsyncadd [#allocation4], %s932
          %s935 = sshll.u32 [#allocation3], 4
          %s936 = int_to_ptr.vmem [resolvable:$true] %s935
          %938 = dma.vmem_to_hbm [thread:$0]  %s936, 32, %s5, [#allocation4]
        $region52: #{digit_cnn_forward.7} parent=39 // pred_fallthru
          _
        // Predicated region
        $region53: #{digit_cnn_forward.7} parent=39 // pred_check
          %p939 = pneg %p145
        $region54: #{digit_cnn_forward.7} parent=39 // pred_check_branch
          %941 = sbr.rel (%p939) target = $region56
        $region55: #{digit_cnn_forward.7} parent=39 // pred_region
          %942 = dma.done [#allocation4], 32
        $region56: #{digit_cnn_forward.7} parent=39 // pred_fallthru
          _
      $region40: #{digit_cnn_forward.7} parent=5 // pred_fallthru
        _
      %p943 = scmp.le.s32.totalorder 2, %s12
      // Predicated region
      $region57: #{digit_cnn_forward.7} parent=5 // pred_check
        %p944 = pneg %p943
      $region58: #{digit_cnn_forward.7} parent=5 // pred_check_branch
        %946 = sbr.rel (%p944) target = $region60
      $region59: #{digit_cnn_forward.7} parent=5 // pred_region
        %s947 = ssub.s32 %s12, 2
      $region60: #{digit_cnn_forward.7} parent=5 // pred_fallthru
        _
    $region6: #{digit_cnn_forward.7} parent=1 // loop_footer
      %s16 = sadd.s32 1, %s12
    $region7: #{digit_cnn_forward.7} parent=1 // loop_footer_branch
      %11 = sbr.rel target = $region3
    $region8: #{digit_cnn_forward.7} parent=1 // loop_exit
      _
    %948 = vsyncpa [#allocation4], 1
    %s949 = scalar_lea.sflag [#allocation4], 1
    %950 = vsyncpa %s949, 1

</llo_original>
